<compile_context>
chip_gen: v5e
topology: v5e:2x2
jax: 0.10.0
libtpu: 0.0.40
codegen_flags: <defaults>
</compile_context>

<pallas_src>
import functools

import jax
import jax.numpy as jnp
from jax.experimental import pallas as pl
from jax.experimental.pallas import tpu as pltpu


# ----------------------------- helpers ---------------------------------------

def _round_up(x, m):
    return (x + m - 1) // m * m


def _vmem_limit_bytes():
    """Generation-aware VMEM budget: ~3/4 of physical, capped at 100 MiB."""
    cap = 64 * 1024 * 1024
    try:
        cap = int(getattr(pltpu.get_tpu_info(), "vmem_capacity_bytes", cap))
    except Exception:
        pass
    return max(32 * 1024 * 1024, min((cap * 3) // 4, 100 * 1024 * 1024))


_VMEM_LIMIT = _vmem_limit_bytes()


def _cparams(semantics):
    return pltpu.CompilerParams(dimension_semantics=semantics,
                                vmem_limit_bytes=_VMEM_LIMIT)


def _im2col(x_nhwc, *, k, stride, pad):
    """Host-side im2col (used for conv1 only, where Cin=2 keeps K=32 tiny)."""
    N, H, W, Cin = x_nhwc.shape
    Ho = (H + 2 * pad - k) // stride + 1
    Wo = (W + 2 * pad - k) // stride + 1
    xp = jnp.pad(x_nhwc, ((0, 0), (pad, pad), (pad, pad), (0, 0)))
    cols = []
    for di in range(k):
        for dj in range(k):
            cols.append(
                xp[:, di:di + stride * Ho:stride, dj:dj + stride * Wo:stride, :])
    patches = jnp.concatenate(cols, axis=-1).reshape(N * Ho * Wo, k * k * Cin)
    return patches, (N, Ho, Wo)


def _wmat(w_oihw):
    """PyTorch OIHW conv weight -> (k*k*Cin, Cout) matmul weight."""
    Cout, Cin, k, _ = w_oihw.shape
    return jnp.transpose(w_oihw, (2, 3, 1, 0)).reshape(k * k * Cin, Cout)


def _wtaps(w_oihw):
    """PyTorch OIHW conv weight -> (k, k, Cin, Cout) per-tap matmul weights."""
    return jnp.transpose(w_oihw, (2, 3, 1, 0))


def _phase_split_pad(x_nhwc):
    """Pad by 1 (conv pad), round H/W up to even, split into 2x2 phase planes,
    flatten each plane row-major and append one zero guard row.

    Returns ((N, 2, 2, L, C) bf16, Ph, Pw) with plane dims (Ph, Pw) and
    L = (Ph + 1) * Pw.  planes[n, ph, pw, i*Pw + j] == padded_x[n, 2i+ph, 2j+pw].
    """
    N, H, W, C = x_nhwc.shape
    Hp = _round_up(H + 2, 2)
    Wp = _round_up(W + 2, 2)
    xp = jnp.pad(x_nhwc.astype(jnp.bfloat16),
                 ((0, 0), (1, Hp - H - 1), (1, Wp - W - 1), (0, 0)))
    Ph, Pw = Hp // 2, Wp // 2
    planes = xp.reshape(N, Ph, 2, Pw, 2, C).transpose(0, 2, 4, 1, 3, 5)
    flat = planes.reshape(N, 2, 2, Ph * Pw, C)
    guard = jnp.zeros((N, 2, 2, Pw, C), jnp.bfloat16)
    return jnp.concatenate([flat, guard], axis=3), Ph, Pw


def _pad_flatten_guard(x_nhwc, *, pad):
    """Pad spatially, flatten (H, W) row-major, append one zero guard row."""
    N, H, W, C = x_nhwc.shape
    Hp, Wp = H + 2 * pad, W + 2 * pad
    xp = jnp.pad(x_nhwc.astype(jnp.bfloat16),
                 ((0, 0), (pad, pad), (pad, pad), (0, 0)))
    flat = xp.reshape(N, Hp * Wp, C)
    guard = jnp.zeros((N, Wp, C), jnp.bfloat16)
    return jnp.concatenate([flat, guard], axis=1), Hp, Wp


# ----------------------------- Pallas kernels --------------------------------

def _mm_bias_lrelu_kernel(p_ref, w_ref, b_ref, o_ref, *, slope):
    """Conv1: (bf16 patches @ bf16 weight) -> f32 acc + bias + LeakyReLU."""
    acc = jnp.dot(p_ref[...], w_ref[...], preferred_element_type=jnp.float32)
    acc = acc + b_ref[...]
    o_ref[...] = jnp.where(acc > 0, acc, slope * acc).astype(o_ref.dtype)


def _conv_s2_bn_stats_kernel(x_ref, w_ref, b_ref, mask_ref, o_ref, s1_ref, s2_ref,
                             *, ho, pw, k):
    """Stride-2 conv as an in-kernel tap loop over 2x2 phase planes (+ bias).
    Emits the pre-BN activation (bf16) plus masked per-image sum / sumsq (f32)
    for the two-pass BatchNorm."""
    m_img = ho * pw
    cout = w_ref.shape[-1]
    acc = jnp.zeros((m_img, cout), jnp.float32)
    for kh in range(k):
        for kw in range(k):
            ph, bh = kh % 2, kh // 2
            pq, bw = kw % 2, kw // 2
            off = bh * pw + bw                        # static row offset in plane
            xt = x_ref[ph, pq, off:off + m_img, :]    # contiguous (m_img, Cin)
            acc = acc + jnp.dot(xt, w_ref[kh, kw],
                                preferred_element_type=jnp.float32)
    acc = acc + b_ref[...]
    o_ref[...] = acc.astype(o_ref.dtype)
    # BatchNorm statistics: drop the garbage plane columns (ow >= Wo) with a
    # select instead of float-mask multiplies.
    v = jnp.where(mask_ref[...] > 0.5, acc, 0.0)
    s1_ref[...] = jnp.sum(v, axis=0, keepdims=True)
    s2_ref[...] = jnp.sum(v * v, axis=0, keepdims=True)


def _bn_lrelu_kernel(x_ref, sc_ref, sh_ref, o_ref, *, slope):
    """Elementwise y = LeakyReLU(x * scale + shift) (pass 2 of two-pass BN)."""
    x = x_ref[...].astype(jnp.float32)
    y = x * sc_ref[...] + sh_ref[...]
    o_ref[...] = jnp.where(y > 0, y, slope * y).astype(o_ref.dtype)


def _conv_s1_sigmoid_kernel(x_ref, w_ref, b_ref, o_ref, *, ho, wp, k):
    """Stride-1 conv as an in-kernel tap loop + bias + sigmoid (EUP exp+recip)."""
    m_img = ho * wp
    cout = w_ref.shape[-1]
    acc = jnp.zeros((m_img, cout), jnp.float32)
    for kh in range(k):
        for kw in range(k):
            off = kh * wp + kw
            xt = x_ref[off:off + m_img, :]
            acc = acc + jnp.dot(xt, w_ref[kh, kw],
                                preferred_element_type=jnp.float32)
    acc = acc + b_ref[...]
    y = pl.reciprocal(1.0 + jnp.exp(-acc), approx=True)
    o_ref[...] = jnp.clip(y, 0.0, 1.0).astype(o_ref.dtype)


# ----------------------------- layer wrappers ---------------------------------

def conv1_lrelu_pallas(x_bf16, w_oihw, bias, *, slope=0.2):
    """Conv2d(2,64,k4,s2,p1) + LeakyReLU: host im2col (K=32) + M-tiled matmul."""
    patches, (N, Ho, Wo) = _im2col(x_bf16, k=4, stride=2, pad=1)
    M, K = patches.shape
    Cout = w_oihw.shape[0]
    w_mat = _wmat(w_oihw).astype(jnp.bfloat16)
    b = bias.reshape(1, Cout).astype(jnp.float32)

    tile_m = min(2048, _round_up(M, 16))   # bigger tiles; K is tiny anyway
    Mp = _round_up(M, tile_m)
    if Mp != M:
        patches = jnp.pad(patches, ((0, Mp - M), (0, 0)))

    out = pl.pallas_call(
        functools.partial(_mm_bias_lrelu_kernel, slope=slope),
        out_shape=jax.ShapeDtypeStruct((Mp, Cout), jnp.bfloat16),
        grid=(Mp // tile_m,),
        in_specs=[
            pl.BlockSpec((tile_m, K), lambda i: (i, 0)),   # patches: tiled over M
            pl.BlockSpec((K, Cout), lambda i: (0, 0)),     # weight: resident
            pl.BlockSpec((1, Cout), lambda i: (0, 0)),     # bias: resident
        ],
        out_specs=pl.BlockSpec((tile_m, Cout), lambda i: (i, 0)),
        compiler_params=_cparams(("parallel",)),
    )(patches, w_mat, b)
    return out[:M].reshape(N, Ho, Wo, Cout)


def conv2_bn_stats_pallas(h1, w_oihw, bias):
    """Conv2d(64,128,k4,s2,p1) via in-kernel tap loop; also returns per-image
    sum / sumsq of the pre-BN activation for the two-pass BatchNorm."""
    N, H1, W1, Cin = h1.shape
    Cout = w_oihw.shape[0]
    k = w_oihw.shape[2]
    Ho = (H1 + 2 - k) // 2 + 1
    Wo = (W1 + 2 - k) // 2 + 1
    x2, _, Pw = _phase_split_pad(h1)               # (N, 2, 2, L, Cin) bf16
    L = x2.shape[3]
    m_img = Ho * Pw                                # rows computed per image
    w_taps = _wtaps(w_oihw).astype(jnp.bfloat16)   # (k, k, Cin, Cout)
    b = bias.reshape(1, Cout).astype(jnp.float32)
    mask = (jnp.arange(m_img) % Pw < Wo).astype(jnp.float32).reshape(m_img, 1)

    pre, s1, s2 = pl.pallas_call(
        functools.partial(_conv_s2_bn_stats_kernel, ho=Ho, pw=Pw, k=k),
        out_shape=(jax.ShapeDtypeStruct((N, m_img, Cout), jnp.bfloat16),
                   jax.ShapeDtypeStruct((N, 1, Cout), jnp.float32),
                   jax.ShapeDtypeStruct((N, 1, Cout), jnp.float32)),
        grid=(N,),
        in_specs=[
            pl.BlockSpec((None, 2, 2, L, Cin), lambda n: (n, 0, 0, 0, 0)),
            pl.BlockSpec((k, k, Cin, Cout), lambda n: (0, 0, 0, 0)),
            pl.BlockSpec((1, Cout), lambda n: (0, 0)),
            pl.BlockSpec((m_img, 1), lambda n: (0, 0)),
        ],
        out_specs=(
            pl.BlockSpec((None, m_img, Cout), lambda n: (n, 0, 0)),
            pl.BlockSpec((None, 1, Cout), lambda n: (n, 0, 0)),
            pl.BlockSpec((None, 1, Cout), lambda n: (n, 0, 0)),
        ),
        compiler_params=_cparams(("parallel",)),
    )(x2, w_taps, b, mask)
    return pre, s1, s2, (Ho, Wo, Pw)


def bn_lrelu_pallas(x_flat, scale, shift, *, slope=0.2):
    """Elementwise BN-apply + LeakyReLU, M-tiled, bf16 in/out."""
    M, C = x_flat.shape
    tile_m = min(2048, _round_up(M, 16))
    Mp = _round_up(M, tile_m)
    if Mp != M:
        x_flat = jnp.pad(x_flat, ((0, Mp - M), (0, 0)))
    out = pl.pallas_call(
        functools.partial(_bn_lrelu_kernel, slope=slope),
        out_shape=jax.ShapeDtypeStruct((Mp, C), jnp.bfloat16),
        grid=(Mp // tile_m,),
        in_specs=[
            pl.BlockSpec((tile_m, C), lambda i: (i, 0)),
            pl.BlockSpec((1, C), lambda i: (0, 0)),
            pl.BlockSpec((1, C), lambda i: (0, 0)),
        ],
        out_specs=pl.BlockSpec((tile_m, C), lambda i: (i, 0)),
        compiler_params=_cparams(("parallel",)),
    )(x_flat, scale.reshape(1, C).astype(jnp.float32),
      shift.reshape(1, C).astype(jnp.float32))
    return out[:M]


def conv3_sigmoid_pallas(a2, w_oihw, bias, *, cout_pad=128):
    """Conv2d(128,1,k4,s1,p1) + Sigmoid via in-kernel tap loop; lane-dense
    bf16 output (Cout padded 1 -> 128, sliced in the wrapper)."""
    N, H2, W2, Cin = a2.shape
    Cout = w_oihw.shape[0]
    k = w_oihw.shape[2]
    Ho, Wo = H2 + 2 - k + 1, W2 + 2 - k + 1
    x3, _, Wp = _pad_flatten_guard(a2, pad=1)      # (N, L, Cin) bf16
    L = x3.shape[1]
    m_img = Ho * Wp
    w_taps = jnp.pad(_wtaps(w_oihw),
                     ((0, 0), (0, 0), (0, 0), (0, cout_pad - Cout)))
    w_taps = w_taps.astype(jnp.bfloat16)
    b = jnp.pad(bias, (0, cout_pad - Cout)).reshape(1, cout_pad).astype(jnp.float32)

    out = pl.pallas_call(
        functools.partial(_conv_s1_sigmoid_kernel, ho=Ho, wp=Wp, k=k),
        out_shape=jax.ShapeDtypeStruct((N, m_img, cout_pad), jnp.bfloat16),
        grid=(N,),
        in_specs=[
            pl.BlockSpec((None, L, Cin), lambda n: (n, 0, 0)),
            pl.BlockSpec((k, k, Cin, cout_pad), lambda n: (0, 0, 0, 0)),
            pl.BlockSpec((1, cout_pad), lambda n: (0, 0)),
        ],
        out_specs=pl.BlockSpec((None, m_img, cout_pad), lambda n: (n, 0, 0)),
        compiler_params=_cparams(("parallel",)),
    )(x3, w_taps, b)
    # (N, Ho*Wp, 128) -> (N, Ho, Wo, 1): drop garbage columns and the lane pad.
    return out.reshape(N, Ho, Wp, cout_pad)[:, :, :Wo, :Cout]


# ----------------------------- model ------------------------------------------

def init_params(key):
    """Deterministic init mimicking PyTorch Conv2d default (uniform +-1/sqrt(fan_in))."""
    k1, k2, k3 = jax.random.split(key, 3)

    def conv_init(k, cout, cin, ksz):
        kw, kb = jax.random.split(k)
        bound = 1.0 / float((cin * ksz * ksz) ** 0.5)
        w = jax.random.uniform(kw, (cout, cin, ksz, ksz), jnp.float32, -bound, bound)
        b = jax.random.uniform(kb, (cout,), jnp.float32, -bound, bound)
        return w, b

    w1, b1 = conv_init(k1, 64, 2, 4)
    w2, b2 = conv_init(k2, 128, 64, 4)
    w3, b3 = conv_init(k3, 1, 128, 4)
    gamma = jnp.ones((128,), jnp.float32)   # BatchNorm2d default weight
    beta = jnp.zeros((128,), jnp.float32)   # BatchNorm2d default bias
    return dict(w1=w1, b1=b1, w2=w2, b2=b2, gamma=gamma, beta=beta, w3=w3, b3=b3)


@jax.jit
def discriminator_forward(params, x_nchw):
    # NCHW -> NHWC; bf16 activations between layers (epilogue math stays f32)
    x = jnp.transpose(x_nchw, (0, 2, 3, 1)).astype(jnp.bfloat16)
    N = x.shape[0]

    # Layer 1: Conv2d(2,64,k4,s2,p1) + LeakyReLU
    h1 = conv1_lrelu_pallas(x, params["w1"], params["b1"])

    # Layer 2: Conv2d(64,128,k4,s2,p1) + fused per-image batch statistics
    pre, s1, s2, (Ho2, Wo2, Pw2) = conv2_bn_stats_pallas(
        h1, params["w2"], params["b2"])
    C2 = pre.shape[-1]
    cnt = float(N * Ho2 * Wo2)
    mean = jnp.sum(s1, axis=0).reshape(-1) / cnt
    var = jnp.maximum(jnp.sum(s2, axis=0).reshape(-1) / cnt - mean * mean, 0.0)
    inv_std = jax.lax.rsqrt(var + 1e-5)      # biased var = PyTorch training norm
    scale = params["gamma"] * inv_std
    shift = params["beta"] - mean * scale
    # BatchNorm-apply + LeakyReLU (pass 2), then drop the extra plane column
    a2 = bn_lrelu_pallas(pre.reshape(N * Ho2 * Pw2, C2), scale, shift)
    a2 = a2.reshape(N, Ho2, Pw2, C2)[:, :, :Wo2, :]

    # Layer 3: Conv2d(128,1,k4,s1,p1) + Sigmoid (lane-dense bf16 output)
    h3 = conv3_sigmoid_pallas(a2, params["w3"], params["b3"])

    # NHWC -> NCHW and back to f32 to match the PyTorch module's output
    return jnp.transpose(h3, (0, 3, 1, 2)).astype(jnp.float32)


if __name__ == "__main__":
    key = jax.random.PRNGKey(0)
    pkey, xkey = jax.random.split(key)
    params = init_params(pkey)

    # Conv2d(2, ...) implies 2 input channels; small spatial 16x16, batch 2.
    x = jax.random.normal(xkey, (2, 2, 16, 16), dtype=jnp.float32)

    out = discriminator_forward(params, x)
    out = jax.block_until_ready(out)

    assert out.shape == (2, 1, 3, 3), out.shape
    assert bool(jnp.all(jnp.isfinite(out)))
    assert bool(jnp.all((out >= 0.0) & (out <= 1.0)))  # sigmoid output range
    print("KERNEL_OK")
</pallas_src>

<mosaic_0001>
module attributes {stable_mosaic.version = 11 : i64} {
  func.func @_mm_bias_lrelu_kernel(%arg0: i32, %arg1: memref<128x32xbf16, #tpu.memory_space<vmem>>, %arg2: memref<32x64xbf16, #tpu.memory_space<vmem>>, %arg3: memref<1x64xf32, #tpu.memory_space<vmem>>, %arg4: memref<128x64xbf16, #tpu.memory_space<vmem>>) attributes {dimension_semantics = [#tpu.dimension_semantics<parallel>], iteration_bounds = array<i64: 1>, scalar_prefetch = 0 : i64, scratch_operands = 0 : i64, tpu.core_type = #tpu.core_type<tc>, window_params = [{transform_indices = @transform_0, window_bounds = array<i64: 128, 32>}, {pipeline_mode = #tpu.pipeline_mode<synchronous>, transform_indices = @transform_1, window_bounds = array<i64: 32, 64>}, {pipeline_mode = #tpu.pipeline_mode<synchronous>, transform_indices = @transform_2, window_bounds = array<i64: 1, 64>}, {transform_indices = @transform_3, window_bounds = array<i64: 128, 64>}]} {
    %c0 = arith.constant 0 : index
    %c0_0 = arith.constant 0 : index
    %0 = vector.load %arg1[%c0, %c0_0] : memref<128x32xbf16, #tpu.memory_space<vmem>>, vector<128x32xbf16>
    %c0_1 = arith.constant 0 : index
    %c0_2 = arith.constant 0 : index
    %1 = vector.load %arg2[%c0_1, %c0_2] : memref<32x64xbf16, #tpu.memory_space<vmem>>, vector<32x64xbf16>
    %cst = arith.constant dense<0.000000e+00> : vector<128x64xf32>
    %2 = tpu.matmul %0, %1, %cst {dimension_numbers = #tpu.dot_dimension_numbers<[1], [0], [0], [1], [0, 0, 1, 1], [], []>} : vector<128x32xbf16>, vector<32x64xbf16>, vector<128x64xf32> -> vector<128x64xf32>
    %c0_3 = arith.constant 0 : index
    %c0_4 = arith.constant 0 : index
    %3 = vector.load %arg3[%c0_3, %c0_4] : memref<1x64xf32, #tpu.memory_space<vmem>>, vector<1x64xf32>
    %4 = vector.broadcast %3 : vector<1x64xf32> to vector<128x64xf32>
    %5 = arith.addf %2, %4 : vector<128x64xf32>
    %cst_5 = arith.constant 0.000000e+00 : f32
    %6 = vector.broadcast %cst_5 : f32 to vector<128x64xf32>
    %7 = arith.cmpf ogt, %5, %6 : vector<128x64xf32>
    %cst_6 = arith.constant 2.000000e-01 : f32
    %8 = vector.broadcast %cst_6 : f32 to vector<128x64xf32>
    %9 = arith.mulf %8, %5 : vector<128x64xf32>
    %10 = arith.select %7, %5, %9 : vector<128x64xi1>, vector<128x64xf32>
    %11 = arith.truncf %10 : vector<128x64xf32> to vector<128x64xbf16>
    %c0_7 = arith.constant 0 : index
    %c0_8 = arith.constant 0 : index
    %12 = vector.load %arg4[%c0_7, %c0_8] : memref<128x64xbf16, #tpu.memory_space<vmem>>, vector<128x64xbf16>
    tpu.vector_store %arg4[%c0_7, %c0_8], %11 {strides = array<i32>} : memref<128x64xbf16, #tpu.memory_space<vmem>>, vector<128x64xbf16>,
    return
  }
  func.func @transform_0(%arg0: i32) -> (i32, i32) {
    %c0_i32 = arith.constant 0 : i32
    %c0_i32_0 = arith.constant 0 : i32
    return %arg0, %c0_i32 : i32, i32
  }
  func.func @transform_1(%arg0: i32) -> (i32, i32) {
    %c0_i32 = arith.constant 0 : i32
    %c0_i32_0 = arith.constant 0 : i32
    %c0_i32_1 = arith.constant 0 : i32
    return %c0_i32, %c0_i32_0 : i32, i32
  }
  func.func @transform_2(%arg0: i32) -> (i32, i32) {
    %c0_i32 = arith.constant 0 : i32
    %c0_i32_0 = arith.constant 0 : i32
    %c0_i32_1 = arith.constant 0 : i32
    return %c0_i32, %c0_i32_0 : i32, i32
  }
  func.func @transform_3(%arg0: i32) -> (i32, i32) {
    %c0_i32 = arith.constant 0 : i32
    %c0_i32_0 = arith.constant 0 : i32
    return %arg0, %c0_i32 : i32, i32
  }
}

module attributes {stable_mosaic.version = 11 : i64} {
  func.func @_conv_s2_bn_stats_kernel(%arg0: i32, %arg1: memref<1x2x2x30x64xbf16, #tpu.memory_space<vmem>>, %arg2: memref<4x4x64x128xbf16, #tpu.memory_space<vmem>>, %arg3: memref<1x128xf32, #tpu.memory_space<vmem>>, %arg4: memref<20x1xf32, #tpu.memory_space<vmem>>, %arg5: memref<1x20x128xbf16, #tpu.memory_space<vmem>>, %arg6: memref<1x1x128xf32, #tpu.memory_space<vmem>>, %arg7: memref<1x1x128xf32, #tpu.memory_space<vmem>>) attributes {dimension_semantics = [#tpu.dimension_semantics<parallel>], iteration_bounds = array<i64: 2>, scalar_prefetch = 0 : i64, scratch_operands = 0 : i64, tpu.core_type = #tpu.core_type<tc>, window_params = [{transform_indices = @transform_0, window_bounds = array<i64: 1, 2, 2, 30, 64>}, {pipeline_mode = #tpu.pipeline_mode<synchronous>, transform_indices = @transform_1, window_bounds = array<i64: 4, 4, 64, 128>}, {pipeline_mode = #tpu.pipeline_mode<synchronous>, transform_indices = @transform_2, window_bounds = array<i64: 1, 128>}, {pipeline_mode = #tpu.pipeline_mode<synchronous>, transform_indices = @transform_3, window_bounds = array<i64: 20, 1>}, {transform_indices = @transform_4, window_bounds = array<i64: 1, 20, 128>}, {transform_indices = @transform_5, window_bounds = array<i64: 1, 1, 128>}, {transform_indices = @transform_6, window_bounds = array<i64: 1, 1, 128>}]} {
    %cst = arith.constant 0.000000e+00 : f32
    %0 = vector.broadcast %cst : f32 to vector<20x128xf32>
    %c0 = arith.constant 0 : index
    %c0_0 = arith.constant 0 : index
    %c0_1 = arith.constant 0 : index
    %c0_2 = arith.constant 0 : index
    %c0_3 = arith.constant 0 : index
    %1 = vector.load %arg1[%c0, %c0_0, %c0_1, %c0_2, %c0_3] : memref<1x2x2x30x64xbf16, #tpu.memory_space<vmem>>, vector<1x1x1x20x64xbf16>
    %2 = vector.shape_cast %1 : vector<1x1x1x20x64xbf16> to vector<20x64xbf16>
    %c0_4 = arith.constant 0 : index
    %c0_5 = arith.constant 0 : index
    %c0_6 = arith.constant 0 : index
    %c0_7 = arith.constant 0 : index
    %3 = vector.load %arg2[%c0_4, %c0_5, %c0_6, %c0_7] : memref<4x4x64x128xbf16, #tpu.memory_space<vmem>>, vector<1x1x64x128xbf16>
    %4 = vector.shape_cast %3 : vector<1x1x64x128xbf16> to vector<64x128xbf16>
    %cst_8 = arith.constant dense<0.000000e+00> : vector<20x128xf32>
    %5 = tpu.matmul %2, %4, %cst_8 {dimension_numbers = #tpu.dot_dimension_numbers<[1], [0], [0], [1], [0, 0, 1, 1], [], []>} : vector<20x64xbf16>, vector<64x128xbf16>, vector<20x128xf32> -> vector<20x128xf32>
    %6 = arith.addf %0, %5 : vector<20x128xf32>
    %c0_9 = arith.constant 0 : index
    %c0_10 = arith.constant 0 : index
    %c1 = arith.constant 1 : index
    %c0_11 = arith.constant 0 : index
    %c0_12 = arith.constant 0 : index
    %7 = vector.load %arg1[%c0_9, %c0_10, %c1, %c0_11, %c0_12] : memref<1x2x2x30x64xbf16, #tpu.memory_space<vmem>>, vector<1x1x1x20x64xbf16>
    %8 = vector.shape_cast %7 : vector<1x1x1x20x64xbf16> to vector<20x64xbf16>
    %c0_13 = arith.constant 0 : index
    %c1_14 = arith.constant 1 : index
    %c0_15 = arith.constant 0 : index
    %c0_16 = arith.constant 0 : index
    %9 = vector.load %arg2[%c0_13, %c1_14, %c0_15, %c0_16] : memref<4x4x64x128xbf16, #tpu.memory_space<vmem>>, vector<1x1x64x128xbf16>
    %10 = vector.shape_cast %9 : vector<1x1x64x128xbf16> to vector<64x128xbf16>
    %cst_17 = arith.constant dense<0.000000e+00> : vector<20x128xf32>
    %11 = tpu.matmul %8, %10, %cst_17 {dimension_numbers = #tpu.dot_dimension_numbers<[1], [0], [0], [1], [0, 0, 1, 1], [], []>} : vector<20x64xbf16>, vector<64x128xbf16>, vector<20x128xf32> -> vector<20x128xf32>
    %12 = arith.addf %6, %11 : vector<20x128xf32>
    %c0_18 = arith.constant 0 : index
    %c0_19 = arith.constant 0 : index
    %c0_20 = arith.constant 0 : index
    %c1_21 = arith.constant 1 : index
    %c0_22 = arith.constant 0 : index
    %13 = vector.load %arg1[%c0_18, %c0_19, %c0_20, %c1_21, %c0_22] : memref<1x2x2x30x64xbf16, #tpu.memory_space<vmem>>, vector<1x1x1x20x64xbf16>
    %14 = vector.shape_cast %13 : vector<1x1x1x20x64xbf16> to vector<20x64xbf16>
    %c0_23 = arith.constant 0 : index
    %c2 = arith.constant 2 : index
    %c0_24 = arith.constant 0 : index
    %c0_25 = arith.constant 0 : index
    %15 = vector.load %arg2[%c0_23, %c2, %c0_24, %c0_25] : memref<4x4x64x128xbf16, #tpu.memory_space<vmem>>, vector<1x1x64x128xbf16>
    %16 = vector.shape_cast %15 : vector<1x1x64x128xbf16> to vector<64x128xbf16>
    %cst_26 = arith.constant dense<0.000000e+00> : vector<20x128xf32>
    %17 = tpu.matmul %14, %16, %cst_26 {dimension_numbers = #tpu.dot_dimension_numbers<[1], [0], [0], [1], [0, 0, 1, 1], [], []>} : vector<20x64xbf16>, vector<64x128xbf16>, vector<20x128xf32> -> vector<20x128xf32>
    %18 = arith.addf %12, %17 : vector<20x128xf32>
    %c0_27 = arith.constant 0 : index
    %c0_28 = arith.constant 0 : index
    %c1_29 = arith.constant 1 : index
    %c1_30 = arith.constant 1 : index
    %c0_31 = arith.constant 0 : index
    %19 = vector.load %arg1[%c0_27, %c0_28, %c1_29, %c1_30, %c0_31] : memref<1x2x2x30x64xbf16, #tpu.memory_space<vmem>>, vector<1x1x1x20x64xbf16>
    %20 = vector.shape_cast %19 : vector<1x1x1x20x64xbf16> to vector<20x64xbf16>
    %c0_32 = arith.constant 0 : index
    %c3 = arith.constant 3 : index
    %c0_33 = arith.constant 0 : index
    %c0_34 = arith.constant 0 : index
    %21 = vector.load %arg2[%c0_32, %c3, %c0_33, %c0_34] : memref<4x4x64x128xbf16, #tpu.memory_space<vmem>>, vector<1x1x64x128xbf16>
    %22 = vector.shape_cast %21 : vector<1x1x64x128xbf16> to vector<64x128xbf16>
    %cst_35 = arith.constant dense<0.000000e+00> : vector<20x128xf32>
    %23 = tpu.matmul %20, %22, %cst_35 {dimension_numbers = #tpu.dot_dimension_numbers<[1], [0], [0], [1], [0, 0, 1, 1], [], []>} : vector<20x64xbf16>, vector<64x128xbf16>, vector<20x128xf32> -> vector<20x128xf32>
    %24 = arith.addf %18, %23 : vector<20x128xf32>
    %c0_36 = arith.constant 0 : index
    %c1_37 = arith.constant 1 : index
    %c0_38 = arith.constant 0 : index
    %c0_39 = arith.constant 0 : index
    %c0_40 = arith.constant 0 : index
    %25 = vector.load %arg1[%c0_36, %c1_37, %c0_38, %c0_39, %c0_40] : memref<1x2x2x30x64xbf16, #tpu.memory_space<vmem>>, vector<1x1x1x20x64xbf16>
    %26 = vector.shape_cast %25 : vector<1x1x1x20x64xbf16> to vector<20x64xbf16>
    %c1_41 = arith.constant 1 : index
    %c0_42 = arith.constant 0 : index
    %c0_43 = arith.constant 0 : index
    %c0_44 = arith.constant 0 : index
    %27 = vector.load %arg2[%c1_41, %c0_42, %c0_43, %c0_44] : memref<4x4x64x128xbf16, #tpu.memory_space<vmem>>, vector<1x1x64x128xbf16>
    %28 = vector.shape_cast %27 : vector<1x1x64x128xbf16> to vector<64x128xbf16>
    %cst_45 = arith.constant dense<0.000000e+00> : vector<20x128xf32>
    %29 = tpu.matmul %26, %28, %cst_45 {dimension_numbers = #tpu.dot_dimension_numbers<[1], [0], [0], [1], [0, 0, 1, 1], [], []>} : vector<20x64xbf16>, vector<64x128xbf16>, vector<20x128xf32> -> vector<20x128xf32>
    %30 = arith.addf %24, %29 : vector<20x128xf32>
    %c0_46 = arith.constant 0 : index
    %c1_47 = arith.constant 1 : index
    %c1_48 = arith.constant 1 : index
    %c0_49 = arith.constant 0 : index
    %c0_50 = arith.constant 0 : index
    %31 = vector.load %arg1[%c0_46, %c1_47, %c1_48, %c0_49, %c0_50] : memref<1x2x2x30x64xbf16, #tpu.memory_space<vmem>>, vector<1x1x1x20x64xbf16>
    %32 = vector.shape_cast %31 : vector<1x1x1x20x64xbf16> to vector<20x64xbf16>
    %c1_51 = arith.constant 1 : index
    %c1_52 = arith.constant 1 : index
    %c0_53 = arith.constant 0 : index
    %c0_54 = arith.constant 0 : index
    %33 = vector.load %arg2[%c1_51, %c1_52, %c0_53, %c0_54] : memref<4x4x64x128xbf16, #tpu.memory_space<vmem>>, vector<1x1x64x128xbf16>
    %34 = vector.shape_cast %33 : vector<1x1x64x128xbf16> to vector<64x128xbf16>
    %cst_55 = arith.constant dense<0.000000e+00> : vector<20x128xf32>
    %35 = tpu.matmul %32, %34, %cst_55 {dimension_numbers = #tpu.dot_dimension_numbers<[1], [0], [0], [1], [0, 0, 1, 1], [], []>} : vector<20x64xbf16>, vector<64x128xbf16>, vector<20x128xf32> -> vector<20x128xf32>
    %36 = arith.addf %30, %35 : vector<20x128xf32>
    %c0_56 = arith.constant 0 : index
    %c1_57 = arith.constant 1 : index
    %c0_58 = arith.constant 0 : index
    %c1_59 = arith.constant 1 : index
    %c0_60 = arith.constant 0 : index
    %37 = vector.load %arg1[%c0_56, %c1_57, %c0_58, %c1_59, %c0_60] : memref<1x2x2x30x64xbf16, #tpu.memory_space<vmem>>, vector<1x1x1x20x64xbf16>
    %38 = vector.shape_cast %37 : vector<1x1x1x20x64xbf16> to vector<20x64xbf16>
    %c1_61 = arith.constant 1 : index
    %c2_62 = arith.constant 2 : index
    %c0_63 = arith.constant 0 : index
    %c0_64 = arith.constant 0 : index
    %39 = vector.load %arg2[%c1_61, %c2_62, %c0_63, %c0_64] : memref<4x4x64x128xbf16, #tpu.memory_space<vmem>>, vector<1x1x64x128xbf16>
    %40 = vector.shape_cast %39 : vector<1x1x64x128xbf16> to vector<64x128xbf16>
    %cst_65 = arith.constant dense<0.000000e+00> : vector<20x128xf32>
    %41 = tpu.matmul %38, %40, %cst_65 {dimension_numbers = #tpu.dot_dimension_numbers<[1], [0], [0], [1], [0, 0, 1, 1], [], []>} : vector<20x64xbf16>, vector<64x128xbf16>, vector<20x128xf32> -> vector<20x128xf32>
    %42 = arith.addf %36, %41 : vector<20x128xf32>
    %c0_66 = arith.constant 0 : index
    %c1_67 = arith.constant 1 : index
    %c1_68 = arith.constant 1 : index
    %c1_69 = arith.constant 1 : index
    %c0_70 = arith.constant 0 : index
    %43 = vector.load %arg1[%c0_66, %c1_67, %c1_68, %c1_69, %c0_70] : memref<1x2x2x30x64xbf16, #tpu.memory_space<vmem>>, vector<1x1x1x20x64xbf16>
    %44 = vector.shape_cast %43 : vector<1x1x1x20x64xbf16> to vector<20x64xbf16>
    %c1_71 = arith.constant 1 : index
    %c3_72 = arith.constant 3 : index
    %c0_73 = arith.constant 0 : index
    %c0_74 = arith.constant 0 : index
    %45 = vector.load %arg2[%c1_71, %c3_72, %c0_73, %c0_74] : memref<4x4x64x128xbf16, #tpu.memory_space<vmem>>, vector<1x1x64x128xbf16>
    %46 = vector.shape_cast %45 : vector<1x1x64x128xbf16> to vector<64x128xbf16>
    %cst_75 = arith.constant dense<0.000000e+00> : vector<20x128xf32>
    %47 = tpu.matmul %44, %46, %cst_75 {dimension_numbers = #tpu.dot_dimension_numbers<[1], [0], [0], [1], [0, 0, 1, 1], [], []>} : vector<20x64xbf16>, vector<64x128xbf16>, vector<20x128xf32> -> vector<20x128xf32>
    %48 = arith.addf %42, %47 : vector<20x128xf32>
    %c0_76 = arith.constant 0 : index
    %c0_77 = arith.constant 0 : index
    %c0_78 = arith.constant 0 : index
    %c5 = arith.constant 5 : index
    %c0_79 = arith.constant 0 : index
    %49 = vector.load %arg1[%c0_76, %c0_77, %c0_78, %c5, %c0_79] : memref<1x2x2x30x64xbf16, #tpu.memory_space<vmem>>, vector<1x1x1x20x64xbf16>
    %50 = vector.shape_cast %49 : vector<1x1x1x20x64xbf16> to vector<20x64xbf16>
    %c2_80 = arith.constant 2 : index
    %c0_81 = arith.constant 0 : index
    %c0_82 = arith.constant 0 : index
    %c0_83 = arith.constant 0 : index
    %51 = vector.load %arg2[%c2_80, %c0_81, %c0_82, %c0_83] : memref<4x4x64x128xbf16, #tpu.memory_space<vmem>>, vector<1x1x64x128xbf16>
    %52 = vector.shape_cast %51 : vector<1x1x64x128xbf16> to vector<64x128xbf16>
    %cst_84 = arith.constant dense<0.000000e+00> : vector<20x128xf32>
    %53 = tpu.matmul %50, %52, %cst_84 {dimension_numbers = #tpu.dot_dimension_numbers<[1], [0], [0], [1], [0, 0, 1, 1], [], []>} : vector<20x64xbf16>, vector<64x128xbf16>, vector<20x128xf32> -> vector<20x128xf32>
    %54 = arith.addf %48, %53 : vector<20x128xf32>
    %c0_85 = arith.constant 0 : index
    %c0_86 = arith.constant 0 : index
    %c1_87 = arith.constant 1 : index
    %c5_88 = arith.constant 5 : index
    %c0_89 = arith.constant 0 : index
    %55 = vector.load %arg1[%c0_85, %c0_86, %c1_87, %c5_88, %c0_89] : memref<1x2x2x30x64xbf16, #tpu.memory_space<vmem>>, vector<1x1x1x20x64xbf16>
    %56 = vector.shape_cast %55 : vector<1x1x1x20x64xbf16> to vector<20x64xbf16>
    %c2_90 = arith.constant 2 : index
    %c1_91 = arith.constant 1 : index
    %c0_92 = arith.constant 0 : index
    %c0_93 = arith.constant 0 : index
    %57 = vector.load %arg2[%c2_90, %c1_91, %c0_92, %c0_93] : memref<4x4x64x128xbf16, #tpu.memory_space<vmem>>, vector<1x1x64x128xbf16>
    %58 = vector.shape_cast %57 : vector<1x1x64x128xbf16> to vector<64x128xbf16>
    %cst_94 = arith.constant dense<0.000000e+00> : vector<20x128xf32>
    %59 = tpu.matmul %56, %58, %cst_94 {dimension_numbers = #tpu.dot_dimension_numbers<[1], [0], [0], [1], [0, 0, 1, 1], [], []>} : vector<20x64xbf16>, vector<64x128xbf16>, vector<20x128xf32> -> vector<20x128xf32>
    %60 = arith.addf %54, %59 : vector<20x128xf32>
    %c0_95 = arith.constant 0 : index
    %c0_96 = arith.constant 0 : index
    %c0_97 = arith.constant 0 : index
    %c6 = arith.constant 6 : index
    %c0_98 = arith.constant 0 : index
    %61 = vector.load %arg1[%c0_95, %c0_96, %c0_97, %c6, %c0_98] : memref<1x2x2x30x64xbf16, #tpu.memory_space<vmem>>, vector<1x1x1x20x64xbf16>
    %62 = vector.shape_cast %61 : vector<1x1x1x20x64xbf16> to vector<20x64xbf16>
    %c2_99 = arith.constant 2 : index
    %c2_100 = arith.constant 2 : index
    %c0_101 = arith.constant 0 : index
    %c0_102 = arith.constant 0 : index
    %63 = vector.load %arg2[%c2_99, %c2_100, %c0_101, %c0_102] : memref<4x4x64x128xbf16, #tpu.memory_space<vmem>>, vector<1x1x64x128xbf16>
    %64 = vector.shape_cast %63 : vector<1x1x64x128xbf16> to vector<64x128xbf16>
    %cst_103 = arith.constant dense<0.000000e+00> : vector<20x128xf32>
    %65 = tpu.matmul %62, %64, %cst_103 {dimension_numbers = #tpu.dot_dimension_numbers<[1], [0], [0], [1], [0, 0, 1, 1], [], []>} : vector<20x64xbf16>, vector<64x128xbf16>, vector<20x128xf32> -> vector<20x128xf32>
    %66 = arith.addf %60, %65 : vector<20x128xf32>
    %c0_104 = arith.constant 0 : index
    %c0_105 = arith.constant 0 : index
    %c1_106 = arith.constant 1 : index
    %c6_107 = arith.constant 6 : index
    %c0_108 = arith.constant 0 : index
    %67 = vector.load %arg1[%c0_104, %c0_105, %c1_106, %c6_107, %c0_108] : memref<1x2x2x30x64xbf16, #tpu.memory_space<vmem>>, vector<1x1x1x20x64xbf16>
    %68 = vector.shape_cast %67 : vector<1x1x1x20x64xbf16> to vector<20x64xbf16>
    %c2_109 = arith.constant 2 : index
    %c3_110 = arith.constant 3 : index
    %c0_111 = arith.constant 0 : index
    %c0_112 = arith.constant 0 : index
    %69 = vector.load %arg2[%c2_109, %c3_110, %c0_111, %c0_112] : memref<4x4x64x128xbf16, #tpu.memory_space<vmem>>, vector<1x1x64x128xbf16>
    %70 = vector.shape_cast %69 : vector<1x1x64x128xbf16> to vector<64x128xbf16>
    %cst_113 = arith.constant dense<0.000000e+00> : vector<20x128xf32>
    %71 = tpu.matmul %68, %70, %cst_113 {dimension_numbers = #tpu.dot_dimension_numbers<[1], [0], [0], [1], [0, 0, 1, 1], [], []>} : vector<20x64xbf16>, vector<64x128xbf16>, vector<20x128xf32> -> vector<20x128xf32>
    %72 = arith.addf %66, %71 : vector<20x128xf32>
    %c0_114 = arith.constant 0 : index
    %c1_115 = arith.constant 1 : index
    %c0_116 = arith.constant 0 : index
    %c5_117 = arith.constant 5 : index
    %c0_118 = arith.constant 0 : index
    %73 = vector.load %arg1[%c0_114, %c1_115, %c0_116, %c5_117, %c0_118] : memref<1x2x2x30x64xbf16, #tpu.memory_space<vmem>>, vector<1x1x1x20x64xbf16>
    %74 = vector.shape_cast %73 : vector<1x1x1x20x64xbf16> to vector<20x64xbf16>
    %c3_119 = arith.constant 3 : index
    %c0_120 = arith.constant 0 : index
    %c0_121 = arith.constant 0 : index
    %c0_122 = arith.constant 0 : index
    %75 = vector.load %arg2[%c3_119, %c0_120, %c0_121, %c0_122] : memref<4x4x64x128xbf16, #tpu.memory_space<vmem>>, vector<1x1x64x128xbf16>
    %76 = vector.shape_cast %75 : vector<1x1x64x128xbf16> to vector<64x128xbf16>
    %cst_123 = arith.constant dense<0.000000e+00> : vector<20x128xf32>
    %77 = tpu.matmul %74, %76, %cst_123 {dimension_numbers = #tpu.dot_dimension_numbers<[1], [0], [0], [1], [0, 0, 1, 1], [], []>} : vector<20x64xbf16>, vector<64x128xbf16>, vector<20x128xf32> -> vector<20x128xf32>
    %78 = arith.addf %72, %77 : vector<20x128xf32>
    %c0_124 = arith.constant 0 : index
    %c1_125 = arith.constant 1 : index
    %c1_126 = arith.constant 1 : index
    %c5_127 = arith.constant 5 : index
    %c0_128 = arith.constant 0 : index
    %79 = vector.load %arg1[%c0_124, %c1_125, %c1_126, %c5_127, %c0_128] : memref<1x2x2x30x64xbf16, #tpu.memory_space<vmem>>, vector<1x1x1x20x64xbf16>
    %80 = vector.shape_cast %79 : vector<1x1x1x20x64xbf16> to vector<20x64xbf16>
    %c3_129 = arith.constant 3 : index
    %c1_130 = arith.constant 1 : index
    %c0_131 = arith.constant 0 : index
    %c0_132 = arith.constant 0 : index
    %81 = vector.load %arg2[%c3_129, %c1_130, %c0_131, %c0_132] : memref<4x4x64x128xbf16, #tpu.memory_space<vmem>>, vector<1x1x64x128xbf16>
    %82 = vector.shape_cast %81 : vector<1x1x64x128xbf16> to vector<64x128xbf16>
    %cst_133 = arith.constant dense<0.000000e+00> : vector<20x128xf32>
    %83 = tpu.matmul %80, %82, %cst_133 {dimension_numbers = #tpu.dot_dimension_numbers<[1], [0], [0], [1], [0, 0, 1, 1], [], []>} : vector<20x64xbf16>, vector<64x128xbf16>, vector<20x128xf32> -> vector<20x128xf32>
    %84 = arith.addf %78, %83 : vector<20x128xf32>
    %c0_134 = arith.constant 0 : index
    %c1_135 = arith.constant 1 : index
    %c0_136 = arith.constant 0 : index
    %c6_137 = arith.constant 6 : index
    %c0_138 = arith.constant 0 : index
    %85 = vector.load %arg1[%c0_134, %c1_135, %c0_136, %c6_137, %c0_138] : memref<1x2x2x30x64xbf16, #tpu.memory_space<vmem>>, vector<1x1x1x20x64xbf16>
    %86 = vector.shape_cast %85 : vector<1x1x1x20x64xbf16> to vector<20x64xbf16>
    %c3_139 = arith.constant 3 : index
    %c2_140 = arith.constant 2 : index
    %c0_141 = arith.constant 0 : index
    %c0_142 = arith.constant 0 : index
    %87 = vector.load %arg2[%c3_139, %c2_140, %c0_141, %c0_142] : memref<4x4x64x128xbf16, #tpu.memory_space<vmem>>, vector<1x1x64x128xbf16>
    %88 = vector.shape_cast %87 : vector<1x1x64x128xbf16> to vector<64x128xbf16>
    %cst_143 = arith.constant dense<0.000000e+00> : vector<20x128xf32>
    %89 = tpu.matmul %86, %88, %cst_143 {dimension_numbers = #tpu.dot_dimension_numbers<[1], [0], [0], [1], [0, 0, 1, 1], [], []>} : vector<20x64xbf16>, vector<64x128xbf16>, vector<20x128xf32> -> vector<20x128xf32>
    %90 = arith.addf %84, %89 : vector<20x128xf32>
    %c0_144 = arith.constant 0 : index
    %c1_145 = arith.constant 1 : index
    %c1_146 = arith.constant 1 : index
    %c6_147 = arith.constant 6 : index
    %c0_148 = arith.constant 0 : index
    %91 = vector.load %arg1[%c0_144, %c1_145, %c1_146, %c6_147, %c0_148] : memref<1x2x2x30x64xbf16, #tpu.memory_space<vmem>>, vector<1x1x1x20x64xbf16>
    %92 = vector.shape_cast %91 : vector<1x1x1x20x64xbf16> to vector<20x64xbf16>
    %c3_149 = arith.constant 3 : index
    %c3_150 = arith.constant 3 : index
    %c0_151 = arith.constant 0 : index
    %c0_152 = arith.constant 0 : index
    %93 = vector.load %arg2[%c3_149, %c3_150, %c0_151, %c0_152] : memref<4x4x64x128xbf16, #tpu.memory_space<vmem>>, vector<1x1x64x128xbf16>
    %94 = vector.shape_cast %93 : vector<1x1x64x128xbf16> to vector<64x128xbf16>
    %cst_153 = arith.constant dense<0.000000e+00> : vector<20x128xf32>
    %95 = tpu.matmul %92, %94, %cst_153 {dimension_numbers = #tpu.dot_dimension_numbers<[1], [0], [0], [1], [0, 0, 1, 1], [], []>} : vector<20x64xbf16>, vector<64x128xbf16>, vector<20x128xf32> -> vector<20x128xf32>
    %96 = arith.addf %90, %95 : vector<20x128xf32>
    %c0_154 = arith.constant 0 : index
    %c0_155 = arith.constant 0 : index
    %97 = vector.load %arg3[%c0_154, %c0_155] : memref<1x128xf32, #tpu.memory_space<vmem>>, vector<1x128xf32>
    %98 = vector.broadcast %97 : vector<1x128xf32> to vector<20x128xf32>
    %99 = arith.addf %96, %98 : vector<20x128xf32>
    %100 = arith.truncf %99 : vector<20x128xf32> to vector<20x128xbf16>
    %c0_156 = arith.constant 0 : index
    %c0_157 = arith.constant 0 : index
    %c0_158 = arith.constant 0 : index
    %101 = vector.load %arg5[%c0_156, %c0_157, %c0_158] : memref<1x20x128xbf16, #tpu.memory_space<vmem>>, vector<1x20x128xbf16>
    %102 = vector.shape_cast %101 : vector<1x20x128xbf16> to vector<20x128xbf16>
    %103 = vector.shape_cast %100 : vector<20x128xbf16> to vector<1x20x128xbf16>
    tpu.vector_store %arg5[%c0_156, %c0_157, %c0_158], %103 {strides = array<i32>} : memref<1x20x128xbf16, #tpu.memory_space<vmem>>, vector<1x20x128xbf16>,
    %c0_159 = arith.constant 0 : index
    %c0_160 = arith.constant 0 : index
    %104 = vector.load %arg4[%c0_159, %c0_160] : memref<20x1xf32, #tpu.memory_space<vmem>>, vector<20x1xf32>
    %cst_161 = arith.constant 5.000000e-01 : f32
    %105 = vector.broadcast %cst_161 : f32 to vector<20x1xf32>
    %106 = arith.cmpf ogt, %104, %105 : vector<20x1xf32>
    %cst_162 = arith.constant 0.000000e+00 : f32
    %107 = vector.shape_cast %106 : vector<20x1xi1> to vector<20x1xi1>
    %108 = vector.broadcast %107 : vector<20x1xi1> to vector<20x128xi1>
    %109 = vector.broadcast %cst_162 : f32 to vector<20x128xf32>
    %110 = arith.select %108, %99, %109 : vector<20x128xi1>, vector<20x128xf32>
    %cst_163 = arith.constant dense<0.000000e+00> : vector<128xf32>
    %111 = vector.multi_reduction <add>, %110, %cst_163 [0] : vector<20x128xf32> to vector<128xf32>
    %112 = vector.shape_cast %111 : vector<128xf32> to vector<1x128xf32>
    %c0_164 = arith.constant 0 : index
    %c0_165 = arith.constant 0 : index
    %c0_166 = arith.constant 0 : index
    %113 = vector.load %arg6[%c0_164, %c0_165, %c0_166] : memref<1x1x128xf32, #tpu.memory_space<vmem>>, vector<1x1x128xf32>
    %114 = vector.shape_cast %113 : vector<1x1x128xf32> to vector<1x128xf32>
    %115 = vector.shape_cast %112 : vector<1x128xf32> to vector<1x1x128xf32>
    tpu.vector_store %arg6[%c0_164, %c0_165, %c0_166], %115 {strides = array<i32>} : memref<1x1x128xf32, #tpu.memory_space<vmem>>, vector<1x1x128xf32>,
    %116 = arith.mulf %110, %110 : vector<20x128xf32>
    %cst_167 = arith.constant dense<0.000000e+00> : vector<128xf32>
    %117 = vector.multi_reduction <add>, %116, %cst_167 [0] : vector<20x128xf32> to vector<128xf32>
    %118 = vector.shape_cast %117 : vector<128xf32> to vector<1x128xf32>
    %c0_168 = arith.constant 0 : index
    %c0_169 = arith.constant 0 : index
    %c0_170 = arith.constant 0 : index
    %119 = vector.load %arg7[%c0_168, %c0_169, %c0_170] : memref<1x1x128xf32, #tpu.memory_space<vmem>>, vector<1x1x128xf32>
    %120 = vector.shape_cast %119 : vector<1x1x128xf32> to vector<1x128xf32>
    %121 = vector.shape_cast %118 : vector<1x128xf32> to vector<1x1x128xf32>
    tpu.vector_store %arg7[%c0_168, %c0_169, %c0_170], %121 {strides = array<i32>} : memref<1x1x128xf32, #tpu.memory_space<vmem>>, vector<1x1x128xf32>,
    return
  }
  func.func @transform_0(%arg0: i32) -> (i32, i32, i32, i32, i32) {
    %c0_i32 = arith.constant 0 : i32
    %c0_i32_0 = arith.constant 0 : i32
    %c0_i32_1 = arith.constant 0 : i32
    %c0_i32_2 = arith.constant 0 : i32
    %c0_i32_3 = arith.constant 0 : i32
    return %arg0, %c0_i32, %c0_i32_0, %c0_i32_1, %c0_i32_2 : i32, i32, i32, i32, i32
  }
  func.func @transform_1(%arg0: i32) -> (i32, i32, i32, i32) {
    %c0_i32 = arith.constant 0 : i32
    %c0_i32_0 = arith.constant 0 : i32
    %c0_i32_1 = arith.constant 0 : i32
    %c0_i32_2 = arith.constant 0 : i32
    %c0_i32_3 = arith.constant 0 : i32
    return %c0_i32, %c0_i32_0, %c0_i32_1, %c0_i32_2 : i32, i32, i32, i32
  }
  func.func @transform_2(%arg0: i32) -> (i32, i32) {
    %c0_i32 = arith.constant 0 : i32
    %c0_i32_0 = arith.constant 0 : i32
    %c0_i32_1 = arith.constant 0 : i32
    return %c0_i32, %c0_i32_0 : i32, i32
  }
  func.func @transform_3(%arg0: i32) -> (i32, i32) {
    %c0_i32 = arith.constant 0 : i32
    %c0_i32_0 = arith.constant 0 : i32
    %c0_i32_1 = arith.constant 0 : i32
    return %c0_i32, %c0_i32_0 : i32, i32
  }
  func.func @transform_4(%arg0: i32) -> (i32, i32, i32) {
    %c0_i32 = arith.constant 0 : i32
    %c0_i32_0 = arith.constant 0 : i32
    %c0_i32_1 = arith.constant 0 : i32
    return %arg0, %c0_i32, %c0_i32_0 : i32, i32, i32
  }
  func.func @transform_5(%arg0: i32) -> (i32, i32, i32) {
    %c0_i32 = arith.constant 0 : i32
    %c0_i32_0 = arith.constant 0 : i32
    %c0_i32_1 = arith.constant 0 : i32
    return %arg0, %c0_i32, %c0_i32_0 : i32, i32, i32
  }
  func.func @transform_6(%arg0: i32) -> (i32, i32, i32) {
    %c0_i32 = arith.constant 0 : i32
    %c0_i32_0 = arith.constant 0 : i32
    %c0_i32_1 = arith.constant 0 : i32
    return %arg0, %c0_i32, %c0_i32_0 : i32, i32, i32
  }
}

module attributes {stable_mosaic.version = 11 : i64} {
  func.func @_bn_lrelu_kernel(%arg0: i32, %arg1: memref<48x128xbf16, #tpu.memory_space<vmem>>, %arg2: memref<1x128xf32, #tpu.memory_space<vmem>>, %arg3: memref<1x128xf32, #tpu.memory_space<vmem>>, %arg4: memref<48x128xbf16, #tpu.memory_space<vmem>>) attributes {dimension_semantics = [#tpu.dimension_semantics<parallel>], iteration_bounds = array<i64: 1>, scalar_prefetch = 0 : i64, scratch_operands = 0 : i64, tpu.core_type = #tpu.core_type<tc>, window_params = [{transform_indices = @transform_0, window_bounds = array<i64: 48, 128>}, {pipeline_mode = #tpu.pipeline_mode<synchronous>, transform_indices = @transform_1, window_bounds = array<i64: 1, 128>}, {pipeline_mode = #tpu.pipeline_mode<synchronous>, transform_indices = @transform_2, window_bounds = array<i64: 1, 128>}, {transform_indices = @transform_3, window_bounds = array<i64: 48, 128>}]} {
    %c0 = arith.constant 0 : index
    %c0_0 = arith.constant 0 : index
    %0 = vector.load %arg1[%c0, %c0_0] : memref<48x128xbf16, #tpu.memory_space<vmem>>, vector<48x128xbf16>
    %1 = arith.extf %0 : vector<48x128xbf16> to vector<48x128xf32>
    %c0_1 = arith.constant 0 : index
    %c0_2 = arith.constant 0 : index
    %2 = vector.load %arg2[%c0_1, %c0_2] : memref<1x128xf32, #tpu.memory_space<vmem>>, vector<1x128xf32>
    %3 = vector.broadcast %2 : vector<1x128xf32> to vector<48x128xf32>
    %4 = arith.mulf %1, %3 : vector<48x128xf32>
    %c0_3 = arith.constant 0 : index
    %c0_4 = arith.constant 0 : index
    %5 = vector.load %arg3[%c0_3, %c0_4] : memref<1x128xf32, #tpu.memory_space<vmem>>, vector<1x128xf32>
    %6 = vector.broadcast %5 : vector<1x128xf32> to vector<48x128xf32>
    %7 = arith.addf %4, %6 : vector<48x128xf32>
    %cst = arith.constant 0.000000e+00 : f32
    %8 = vector.broadcast %cst : f32 to vector<48x128xf32>
    %9 = arith.cmpf ogt, %7, %8 : vector<48x128xf32>
    %cst_5 = arith.constant 2.000000e-01 : f32
    %10 = vector.broadcast %cst_5 : f32 to vector<48x128xf32>
    %11 = arith.mulf %10, %7 : vector<48x128xf32>
    %12 = arith.select %9, %7, %11 : vector<48x128xi1>, vector<48x128xf32>
    %13 = arith.truncf %12 : vector<48x128xf32> to vector<48x128xbf16>
    %c0_6 = arith.constant 0 : index
    %c0_7 = arith.constant 0 : index
    %14 = vector.load %arg4[%c0_6, %c0_7] : memref<48x128xbf16, #tpu.memory_space<vmem>>, vector<48x128xbf16>
    tpu.vector_store %arg4[%c0_6, %c0_7], %13 {strides = array<i32>} : memref<48x128xbf16, #tpu.memory_space<vmem>>, vector<48x128xbf16>,
    return
  }
  func.func @transform_0(%arg0: i32) -> (i32, i32) {
    %c0_i32 = arith.constant 0 : i32
    %c0_i32_0 = arith.constant 0 : i32
    return %arg0, %c0_i32 : i32, i32
  }
  func.func @transform_1(%arg0: i32) -> (i32, i32) {
    %c0_i32 = arith.constant 0 : i32
    %c0_i32_0 = arith.constant 0 : i32
    %c0_i32_1 = arith.constant 0 : i32
    return %c0_i32, %c0_i32_0 : i32, i32
  }
  func.func @transform_2(%arg0: i32) -> (i32, i32) {
    %c0_i32 = arith.constant 0 : i32
    %c0_i32_0 = arith.constant 0 : i32
    %c0_i32_1 = arith.constant 0 : i32
    return %c0_i32, %c0_i32_0 : i32, i32
  }
  func.func @transform_3(%arg0: i32) -> (i32, i32) {
    %c0_i32 = arith.constant 0 : i32
    %c0_i32_0 = arith.constant 0 : i32
    return %arg0, %c0_i32 : i32, i32
  }
}

module attributes {stable_mosaic.version = 11 : i64} {
  func.func @_conv_s1_sigmoid_kernel(%arg0: i32, %arg1: memref<1x42x128xbf16, #tpu.memory_space<vmem>>, %arg2: memref<4x4x128x128xbf16, #tpu.memory_space<vmem>>, %arg3: memref<1x128xf32, #tpu.memory_space<vmem>>, %arg4: memref<1x18x128xbf16, #tpu.memory_space<vmem>>) attributes {dimension_semantics = [#tpu.dimension_semantics<parallel>], iteration_bounds = array<i64: 2>, scalar_prefetch = 0 : i64, scratch_operands = 0 : i64, tpu.core_type = #tpu.core_type<tc>, window_params = [{transform_indices = @transform_0, window_bounds = array<i64: 1, 42, 128>}, {pipeline_mode = #tpu.pipeline_mode<synchronous>, transform_indices = @transform_1, window_bounds = array<i64: 4, 4, 128, 128>}, {pipeline_mode = #tpu.pipeline_mode<synchronous>, transform_indices = @transform_2, window_bounds = array<i64: 1, 128>}, {transform_indices = @transform_3, window_bounds = array<i64: 1, 18, 128>}]} {
    %cst = arith.constant 0.000000e+00 : f32
    %0 = vector.broadcast %cst : f32 to vector<18x128xf32>
    %c0 = arith.constant 0 : index
    %c0_0 = arith.constant 0 : index
    %c0_1 = arith.constant 0 : index
    %1 = vector.load %arg1[%c0, %c0_0, %c0_1] : memref<1x42x128xbf16, #tpu.memory_space<vmem>>, vector<1x18x128xbf16>
    %2 = vector.shape_cast %1 : vector<1x18x128xbf16> to vector<18x128xbf16>
    %c0_2 = arith.constant 0 : index
    %c0_3 = arith.constant 0 : index
    %c0_4 = arith.constant 0 : index
    %c0_5 = arith.constant 0 : index
    %3 = vector.load %arg2[%c0_2, %c0_3, %c0_4, %c0_5] : memref<4x4x128x128xbf16, #tpu.memory_space<vmem>>, vector<1x1x128x128xbf16>
    %4 = vector.shape_cast %3 : vector<1x1x128x128xbf16> to vector<128x128xbf16>
    %cst_6 = arith.constant dense<0.000000e+00> : vector<18x128xf32>
    %5 = tpu.matmul %2, %4, %cst_6 {dimension_numbers = #tpu.dot_dimension_numbers<[1], [0], [0], [1], [0, 0, 1, 1], [], []>} : vector<18x128xbf16>, vector<128x128xbf16>, vector<18x128xf32> -> vector<18x128xf32>
    %6 = arith.addf %0, %5 : vector<18x128xf32>
    %c0_7 = arith.constant 0 : index
    %c1 = arith.constant 1 : index
    %c0_8 = arith.constant 0 : index
    %7 = vector.load %arg1[%c0_7, %c1, %c0_8] : memref<1x42x128xbf16, #tpu.memory_space<vmem>>, vector<1x18x128xbf16>
    %8 = vector.shape_cast %7 : vector<1x18x128xbf16> to vector<18x128xbf16>
    %c0_9 = arith.constant 0 : index
    %c1_10 = arith.constant 1 : index
    %c0_11 = arith.constant 0 : index
    %c0_12 = arith.constant 0 : index
    %9 = vector.load %arg2[%c0_9, %c1_10, %c0_11, %c0_12] : memref<4x4x128x128xbf16, #tpu.memory_space<vmem>>, vector<1x1x128x128xbf16>
    %10 = vector.shape_cast %9 : vector<1x1x128x128xbf16> to vector<128x128xbf16>
    %cst_13 = arith.constant dense<0.000000e+00> : vector<18x128xf32>
    %11 = tpu.matmul %8, %10, %cst_13 {dimension_numbers = #tpu.dot_dimension_numbers<[1], [0], [0], [1], [0, 0, 1, 1], [], []>} : vector<18x128xbf16>, vector<128x128xbf16>, vector<18x128xf32> -> vector<18x128xf32>
    %12 = arith.addf %6, %11 : vector<18x128xf32>
    %c0_14 = arith.constant 0 : index
    %c2 = arith.constant 2 : index
    %c0_15 = arith.constant 0 : index
    %13 = vector.load %arg1[%c0_14, %c2, %c0_15] : memref<1x42x128xbf16, #tpu.memory_space<vmem>>, vector<1x18x128xbf16>
    %14 = vector.shape_cast %13 : vector<1x18x128xbf16> to vector<18x128xbf16>
    %c0_16 = arith.constant 0 : index
    %c2_17 = arith.constant 2 : index
    %c0_18 = arith.constant 0 : index
    %c0_19 = arith.constant 0 : index
    %15 = vector.load %arg2[%c0_16, %c2_17, %c0_18, %c0_19] : memref<4x4x128x128xbf16, #tpu.memory_space<vmem>>, vector<1x1x128x128xbf16>
    %16 = vector.shape_cast %15 : vector<1x1x128x128xbf16> to vector<128x128xbf16>
    %cst_20 = arith.constant dense<0.000000e+00> : vector<18x128xf32>
    %17 = tpu.matmul %14, %16, %cst_20 {dimension_numbers = #tpu.dot_dimension_numbers<[1], [0], [0], [1], [0, 0, 1, 1], [], []>} : vector<18x128xbf16>, vector<128x128xbf16>, vector<18x128xf32> -> vector<18x128xf32>
    %18 = arith.addf %12, %17 : vector<18x128xf32>
    %c0_21 = arith.constant 0 : index
    %c3 = arith.constant 3 : index
    %c0_22 = arith.constant 0 : index
    %19 = vector.load %arg1[%c0_21, %c3, %c0_22] : memref<1x42x128xbf16, #tpu.memory_space<vmem>>, vector<1x18x128xbf16>
    %20 = vector.shape_cast %19 : vector<1x18x128xbf16> to vector<18x128xbf16>
    %c0_23 = arith.constant 0 : index
    %c3_24 = arith.constant 3 : index
    %c0_25 = arith.constant 0 : index
    %c0_26 = arith.constant 0 : index
    %21 = vector.load %arg2[%c0_23, %c3_24, %c0_25, %c0_26] : memref<4x4x128x128xbf16, #tpu.memory_space<vmem>>, vector<1x1x128x128xbf16>
    %22 = vector.shape_cast %21 : vector<1x1x128x128xbf16> to vector<128x128xbf16>
    %cst_27 = arith.constant dense<0.000000e+00> : vector<18x128xf32>
    %23 = tpu.matmul %20, %22, %cst_27 {dimension_numbers = #tpu.dot_dimension_numbers<[1], [0], [0], [1], [0, 0, 1, 1], [], []>} : vector<18x128xbf16>, vector<128x128xbf16>, vector<18x128xf32> -> vector<18x128xf32>
    %24 = arith.addf %18, %23 : vector<18x128xf32>
    %c0_28 = arith.constant 0 : index
    %c6 = arith.constant 6 : index
    %c0_29 = arith.constant 0 : index
    %25 = vector.load %arg1[%c0_28, %c6, %c0_29] : memref<1x42x128xbf16, #tpu.memory_space<vmem>>, vector<1x18x128xbf16>
    %26 = vector.shape_cast %25 : vector<1x18x128xbf16> to vector<18x128xbf16>
    %c1_30 = arith.constant 1 : index
    %c0_31 = arith.constant 0 : index
    %c0_32 = arith.constant 0 : index
    %c0_33 = arith.constant 0 : index
    %27 = vector.load %arg2[%c1_30, %c0_31, %c0_32, %c0_33] : memref<4x4x128x128xbf16, #tpu.memory_space<vmem>>, vector<1x1x128x128xbf16>
    %28 = vector.shape_cast %27 : vector<1x1x128x128xbf16> to vector<128x128xbf16>
    %cst_34 = arith.constant dense<0.000000e+00> : vector<18x128xf32>
    %29 = tpu.matmul %26, %28, %cst_34 {dimension_numbers = #tpu.dot_dimension_numbers<[1], [0], [0], [1], [0, 0, 1, 1], [], []>} : vector<18x128xbf16>, vector<128x128xbf16>, vector<18x128xf32> -> vector<18x128xf32>
    %30 = arith.addf %24, %29 : vector<18x128xf32>
    %c0_35 = arith.constant 0 : index
    %c7 = arith.constant 7 : index
    %c0_36 = arith.constant 0 : index
    %31 = vector.load %arg1[%c0_35, %c7, %c0_36] : memref<1x42x128xbf16, #tpu.memory_space<vmem>>, vector<1x18x128xbf16>
    %32 = vector.shape_cast %31 : vector<1x18x128xbf16> to vector<18x128xbf16>
    %c1_37 = arith.constant 1 : index
    %c1_38 = arith.constant 1 : index
    %c0_39 = arith.constant 0 : index
    %c0_40 = arith.constant 0 : index
    %33 = vector.load %arg2[%c1_37, %c1_38, %c0_39, %c0_40] : memref<4x4x128x128xbf16, #tpu.memory_space<vmem>>, vector<1x1x128x128xbf16>
    %34 = vector.shape_cast %33 : vector<1x1x128x128xbf16> to vector<128x128xbf16>
    %cst_41 = arith.constant dense<0.000000e+00> : vector<18x128xf32>
    %35 = tpu.matmul %32, %34, %cst_41 {dimension_numbers = #tpu.dot_dimension_numbers<[1], [0], [0], [1], [0, 0, 1, 1], [], []>} : vector<18x128xbf16>, vector<128x128xbf16>, vector<18x128xf32> -> vector<18x128xf32>
    %36 = arith.addf %30, %35 : vector<18x128xf32>
    %c0_42 = arith.constant 0 : index
    %c8 = arith.constant 8 : index
    %c0_43 = arith.constant 0 : index
    %37 = vector.load %arg1[%c0_42, %c8, %c0_43] : memref<1x42x128xbf16, #tpu.memory_space<vmem>>, vector<1x18x128xbf16>
    %38 = vector.shape_cast %37 : vector<1x18x128xbf16> to vector<18x128xbf16>
    %c1_44 = arith.constant 1 : index
    %c2_45 = arith.constant 2 : index
    %c0_46 = arith.constant 0 : index
    %c0_47 = arith.constant 0 : index
    %39 = vector.load %arg2[%c1_44, %c2_45, %c0_46, %c0_47] : memref<4x4x128x128xbf16, #tpu.memory_space<vmem>>, vector<1x1x128x128xbf16>
    %40 = vector.shape_cast %39 : vector<1x1x128x128xbf16> to vector<128x128xbf16>
    %cst_48 = arith.constant dense<0.000000e+00> : vector<18x128xf32>
    %41 = tpu.matmul %38, %40, %cst_48 {dimension_numbers = #tpu.dot_dimension_numbers<[1], [0], [0], [1], [0, 0, 1, 1], [], []>} : vector<18x128xbf16>, vector<128x128xbf16>, vector<18x128xf32> -> vector<18x128xf32>
    %42 = arith.addf %36, %41 : vector<18x128xf32>
    %c0_49 = arith.constant 0 : index
    %c9 = arith.constant 9 : index
    %c0_50 = arith.constant 0 : index
    %43 = vector.load %arg1[%c0_49, %c9, %c0_50] : memref<1x42x128xbf16, #tpu.memory_space<vmem>>, vector<1x18x128xbf16>
    %44 = vector.shape_cast %43 : vector<1x18x128xbf16> to vector<18x128xbf16>
    %c1_51 = arith.constant 1 : index
    %c3_52 = arith.constant 3 : index
    %c0_53 = arith.constant 0 : index
    %c0_54 = arith.constant 0 : index
    %45 = vector.load %arg2[%c1_51, %c3_52, %c0_53, %c0_54] : memref<4x4x128x128xbf16, #tpu.memory_space<vmem>>, vector<1x1x128x128xbf16>
    %46 = vector.shape_cast %45 : vector<1x1x128x128xbf16> to vector<128x128xbf16>
    %cst_55 = arith.constant dense<0.000000e+00> : vector<18x128xf32>
    %47 = tpu.matmul %44, %46, %cst_55 {dimension_numbers = #tpu.dot_dimension_numbers<[1], [0], [0], [1], [0, 0, 1, 1], [], []>} : vector<18x128xbf16>, vector<128x128xbf16>, vector<18x128xf32> -> vector<18x128xf32>
    %48 = arith.addf %42, %47 : vector<18x128xf32>
    %c0_56 = arith.constant 0 : index
    %c12 = arith.constant 12 : index
    %c0_57 = arith.constant 0 : index
    %49 = vector.load %arg1[%c0_56, %c12, %c0_57] : memref<1x42x128xbf16, #tpu.memory_space<vmem>>, vector<1x18x128xbf16>
    %50 = vector.shape_cast %49 : vector<1x18x128xbf16> to vector<18x128xbf16>
    %c2_58 = arith.constant 2 : index
    %c0_59 = arith.constant 0 : index
    %c0_60 = arith.constant 0 : index
    %c0_61 = arith.constant 0 : index
    %51 = vector.load %arg2[%c2_58, %c0_59, %c0_60, %c0_61] : memref<4x4x128x128xbf16, #tpu.memory_space<vmem>>, vector<1x1x128x128xbf16>
    %52 = vector.shape_cast %51 : vector<1x1x128x128xbf16> to vector<128x128xbf16>
    %cst_62 = arith.constant dense<0.000000e+00> : vector<18x128xf32>
    %53 = tpu.matmul %50, %52, %cst_62 {dimension_numbers = #tpu.dot_dimension_numbers<[1], [0], [0], [1], [0, 0, 1, 1], [], []>} : vector<18x128xbf16>, vector<128x128xbf16>, vector<18x128xf32> -> vector<18x128xf32>
    %54 = arith.addf %48, %53 : vector<18x128xf32>
    %c0_63 = arith.constant 0 : index
    %c13 = arith.constant 13 : index
    %c0_64 = arith.constant 0 : index
    %55 = vector.load %arg1[%c0_63, %c13, %c0_64] : memref<1x42x128xbf16, #tpu.memory_space<vmem>>, vector<1x18x128xbf16>
    %56 = vector.shape_cast %55 : vector<1x18x128xbf16> to vector<18x128xbf16>
    %c2_65 = arith.constant 2 : index
    %c1_66 = arith.constant 1 : index
    %c0_67 = arith.constant 0 : index
    %c0_68 = arith.constant 0 : index
    %57 = vector.load %arg2[%c2_65, %c1_66, %c0_67, %c0_68] : memref<4x4x128x128xbf16, #tpu.memory_space<vmem>>, vector<1x1x128x128xbf16>
    %58 = vector.shape_cast %57 : vector<1x1x128x128xbf16> to vector<128x128xbf16>
    %cst_69 = arith.constant dense<0.000000e+00> : vector<18x128xf32>
    %59 = tpu.matmul %56, %58, %cst_69 {dimension_numbers = #tpu.dot_dimension_numbers<[1], [0], [0], [1], [0, 0, 1, 1], [], []>} : vector<18x128xbf16>, vector<128x128xbf16>, vector<18x128xf32> -> vector<18x128xf32>
    %60 = arith.addf %54, %59 : vector<18x128xf32>
    %c0_70 = arith.constant 0 : index
    %c14 = arith.constant 14 : index
    %c0_71 = arith.constant 0 : index
    %61 = vector.load %arg1[%c0_70, %c14, %c0_71] : memref<1x42x128xbf16, #tpu.memory_space<vmem>>, vector<1x18x128xbf16>
    %62 = vector.shape_cast %61 : vector<1x18x128xbf16> to vector<18x128xbf16>
    %c2_72 = arith.constant 2 : index
    %c2_73 = arith.constant 2 : index
    %c0_74 = arith.constant 0 : index
    %c0_75 = arith.constant 0 : index
    %63 = vector.load %arg2[%c2_72, %c2_73, %c0_74, %c0_75] : memref<4x4x128x128xbf16, #tpu.memory_space<vmem>>, vector<1x1x128x128xbf16>
    %64 = vector.shape_cast %63 : vector<1x1x128x128xbf16> to vector<128x128xbf16>
    %cst_76 = arith.constant dense<0.000000e+00> : vector<18x128xf32>
    %65 = tpu.matmul %62, %64, %cst_76 {dimension_numbers = #tpu.dot_dimension_numbers<[1], [0], [0], [1], [0, 0, 1, 1], [], []>} : vector<18x128xbf16>, vector<128x128xbf16>, vector<18x128xf32> -> vector<18x128xf32>
    %66 = arith.addf %60, %65 : vector<18x128xf32>
    %c0_77 = arith.constant 0 : index
    %c15 = arith.constant 15 : index
    %c0_78 = arith.constant 0 : index
    %67 = vector.load %arg1[%c0_77, %c15, %c0_78] : memref<1x42x128xbf16, #tpu.memory_space<vmem>>, vector<1x18x128xbf16>
    %68 = vector.shape_cast %67 : vector<1x18x128xbf16> to vector<18x128xbf16>
    %c2_79 = arith.constant 2 : index
    %c3_80 = arith.constant 3 : index
    %c0_81 = arith.constant 0 : index
    %c0_82 = arith.constant 0 : index
    %69 = vector.load %arg2[%c2_79, %c3_80, %c0_81, %c0_82] : memref<4x4x128x128xbf16, #tpu.memory_space<vmem>>, vector<1x1x128x128xbf16>
    %70 = vector.shape_cast %69 : vector<1x1x128x128xbf16> to vector<128x128xbf16>
    %cst_83 = arith.constant dense<0.000000e+00> : vector<18x128xf32>
    %71 = tpu.matmul %68, %70, %cst_83 {dimension_numbers = #tpu.dot_dimension_numbers<[1], [0], [0], [1], [0, 0, 1, 1], [], []>} : vector<18x128xbf16>, vector<128x128xbf16>, vector<18x128xf32> -> vector<18x128xf32>
    %72 = arith.addf %66, %71 : vector<18x128xf32>
    %c0_84 = arith.constant 0 : index
    %c18 = arith.constant 18 : index
    %c0_85 = arith.constant 0 : index
    %73 = vector.load %arg1[%c0_84, %c18, %c0_85] : memref<1x42x128xbf16, #tpu.memory_space<vmem>>, vector<1x18x128xbf16>
    %74 = vector.shape_cast %73 : vector<1x18x128xbf16> to vector<18x128xbf16>
    %c3_86 = arith.constant 3 : index
    %c0_87 = arith.constant 0 : index
    %c0_88 = arith.constant 0 : index
    %c0_89 = arith.constant 0 : index
    %75 = vector.load %arg2[%c3_86, %c0_87, %c0_88, %c0_89] : memref<4x4x128x128xbf16, #tpu.memory_space<vmem>>, vector<1x1x128x128xbf16>
    %76 = vector.shape_cast %75 : vector<1x1x128x128xbf16> to vector<128x128xbf16>
    %cst_90 = arith.constant dense<0.000000e+00> : vector<18x128xf32>
    %77 = tpu.matmul %74, %76, %cst_90 {dimension_numbers = #tpu.dot_dimension_numbers<[1], [0], [0], [1], [0, 0, 1, 1], [], []>} : vector<18x128xbf16>, vector<128x128xbf16>, vector<18x128xf32> -> vector<18x128xf32>
    %78 = arith.addf %72, %77 : vector<18x128xf32>
    %c0_91 = arith.constant 0 : index
    %c19 = arith.constant 19 : index
    %c0_92 = arith.constant 0 : index
    %79 = vector.load %arg1[%c0_91, %c19, %c0_92] : memref<1x42x128xbf16, #tpu.memory_space<vmem>>, vector<1x18x128xbf16>
    %80 = vector.shape_cast %79 : vector<1x18x128xbf16> to vector<18x128xbf16>
    %c3_93 = arith.constant 3 : index
    %c1_94 = arith.constant 1 : index
    %c0_95 = arith.constant 0 : index
    %c0_96 = arith.constant 0 : index
    %81 = vector.load %arg2[%c3_93, %c1_94, %c0_95, %c0_96] : memref<4x4x128x128xbf16, #tpu.memory_space<vmem>>, vector<1x1x128x128xbf16>
    %82 = vector.shape_cast %81 : vector<1x1x128x128xbf16> to vector<128x128xbf16>
    %cst_97 = arith.constant dense<0.000000e+00> : vector<18x128xf32>
    %83 = tpu.matmul %80, %82, %cst_97 {dimension_numbers = #tpu.dot_dimension_numbers<[1], [0], [0], [1], [0, 0, 1, 1], [], []>} : vector<18x128xbf16>, vector<128x128xbf16>, vector<18x128xf32> -> vector<18x128xf32>
    %84 = arith.addf %78, %83 : vector<18x128xf32>
    %c0_98 = arith.constant 0 : index
    %c20 = arith.constant 20 : index
    %c0_99 = arith.constant 0 : index
    %85 = vector.load %arg1[%c0_98, %c20, %c0_99] : memref<1x42x128xbf16, #tpu.memory_space<vmem>>, vector<1x18x128xbf16>
    %86 = vector.shape_cast %85 : vector<1x18x128xbf16> to vector<18x128xbf16>
    %c3_100 = arith.constant 3 : index
    %c2_101 = arith.constant 2 : index
    %c0_102 = arith.constant 0 : index
    %c0_103 = arith.constant 0 : index
    %87 = vector.load %arg2[%c3_100, %c2_101, %c0_102, %c0_103] : memref<4x4x128x128xbf16, #tpu.memory_space<vmem>>, vector<1x1x128x128xbf16>
    %88 = vector.shape_cast %87 : vector<1x1x128x128xbf16> to vector<128x128xbf16>
    %cst_104 = arith.constant dense<0.000000e+00> : vector<18x128xf32>
    %89 = tpu.matmul %86, %88, %cst_104 {dimension_numbers = #tpu.dot_dimension_numbers<[1], [0], [0], [1], [0, 0, 1, 1], [], []>} : vector<18x128xbf16>, vector<128x128xbf16>, vector<18x128xf32> -> vector<18x128xf32>
    %90 = arith.addf %84, %89 : vector<18x128xf32>
    %c0_105 = arith.constant 0 : index
    %c21 = arith.constant 21 : index
    %c0_106 = arith.constant 0 : index
    %91 = vector.load %arg1[%c0_105, %c21, %c0_106] : memref<1x42x128xbf16, #tpu.memory_space<vmem>>, vector<1x18x128xbf16>
    %92 = vector.shape_cast %91 : vector<1x18x128xbf16> to vector<18x128xbf16>
    %c3_107 = arith.constant 3 : index
    %c3_108 = arith.constant 3 : index
    %c0_109 = arith.constant 0 : index
    %c0_110 = arith.constant 0 : index
    %93 = vector.load %arg2[%c3_107, %c3_108, %c0_109, %c0_110] : memref<4x4x128x128xbf16, #tpu.memory_space<vmem>>, vector<1x1x128x128xbf16>
    %94 = vector.shape_cast %93 : vector<1x1x128x128xbf16> to vector<128x128xbf16>
    %cst_111 = arith.constant dense<0.000000e+00> : vector<18x128xf32>
    %95 = tpu.matmul %92, %94, %cst_111 {dimension_numbers = #tpu.dot_dimension_numbers<[1], [0], [0], [1], [0, 0, 1, 1], [], []>} : vector<18x128xbf16>, vector<128x128xbf16>, vector<18x128xf32> -> vector<18x128xf32>
    %96 = arith.addf %90, %95 : vector<18x128xf32>
    %c0_112 = arith.constant 0 : index
    %c0_113 = arith.constant 0 : index
    %97 = vector.load %arg3[%c0_112, %c0_113] : memref<1x128xf32, #tpu.memory_space<vmem>>, vector<1x128xf32>
    %98 = vector.broadcast %97 : vector<1x128xf32> to vector<18x128xf32>
    %99 = arith.addf %96, %98 : vector<18x128xf32>
    %cst_114 = arith.constant 0.000000e+00 : f32
    %100 = vector.broadcast %cst_114 : f32 to vector<18x128xf32>
    %101 = arith.subf %100, %99 : vector<18x128xf32>
    %102 = math.exp %101 : vector<18x128xf32>
    %cst_115 = arith.constant 1.000000e+00 : f32
    %103 = vector.broadcast %cst_115 : f32 to vector<18x128xf32>
    %104 = arith.addf %103, %102 : vector<18x128xf32>
    %105 = tpu.reciprocal %104 {approx = true} : vector<18x128xf32> -> vector<18x128xf32>
    %cst_116 = arith.constant 0.000000e+00 : f32
    %cst_117 = arith.constant 1.000000e+00 : f32
    %106 = vector.broadcast %cst_116 : f32 to vector<18x128xf32>
    %107 = arith.maximumf %106, %105 : vector<18x128xf32>
    %108 = vector.broadcast %cst_117 : f32 to vector<18x128xf32>
    %109 = arith.minimumf %108, %107 : vector<18x128xf32>
    %110 = arith.truncf %109 : vector<18x128xf32> to vector<18x128xbf16>
    %c0_118 = arith.constant 0 : index
    %c0_119 = arith.constant 0 : index
    %c0_120 = arith.constant 0 : index
    %111 = vector.load %arg4[%c0_118, %c0_119, %c0_120] : memref<1x18x128xbf16, #tpu.memory_space<vmem>>, vector<1x18x128xbf16>
    %112 = vector.shape_cast %111 : vector<1x18x128xbf16> to vector<18x128xbf16>
    %113 = vector.shape_cast %110 : vector<18x128xbf16> to vector<1x18x128xbf16>
    tpu.vector_store %arg4[%c0_118, %c0_119, %c0_120], %113 {strides = array<i32>} : memref<1x18x128xbf16, #tpu.memory_space<vmem>>, vector<1x18x128xbf16>,
    return
  }
  func.func @transform_0(%arg0: i32) -> (i32, i32, i32) {
    %c0_i32 = arith.constant 0 : i32
    %c0_i32_0 = arith.constant 0 : i32
    %c0_i32_1 = arith.constant 0 : i32
    return %arg0, %c0_i32, %c0_i32_0 : i32, i32, i32
  }
  func.func @transform_1(%arg0: i32) -> (i32, i32, i32, i32) {
    %c0_i32 = arith.constant 0 : i32
    %c0_i32_0 = arith.constant 0 : i32
    %c0_i32_1 = arith.constant 0 : i32
    %c0_i32_2 = arith.constant 0 : i32
    %c0_i32_3 = arith.constant 0 : i32
    return %c0_i32, %c0_i32_0, %c0_i32_1, %c0_i32_2 : i32, i32, i32, i32
  }
  func.func @transform_2(%arg0: i32) -> (i32, i32) {
    %c0_i32 = arith.constant 0 : i32
    %c0_i32_0 = arith.constant 0 : i32
    %c0_i32_1 = arith.constant 0 : i32
    return %c0_i32, %c0_i32_0 : i32, i32
  }
  func.func @transform_3(%arg0: i32) -> (i32, i32, i32) {
    %c0_i32 = arith.constant 0 : i32
    %c0_i32_0 = arith.constant 0 : i32
    %c0_i32_1 = arith.constant 0 : i32
    return %arg0, %c0_i32, %c0_i32_0 : i32, i32, i32
  }
}

</mosaic_0001>

<llo_original>
// kernel: discriminator_forward.4
$region0: #{discriminator_forward.4}
  #allocation0 [shape = 'u32[]', space=smem, size = 0x4, offset = 0x4, fixed_abs, tag = 'smem constant byte address 0x4 - core index']
  #allocation1 [shape = 'u32[72,128]{1,0:T(1,128)}', space=vmem, size = 0x9000, scoped, tag = 'internal scratch']
  %s0 = inlined_call_operand.vmem [shape: bf16[128,32], index: 0, kind: input, shape index: {}]
  %s1 = inlined_call_operand.vmem [shape: bf16[32,64], index: 1, kind: input, shape index: {}]
  %s2 = inlined_call_operand.vmem [shape: f32[1,64], index: 2, kind: input, shape index: {}]
  %s3 = inlined_call_operand.vmem [shape: bf16[128,64], index: 3, kind: output, shape index: {}]
  %s4 = sld [smem:[#allocation0]]
  $region22: #{discriminator_forward.4} parent=0
    _
  %s6 = ssub.s32 1, %s4
  %s7 = scalar_select 0, %s6, %s4
  // Predicated region
  $region2: #{discriminator_forward.4} parent=0 // pred_check
    _
  $region3: #{discriminator_forward.4} parent=0 // pred_check_branch
    %9 = sbr.rel (0) target = $region5
  $region4: #{discriminator_forward.4} parent=0 // pred_region
    _
  $region5: #{discriminator_forward.4} parent=0 // pred_fallthru
    _
  // Predicated region
  $region6: #{discriminator_forward.4} parent=0 // pred_check
    _
  $region7: #{discriminator_forward.4} parent=0 // pred_check_branch
    %11 = sbr.rel (0) target = $region9
  $region8: #{discriminator_forward.4} parent=0 // pred_region
    _
  $region9: #{discriminator_forward.4} parent=0 // pred_fallthru
    _
  // Predicated region
  $region10: #{discriminator_forward.4} parent=0 // pred_check
    _
  $region11: #{discriminator_forward.4} parent=0 // pred_check_branch
    %13 = sbr.rel (0) target = $region13
  $region12: #{discriminator_forward.4} parent=0 // pred_region
    _
  $region13: #{discriminator_forward.4} parent=0 // pred_fallthru
    _
  %v15 = vld [vmem:[%s0] sm:$0xf]
  %v16 = vld [vmem:[%s0 + $0x4] sm:$0xf]
  %v17 = vld [vmem:[%s0 + $0x8] sm:$0xf]
  %v18 = vld [vmem:[%s0 + $0xc] sm:$0xf]
  %v19 = vld [vmem:[%s0 + $0x10] sm:$0xf]
  %v20 = vld [vmem:[%s0 + $0x14] sm:$0xf]
  %v21 = vld [vmem:[%s0 + $0x18] sm:$0xf]
  %v22 = vld [vmem:[%s0 + $0x1c] sm:$0xf]
  %v23 = vld [vmem:[%s0 + $0x20] sm:$0xf]
  %v24 = vld [vmem:[%s0 + $0x24] sm:$0xf]
  %v25 = vld [vmem:[%s0 + $0x28] sm:$0xf]
  %v26 = vld [vmem:[%s0 + $0x2c] sm:$0xf]
  %v27 = vld [vmem:[%s0 + $0x30] sm:$0xf]
  %v28 = vld [vmem:[%s0 + $0x34] sm:$0xf]
  %v29 = vld [vmem:[%s0 + $0x38] sm:$0xf]
  %v30 = vld [vmem:[%s0 + $0x3c] sm:$0xf]
  %v31 = vld [vmem:[%s1] sm:$0xf]
  %v32 = vld [vmem:[%s1 + $0x4] sm:$0xf]
  %v33 = vld [vmem:[%s1 + $0x8] sm:$0xf]
  %v34 = vld [vmem:[%s1 + $0xc] sm:$0xf]
  %v35 = vld [vmem:[%s2] sm:$0x1]
  %v37 = vperm.slane %v35, 0
  %v55 = vunpack.c.l.b16 %v15
  %v56 = vunpack.c.l.b16 %v16
  %v57 = vunpack.c.l.b16 %v17
  %v58 = vunpack.c.l.b16 %v18
  %v59 = vunpack.c.l.b16 %v19
  %v60 = vunpack.c.l.b16 %v20
  %v61 = vunpack.c.l.b16 %v21
  %v62 = vunpack.c.l.b16 %v22
  %v63 = vunpack.c.l.b16 %v23
  %v64 = vunpack.c.l.b16 %v24
  %v65 = vunpack.c.l.b16 %v25
  %v66 = vunpack.c.l.b16 %v26
  %v67 = vunpack.c.l.b16 %v27
  %v68 = vunpack.c.l.b16 %v28
  %v69 = vunpack.c.l.b16 %v29
  %v70 = vunpack.c.l.b16 %v30
  %v71 = vpack.c.b16 %v56, %v55
  %v72 = vpack.c.b16 %v58, %v57
  %v73 = vpack.c.b16 %v60, %v59
  %v74 = vpack.c.b16 %v62, %v61
  %v75 = vpack.c.b16 %v64, %v63
  %v76 = vpack.c.b16 %v66, %v65
  %v77 = vpack.c.b16 %v68, %v67
  %v78 = vpack.c.b16 %v70, %v69
  %v83 = vunpack.c.l.b16 %v31
  %v84 = vunpack.c.l.b16 %v32
  %v85 = vunpack.c.l.b16 %v33
  %v86 = vunpack.c.l.b16 %v34
  %v87 = vpack.c.b16 %v84, %v83
  %v88 = vpack.c.b16 %v86, %v85
  %vm91 = vcmask 261120
  %v93 = vsel %vm91, %v71, 0
  %v96 = vsel %vm91, %v72, 0
  %v99 = vsel %vm91, %v73, 0
  %v102 = vsel %vm91, %v74, 0
  %v105 = vsel %vm91, %v75, 0
  %v108 = vsel %vm91, %v76, 0
  %v111 = vsel %vm91, %v77, 0
  %v114 = vsel %vm91, %v78, 0
  %116 = vmatpush.bf16.msra.mxu0 0
  %117 = vmatpush.bf16.msra.mxu0 0
  %118 = vmatpush.bf16.msra.mxu0 0
  %119 = vmatpush.bf16.msra.mxu0 0
  %120 = vmatpush.bf16.msra.mxu0 0
  %121 = vmatpush.bf16.msra.mxu0 0
  %122 = vmatpush.bf16.msra.mxu0 %v88
  %123 = vmatpush.bf16.msra.mxu0 %v87
  %124 = vmatmul.bf16.gmra.mxu0 %v93
  %v125 = vpop.f32.mrf.mxu0
  %v126 = vadd.f32 %v37, %v125
  %v127 = vpop.f32.mrf.mxu0
  %v128 = vadd.f32 %v37, %v127
  %129 = vmatmul.bf16.gmra.mxu0 %v96
  %v130 = vpop.f32.mrf.mxu0
  %v131 = vadd.f32 %v37, %v130
  %v132 = vpop.f32.mrf.mxu0
  %v133 = vadd.f32 %v37, %v132
  %134 = vmatmul.bf16.gmra.mxu0 %v99
  %v135 = vpop.f32.mrf.mxu0
  %v136 = vadd.f32 %v37, %v135
  %v137 = vpop.f32.mrf.mxu0
  %v138 = vadd.f32 %v37, %v137
  %139 = vmatmul.bf16.gmra.mxu0 %v102
  %v140 = vpop.f32.mrf.mxu0
  %v141 = vadd.f32 %v37, %v140
  %v142 = vpop.f32.mrf.mxu0
  %v143 = vadd.f32 %v37, %v142
  %144 = vmatmul.bf16.gmra.mxu0 %v105
  %v145 = vpop.f32.mrf.mxu0
  %v146 = vadd.f32 %v37, %v145
  %v147 = vpop.f32.mrf.mxu0
  %v148 = vadd.f32 %v37, %v147
  %149 = vmatmul.bf16.gmra.mxu0 %v108
  %v150 = vpop.f32.mrf.mxu0
  %v151 = vadd.f32 %v37, %v150
  %v152 = vpop.f32.mrf.mxu0
  %v153 = vadd.f32 %v37, %v152
  %154 = vmatmul.bf16.gmra.mxu0 %v111
  %v155 = vpop.f32.mrf.mxu0
  %v156 = vadd.f32 %v37, %v155
  %v157 = vpop.f32.mrf.mxu0
  %v158 = vadd.f32 %v37, %v157
  %159 = vmatmul.bf16.gmra.mxu0 %v114
  %v160 = vpop.f32.mrf.mxu0
  %v161 = vadd.f32 %v37, %v160
  %v162 = vpop.f32.mrf.mxu0
  %v163 = vadd.f32 %v37, %v162
  %164 = vdwg.mxu0
  %vm165 = vcmp.gt.f32.partialorder %v126, 0.0
  %vm166 = vcmp.gt.f32.partialorder %v128, 0.0
  %vm167 = vcmp.gt.f32.partialorder %v131, 0.0
  %vm168 = vcmp.gt.f32.partialorder %v133, 0.0
  %vm169 = vcmp.gt.f32.partialorder %v136, 0.0
  %vm170 = vcmp.gt.f32.partialorder %v138, 0.0
  %vm171 = vcmp.gt.f32.partialorder %v141, 0.0
  %vm172 = vcmp.gt.f32.partialorder %v143, 0.0
  %vm173 = vcmp.gt.f32.partialorder %v146, 0.0
  %vm174 = vcmp.gt.f32.partialorder %v148, 0.0
  %vm175 = vcmp.gt.f32.partialorder %v151, 0.0
  %vm176 = vcmp.gt.f32.partialorder %v153, 0.0
  %vm177 = vcmp.gt.f32.partialorder %v156, 0.0
  %vm178 = vcmp.gt.f32.partialorder %v158, 0.0
  %vm179 = vcmp.gt.f32.partialorder %v161, 0.0
  %vm180 = vcmp.gt.f32.partialorder %v163, 0.0
  %v181 = vmul.f32 %v126, 0.2
  %v182 = vmul.f32 %v128, 0.2
  %v183 = vmul.f32 %v131, 0.2
  %v184 = vmul.f32 %v133, 0.2
  %v185 = vmul.f32 %v136, 0.2
  %v186 = vmul.f32 %v138, 0.2
  %v187 = vmul.f32 %v141, 0.2
  %v188 = vmul.f32 %v143, 0.2
  %v189 = vmul.f32 %v146, 0.2
  %v190 = vmul.f32 %v148, 0.2
  %v191 = vmul.f32 %v151, 0.2
  %v192 = vmul.f32 %v153, 0.2
  %v193 = vmul.f32 %v156, 0.2
  %v194 = vmul.f32 %v158, 0.2
  %v195 = vmul.f32 %v161, 0.2
  %v196 = vmul.f32 %v163, 0.2
  %v197 = vsel %vm165, %v126, %v181
  %v198 = vsel %vm166, %v128, %v182
  %v199 = vsel %vm167, %v131, %v183
  %v200 = vsel %vm168, %v133, %v184
  %v201 = vsel %vm169, %v136, %v185
  %v202 = vsel %vm170, %v138, %v186
  %v203 = vsel %vm171, %v141, %v187
  %v204 = vsel %vm172, %v143, %v188
  %v205 = vsel %vm173, %v146, %v189
  %v206 = vsel %vm174, %v148, %v190
  %v207 = vsel %vm175, %v151, %v191
  %v208 = vsel %vm176, %v153, %v192
  %v209 = vsel %vm177, %v156, %v193
  %v210 = vsel %vm178, %v158, %v194
  %v211 = vsel %vm179, %v161, %v195
  %v212 = vsel %vm180, %v163, %v196
  %v213 = vpack.c.bf16 %v197, %v197
  %v214 = vpack.c.bf16 %v198, %v198
  %v215 = vpack.c.bf16 %v199, %v199
  %v216 = vpack.c.bf16 %v200, %v200
  %v217 = vpack.c.bf16 %v201, %v201
  %v218 = vpack.c.bf16 %v202, %v202
  %v219 = vpack.c.bf16 %v203, %v203
  %v220 = vpack.c.bf16 %v204, %v204
  %v221 = vpack.c.bf16 %v205, %v205
  %v222 = vpack.c.bf16 %v206, %v206
  %v223 = vpack.c.bf16 %v207, %v207
  %v224 = vpack.c.bf16 %v208, %v208
  %v225 = vpack.c.bf16 %v209, %v209
  %v226 = vpack.c.bf16 %v210, %v210
  %v227 = vpack.c.bf16 %v211, %v211
  %v228 = vpack.c.bf16 %v212, %v212
  %vm229 = vcmask 519168
  %230 = vst.msk [vmem:[%s3] sm:$0xf] %vm229, %v213
  %231 = vst.msk [vmem:[%s3 + $0x4] sm:$0xf] %vm229, %v214
  %232 = vst.msk [vmem:[%s3 + $0x8] sm:$0xf] %vm229, %v215
  %233 = vst.msk [vmem:[%s3 + $0xc] sm:$0xf] %vm229, %v216
  %234 = vst.msk [vmem:[%s3 + $0x10] sm:$0xf] %vm229, %v217
  %235 = vst.msk [vmem:[%s3 + $0x14] sm:$0xf] %vm229, %v218
  %236 = vst.msk [vmem:[%s3 + $0x18] sm:$0xf] %vm229, %v219
  %237 = vst.msk [vmem:[%s3 + $0x1c] sm:$0xf] %vm229, %v220
  %238 = vst.msk [vmem:[%s3 + $0x20] sm:$0xf] %vm229, %v221
  %239 = vst.msk [vmem:[%s3 + $0x24] sm:$0xf] %vm229, %v222
  %240 = vst.msk [vmem:[%s3 + $0x28] sm:$0xf] %vm229, %v223
  %241 = vst.msk [vmem:[%s3 + $0x2c] sm:$0xf] %vm229, %v224
  %242 = vst.msk [vmem:[%s3 + $0x30] sm:$0xf] %vm229, %v225
  %243 = vst.msk [vmem:[%s3 + $0x34] sm:$0xf] %vm229, %v226
  %244 = vst.msk [vmem:[%s3 + $0x38] sm:$0xf] %vm229, %v227
  %245 = vst.msk [vmem:[%s3 + $0x3c] sm:$0xf] %vm229, %v228
  // Predicated region
  $region14: #{discriminator_forward.4} parent=0 // pred_check
    _
  $region15: #{discriminator_forward.4} parent=0 // pred_check_branch
    %247 = sbr.rel (0) target = $region17
  $region16: #{discriminator_forward.4} parent=0 // pred_region
    _
  $region17: #{discriminator_forward.4} parent=0 // pred_fallthru
    _
  // Predicated region
  $region18: #{discriminator_forward.4} parent=0 // pred_check
    _
  $region19: #{discriminator_forward.4} parent=0 // pred_check_branch
    %249 = sbr.rel (0) target = $region21
  $region20: #{discriminator_forward.4} parent=0 // pred_region
    _
  $region21: #{discriminator_forward.4} parent=0 // pred_fallthru
    _

// kernel: discriminator_forward.6
$region0: #{discriminator_forward.6}
  #allocation0 [shape = 'u32[]', space=smem, size = 0x4, offset = 0x4, fixed_abs, tag = 'smem constant byte address 0x4 - core index']
  #allocation1 [shape = 'u32[72,128]{1,0:T(1,128)}', space=vmem, size = 0x9000, scoped, tag = 'internal scratch']
  %s0 = inlined_call_operand.vmem [shape: bf16[48,128], index: 0, kind: input, shape index: {}]
  %s1 = inlined_call_operand.vmem [shape: f32[1,128], index: 1, kind: input, shape index: {}]
  %s2 = inlined_call_operand.vmem [shape: f32[1,128], index: 2, kind: input, shape index: {}]
  %s3 = inlined_call_operand.vmem [shape: bf16[48,128], index: 3, kind: output, shape index: {}]
  %s4 = sld [smem:[#allocation0]]
  $region22: #{discriminator_forward.6} parent=0
    _
  %s6 = ssub.s32 1, %s4
  %s7 = scalar_select 0, %s6, %s4
  // Predicated region
  $region2: #{discriminator_forward.6} parent=0 // pred_check
    _
  $region3: #{discriminator_forward.6} parent=0 // pred_check_branch
    %9 = sbr.rel (0) target = $region5
  $region4: #{discriminator_forward.6} parent=0 // pred_region
    _
  $region5: #{discriminator_forward.6} parent=0 // pred_fallthru
    _
  // Predicated region
  $region6: #{discriminator_forward.6} parent=0 // pred_check
    _
  $region7: #{discriminator_forward.6} parent=0 // pred_check_branch
    %11 = sbr.rel (0) target = $region9
  $region8: #{discriminator_forward.6} parent=0 // pred_region
    _
  $region9: #{discriminator_forward.6} parent=0 // pred_fallthru
    _
  // Predicated region
  $region10: #{discriminator_forward.6} parent=0 // pred_check
    _
  $region11: #{discriminator_forward.6} parent=0 // pred_check_branch
    %13 = sbr.rel (0) target = $region13
  $region12: #{discriminator_forward.6} parent=0 // pred_region
    _
  $region13: #{discriminator_forward.6} parent=0 // pred_fallthru
    _
  %v14 = vld [vmem:[%s0] sm:$0xf]
  %v15 = vld [vmem:[%s0 + $0x4] sm:$0xf]
  %v16 = vld [vmem:[%s0 + $0x8] sm:$0xf]
  %v17 = vld [vmem:[%s0 + $0xc] sm:$0xf]
  %v18 = vld [vmem:[%s0 + $0x10] sm:$0xf]
  %v19 = vld [vmem:[%s0 + $0x14] sm:$0xf]
  %v20 = vunpack.c.l.bf16 %v14
  %v21 = vunpack.c.l.bf16 %v15
  %v22 = vunpack.c.l.bf16 %v16
  %v23 = vunpack.c.l.bf16 %v17
  %v24 = vunpack.c.l.bf16 %v18
  %v25 = vunpack.c.l.bf16 %v19
  %v26 = vld [vmem:[%s1] sm:$0x1]
  %v28 = vperm.slane %v26, 0
  %v30 = vmul.f32 %v20, %v28
  %v31 = vmul.f32 %v21, %v28
  %v32 = vmul.f32 %v22, %v28
  %v33 = vmul.f32 %v23, %v28
  %v34 = vmul.f32 %v24, %v28
  %v35 = vmul.f32 %v25, %v28
  %v36 = vld [vmem:[%s2] sm:$0x1]
  %v38 = vperm.slane %v36, 0
  %v40 = vadd.f32 %v30, %v38
  %v41 = vadd.f32 %v31, %v38
  %v42 = vadd.f32 %v32, %v38
  %v43 = vadd.f32 %v33, %v38
  %v44 = vadd.f32 %v34, %v38
  %v45 = vadd.f32 %v35, %v38
  %vm46 = vcmp.gt.f32.partialorder %v40, 0.0
  %vm47 = vcmp.gt.f32.partialorder %v41, 0.0
  %vm48 = vcmp.gt.f32.partialorder %v42, 0.0
  %vm49 = vcmp.gt.f32.partialorder %v43, 0.0
  %vm50 = vcmp.gt.f32.partialorder %v44, 0.0
  %vm51 = vcmp.gt.f32.partialorder %v45, 0.0
  %v52 = vmul.f32 %v40, 0.2
  %v53 = vmul.f32 %v41, 0.2
  %v54 = vmul.f32 %v42, 0.2
  %v55 = vmul.f32 %v43, 0.2
  %v56 = vmul.f32 %v44, 0.2
  %v57 = vmul.f32 %v45, 0.2
  %v58 = vsel %vm46, %v40, %v52
  %v59 = vsel %vm47, %v41, %v53
  %v60 = vsel %vm48, %v42, %v54
  %v61 = vsel %vm49, %v43, %v55
  %v62 = vsel %vm50, %v44, %v56
  %v63 = vsel %vm51, %v45, %v57
  %v64 = vpack.c.bf16 %v58, %v58
  %v65 = vpack.c.bf16 %v59, %v59
  %v66 = vpack.c.bf16 %v60, %v60
  %v67 = vpack.c.bf16 %v61, %v61
  %v68 = vpack.c.bf16 %v62, %v62
  %v69 = vpack.c.bf16 %v63, %v63
  %70 = vst [vmem:[%s3] sm:$0xf] %v64
  %71 = vst [vmem:[%s3 + $0x4] sm:$0xf] %v65
  %72 = vst [vmem:[%s3 + $0x8] sm:$0xf] %v66
  %73 = vst [vmem:[%s3 + $0xc] sm:$0xf] %v67
  %74 = vst [vmem:[%s3 + $0x10] sm:$0xf] %v68
  %75 = vst [vmem:[%s3 + $0x14] sm:$0xf] %v69
  // Predicated region
  $region14: #{discriminator_forward.6} parent=0 // pred_check
    _
  $region15: #{discriminator_forward.6} parent=0 // pred_check_branch
    %77 = sbr.rel (0) target = $region17
  $region16: #{discriminator_forward.6} parent=0 // pred_region
    _
  $region17: #{discriminator_forward.6} parent=0 // pred_fallthru
    _
  // Predicated region
  $region18: #{discriminator_forward.6} parent=0 // pred_check
    _
  $region19: #{discriminator_forward.6} parent=0 // pred_check_branch
    %79 = sbr.rel (0) target = $region21
  $region20: #{discriminator_forward.6} parent=0 // pred_region
    _
  $region21: #{discriminator_forward.6} parent=0 // pred_fallthru
    _

// kernel: discriminator_forward.5
$region0: #{discriminator_forward.5}
  #allocation0 [shape = 'u32[]', space=smem, size = 0x4, offset = 0x4, fixed_abs, tag = 'smem constant byte address 0x4 - core index']
  #allocation1 [shape = 'u32[72,128]{1,0:T(1,128)}', space=vmem, size = 0x9000, scoped, tag = 'internal scratch']
  %s0 = inlined_call_operand.vmem [shape: bf16[2,2,2,30,64], index: 0, kind: input, shape index: {}]
  %s1 = inlined_call_operand.vmem [shape: bf16[4,4,64,128], index: 1, kind: input, shape index: {}]
  %s2 = inlined_call_operand.vmem [shape: f32[1,128], index: 2, kind: input, shape index: {}]
  %s3 = inlined_call_operand.vmem [shape: f32[20,1], index: 3, kind: input, shape index: {}]
  %s4 = inlined_call_operand.vmem [shape: bf16[2,20,128], index: 4, kind: output, shape index: {0}]
  %s5 = inlined_call_operand.vmem [shape: f32[2,1,128], index: 5, kind: output, shape index: {1}]
  %s6 = inlined_call_operand.vmem [shape: f32[2,1,128], index: 6, kind: output, shape index: {2}]
  %7 = xla_tuple %s4, %s5, %s6
  %s8 = sld [smem:[#allocation0]]
  $region65: #{discriminator_forward.5} parent=0
    _
  %s10 = ssub.s32 1, %s8
  %s11 = scalar_select 0, %s10, %s8
  loop: start=0, step=1, limit=4
  $region2: #{discriminator_forward.5} parent=0 // loop_pre_header
    _
  $region3: #{discriminator_forward.5} parent=0 // loop_header
    %s13 = sphi 0, %s17
    %p14 = scmp.ge.s32.totalorder %s13, 4
    %s23 = sphi 0, %s25
    %s26 = sphi 0, %s23
    %s27 = sphi 0, %s26
    %s43 = sphi 0, %s27
    %s47 = sphi 0, %s47
    %s49 = sphi 0, %s47
    %s50 = sphi 0, %s49
    %s64 = sphi 0, %s50
    %s68 = sphi 0, %s68
    %s70 = sphi 0, %s68
    %s71 = sphi 0, %s70
    %s85 = sphi 0, %s71
    %s89 = sphi 0, %s89
    %s91 = sphi 0, %s89
    %s92 = sphi 0, %s91
    %s106 = sphi 0, %s92
    %s112 = sphi 0, %s114
    %s115 = sphi 0, %s112
    %s116 = sphi 0, %s115
    %s132 = sphi 0, %s116
    %s138 = sphi 0, %s140
    %s141 = sphi 0, %s138
    %s142 = sphi 0, %s141
    %s158 = sphi 0, %s142
    %s164 = sphi 0, %s166
    %s167 = sphi 0, %s164
    %s168 = sphi 0, %s167
    %s184 = sphi 0, %s168
  $region4: #{discriminator_forward.5} parent=0 // loop_header_branch
    %16 = sbr.rel (%p14) target = $region8
  $region5: #{discriminator_forward.5} parent=0 // loop_body
    %s18 = ssub.s32 %s13, 1
    %s19 = ssub.s32 %s13, 2
    %s20 = sadd.s32 %s13, 1
    %s21 = ssub.s32 %s13, %s20
    %p22 = scmp.eq.s32.totalorder %s21, 0
    %s24 = sadd.s32 %s23, 1
    %s25 = scalar_select %p22, %s23, %s24
    %p28 = pneg %p22
    %p29 = scmp.eq.s32.totalorder %s13, 1
    %p30 = por %p28, %p29
    %p31 = scmp.ne.s32.totalorder %s23, %s26
    %p32 = scmp.eq.s32.totalorder %s13, 0
    %p33 = por %p31, %p32
    %p34 = scmp.ne.s32.totalorder %s23, %s26
    %p35 = scmp.eq.s32.totalorder %s18, 1
    %p36 = por %p34, %p35
    %p37 = scmp.ne.s32.totalorder %s26, %s27
    %p38 = scmp.eq.s32.totalorder %s18, 0
    %p39 = por %p37, %p38
    %p40 = scmp.ne.s32.totalorder %s26, %s27
    %p41 = scmp.eq.s32.totalorder %s19, 1
    %p42 = por %p40, %p41
    %p44 = scmp.ne.s32.totalorder %s27, %s43
    %p45 = scmp.eq.s32.totalorder %s19, 0
    %p46 = por %p44, %p45
    %s48 = sadd.s32 %s47, 1
    %p51 = scmp.eq.s32.totalorder %s13, 1
    %p52 = scmp.ne.s32.totalorder %s47, %s49
    %p53 = scmp.eq.s32.totalorder %s13, 0
    %p54 = por %p52, %p53
    %p55 = scmp.ne.s32.totalorder %s47, %s49
    %p56 = scmp.eq.s32.totalorder %s18, 1
    %p57 = por %p55, %p56
    %p58 = scmp.ne.s32.totalorder %s49, %s50
    %p59 = scmp.eq.s32.totalorder %s18, 0
    %p60 = por %p58, %p59
    %p61 = scmp.ne.s32.totalorder %s49, %s50
    %p62 = scmp.eq.s32.totalorder %s19, 1
    %p63 = por %p61, %p62
    %p65 = scmp.ne.s32.totalorder %s50, %s64
    %p66 = scmp.eq.s32.totalorder %s19, 0
    %p67 = por %p65, %p66
    %s69 = sadd.s32 %s68, 1
    %p72 = scmp.eq.s32.totalorder %s13, 1
    %p73 = scmp.ne.s32.totalorder %s68, %s70
    %p74 = scmp.eq.s32.totalorder %s13, 0
    %p75 = por %p73, %p74
    %p76 = scmp.ne.s32.totalorder %s68, %s70
    %p77 = scmp.eq.s32.totalorder %s18, 1
    %p78 = por %p76, %p77
    %p79 = scmp.ne.s32.totalorder %s70, %s71
    %p80 = scmp.eq.s32.totalorder %s18, 0
    %p81 = por %p79, %p80
    %p82 = scmp.ne.s32.totalorder %s70, %s71
    %p83 = scmp.eq.s32.totalorder %s19, 1
    %p84 = por %p82, %p83
    %p86 = scmp.ne.s32.totalorder %s71, %s85
    %p87 = scmp.eq.s32.totalorder %s19, 0
    %p88 = por %p86, %p87
    %s90 = sadd.s32 %s89, 1
    %p93 = scmp.eq.s32.totalorder %s13, 1
    %p94 = scmp.ne.s32.totalorder %s89, %s91
    %p95 = scmp.eq.s32.totalorder %s13, 0
    %p96 = por %p94, %p95
    %p97 = scmp.ne.s32.totalorder %s89, %s91
    %p98 = scmp.eq.s32.totalorder %s18, 1
    %p99 = por %p97, %p98
    %p100 = scmp.ne.s32.totalorder %s91, %s92
    %p101 = scmp.eq.s32.totalorder %s18, 0
    %p102 = por %p100, %p101
    %p103 = scmp.ne.s32.totalorder %s91, %s92
    %p104 = scmp.eq.s32.totalorder %s19, 1
    %p105 = por %p103, %p104
    %p107 = scmp.ne.s32.totalorder %s92, %s106
    %p108 = scmp.eq.s32.totalorder %s19, 0
    %p109 = por %p107, %p108
    %s110 = ssub.s32 %s13, %s20
    %p111 = scmp.eq.s32.totalorder %s110, 0
    %s113 = sadd.s32 %s112, 1
    %s114 = scalar_select %p111, %s112, %s113
    %p117 = pneg %p111
    %p118 = scmp.eq.s32.totalorder %s13, 1
    %p119 = por %p117, %p118
    %p120 = scmp.ne.s32.totalorder %s112, %s115
    %p121 = scmp.eq.s32.totalorder %s13, 0
    %p122 = por %p120, %p121
    %p123 = scmp.ne.s32.totalorder %s112, %s115
    %p124 = scmp.eq.s32.totalorder %s18, 1
    %p125 = por %p123, %p124
    %p126 = scmp.ne.s32.totalorder %s115, %s116
    %p127 = scmp.eq.s32.totalorder %s18, 0
    %p128 = por %p126, %p127
    %p129 = scmp.ne.s32.totalorder %s115, %s116
    %p130 = scmp.eq.s32.totalorder %s19, 1
    %p131 = por %p129, %p130
    %p133 = scmp.ne.s32.totalorder %s116, %s132
    %p134 = scmp.eq.s32.totalorder %s19, 0
    %p135 = por %p133, %p134
    %s136 = ssub.s32 %s13, %s20
    %p137 = scmp.eq.s32.totalorder %s136, 0
    %s139 = sadd.s32 %s138, 1
    %s140 = scalar_select %p137, %s138, %s139
    %p143 = pneg %p137
    %p144 = scmp.eq.s32.totalorder %s13, 1
    %p145 = por %p143, %p144
    %p146 = scmp.ne.s32.totalorder %s138, %s141
    %p147 = scmp.eq.s32.totalorder %s13, 0
    %p148 = por %p146, %p147
    %p149 = scmp.ne.s32.totalorder %s138, %s141
    %p150 = scmp.eq.s32.totalorder %s18, 1
    %p151 = por %p149, %p150
    %p152 = scmp.ne.s32.totalorder %s141, %s142
    %p153 = scmp.eq.s32.totalorder %s18, 0
    %p154 = por %p152, %p153
    %p155 = scmp.ne.s32.totalorder %s141, %s142
    %p156 = scmp.eq.s32.totalorder %s19, 1
    %p157 = por %p155, %p156
    %p159 = scmp.ne.s32.totalorder %s142, %s158
    %p160 = scmp.eq.s32.totalorder %s19, 0
    %p161 = por %p159, %p160
    %s162 = ssub.s32 %s13, %s20
    %p163 = scmp.eq.s32.totalorder %s162, 0
    %s165 = sadd.s32 %s164, 1
    %s166 = scalar_select %p163, %s164, %s165
    %p169 = pneg %p163
    %p170 = scmp.eq.s32.totalorder %s13, 1
    %p171 = por %p169, %p170
    %p172 = scmp.ne.s32.totalorder %s164, %s167
    %p173 = scmp.eq.s32.totalorder %s13, 0
    %p174 = por %p172, %p173
    %p175 = scmp.ne.s32.totalorder %s164, %s167
    %p176 = scmp.eq.s32.totalorder %s18, 1
    %p177 = por %p175, %p176
    %p178 = scmp.ne.s32.totalorder %s167, %s168
    %p179 = scmp.eq.s32.totalorder %s18, 0
    %p180 = por %p178, %p179
    %p181 = scmp.ne.s32.totalorder %s167, %s168
    %p182 = scmp.eq.s32.totalorder %s19, 1
    %p183 = por %p181, %p182
    %p185 = scmp.ne.s32.totalorder %s168, %s184
    %p186 = scmp.eq.s32.totalorder %s19, 0
    %p187 = por %p185, %p186
    %p188 = scmp.le.s32.totalorder 1, %s13
    %p189 = scmp.lt.s32.totalorder %s13, 3
    %p190 = pnand %p188, %p189
    %p191 = pneg %p190
    // Predicated region
    $region9: #{discriminator_forward.5} parent=5 // pred_check
      _
    $region10: #{discriminator_forward.5} parent=5 // pred_check_branch
      %193 = sbr.rel (%p190) target = $region12
    $region11: #{discriminator_forward.5} parent=5 // pred_region
      %s194 = ssub.s32 %s13, 1
      // Predicated region
      $region13: #{discriminator_forward.5} parent=11 // pred_check
        %p195 = pneg %p60
      $region14: #{discriminator_forward.5} parent=11 // pred_check_branch
        %197 = sbr.rel (%p195) target = $region16
      $region15: #{discriminator_forward.5} parent=11 // pred_region
        _
      $region16: #{discriminator_forward.5} parent=11 // pred_fallthru
        _
      // Predicated region
      $region17: #{discriminator_forward.5} parent=11 // pred_check
        %p198 = pneg %p81
      $region18: #{discriminator_forward.5} parent=11 // pred_check_branch
        %200 = sbr.rel (%p198) target = $region20
      $region19: #{discriminator_forward.5} parent=11 // pred_region
        _
      $region20: #{discriminator_forward.5} parent=11 // pred_fallthru
        _
      // Predicated region
      $region21: #{discriminator_forward.5} parent=11 // pred_check
        %p201 = pneg %p102
      $region22: #{discriminator_forward.5} parent=11 // pred_check_branch
        %203 = sbr.rel (%p201) target = $region24
      $region23: #{discriminator_forward.5} parent=11 // pred_region
        _
      $region24: #{discriminator_forward.5} parent=11 // pred_fallthru
        _
    $region12: #{discriminator_forward.5} parent=5 // pred_fallthru
      _
    %p204 = scmp.lt.s32.totalorder %s13, 2
    // Predicated region
    $region25: #{discriminator_forward.5} parent=5 // pred_check
      %p205 = pneg %p204
    $region26: #{discriminator_forward.5} parent=5 // pred_check_branch
      %207 = sbr.rel (%p205) target = $region28
    $region27: #{discriminator_forward.5} parent=5 // pred_region
      // Predicated region
      $region29: #{discriminator_forward.5} parent=27 // pred_check
        %p208 = pneg %p33
      $region30: #{discriminator_forward.5} parent=27 // pred_check_branch
        %210 = sbr.rel (%p208) target = $region32
      $region31: #{discriminator_forward.5} parent=27 // pred_region
        %p211 = scmp.lt.s32.totalorder %s13, 1
        %s212 = scalar_select %p211, %s13, 1
        %s213 = smul.addr %s212, 16
        %s214 = smul.addr %s213, 4
        %s215 = scalar_lea.vmem %s0, %s214
      $region32: #{discriminator_forward.5} parent=27 // pred_fallthru
        _
    $region28: #{discriminator_forward.5} parent=5 // pred_fallthru
      _
    %p216 = scmp.le.s32.totalorder 1, %s13
    %p217 = scmp.lt.s32.totalorder %s13, 3
    %p218 = pnand %p216, %p217
    %p219 = pneg %p218
    // Predicated region
    $region33: #{discriminator_forward.5} parent=5 // pred_check
      _
    $region34: #{discriminator_forward.5} parent=5 // pred_check_branch
      %221 = sbr.rel (%p218) target = $region36
    $region35: #{discriminator_forward.5} parent=5 // pred_region
      %s222 = ssub.s32 %s13, 1
      %p223 = scmp.lt.s32.totalorder %s18, 1
      %s224 = scalar_select %p223, %s18, 1
      %s225 = smul.addr %s224, 16
      %s226 = smul.addr %s225, 4
      %s227 = scalar_lea.vmem %s0, %s226
      %p228 = pneg %p39
      %p229 = pneg %p36
      %p230 = pneg %p60
      %p231 = pneg %p57
      %p232 = pneg %p81
      %p233 = pneg %p78
      %p234 = pneg %p102
      %p235 = pneg %p99
      %p236 = pneg %p128
      %p237 = pneg %p125
      %p238 = scmp.lt.s32.totalorder %s18, 1
      %s239 = scalar_select %p238, %s18, 1
      %s240 = smul.addr %s239, 3
      %s241 = smul.addr %s240, 4
      %s242 = scalar_lea.vmem %s4, %s241
      %p243 = pneg %p154
      %p244 = pneg %p151
      %p245 = scmp.lt.s32.totalorder %s18, 1
      %s246 = scalar_select %p245, %s18, 1
      %s247 = scalar_lea.vmem %s5, %s246
      %p248 = pneg %p180
      %p249 = pneg %p177
      %p250 = scmp.lt.s32.totalorder %s18, 1
      %s251 = scalar_select %p250, %s18, 1
      %s252 = scalar_lea.vmem %s6, %s251
      %p253 = scmp.lt.s32.totalorder %s18, 1
      %s254 = scalar_select %p253, %s18, 1
      %s255 = smul.addr %s254, 16
      %s256 = smul.addr %s255, 4
      %s257 = scalar_lea.vmem %s0, %s256
      %p258 = scmp.lt.s32.totalorder %s18, 1
      %s259 = scalar_select %p258, %s18, 1
      %s260 = smul.addr %s259, 3
      %s261 = smul.addr %s260, 4
      %s262 = scalar_lea.vmem %s4, %s261
      %p263 = scmp.lt.s32.totalorder %s18, 1
      %s264 = scalar_select %p263, %s18, 1
      %s265 = scalar_lea.vmem %s5, %s264
      %p266 = scmp.lt.s32.totalorder %s18, 1
      %s267 = scalar_select %p266, %s18, 1
      %s268 = scalar_lea.vmem %s6, %s267
      %v270 = vld [vmem:[%s257] sm:$0xf]
      %v271 = vld [vmem:[%s257 + $0x4] sm:$0xf]
      %v272 = vld [vmem:[%s257 + $0x8] sm:$0x3]
      %v273 = vld [vmem:[%s1] sm:$0xf]
      %v274 = vld [vmem:[%s1 + $0x4] sm:$0xf]
      %v275 = vld [vmem:[%s1 + $0x8] sm:$0xf]
      %v276 = vld [vmem:[%s1 + $0xc] sm:$0xf]
      %v277 = vld [vmem:[%s1 + $0x10] sm:$0xf]
      %v278 = vld [vmem:[%s1 + $0x14] sm:$0xf]
      %v279 = vld [vmem:[%s1 + $0x18] sm:$0xf]
      %v280 = vld [vmem:[%s1 + $0x1c] sm:$0xf]
      %s281 = scalar_lea.vmem %s257, 16
      %v282 = vld [vmem:[%s281] sm:$0xf]
      %v283 = vld [vmem:[%s281 + $0x4] sm:$0xf]
      %v284 = vld [vmem:[%s281 + $0x8] sm:$0x3]
      %s285 = scalar_lea.vmem %s1, 32
      %v286 = vld [vmem:[%s285] sm:$0xf]
      %v287 = vld [vmem:[%s285 + $0x4] sm:$0xf]
      %v288 = vld [vmem:[%s285 + $0x8] sm:$0xf]
      %v289 = vld [vmem:[%s285 + $0xc] sm:$0xf]
      %v290 = vld [vmem:[%s285 + $0x10] sm:$0xf]
      %v291 = vld [vmem:[%s285 + $0x14] sm:$0xf]
      %v292 = vld [vmem:[%s285 + $0x18] sm:$0xf]
      %v293 = vld [vmem:[%s285 + $0x1c] sm:$0xf]
      %v297 = vunpack.c.l.b16 %v282
      %v298 = vunpack.c.l.b16 %v283
      %v299 = vunpack.c.l.b16 %v284
      %v300 = vpack.c.b16 %v298, %v297
      %v301 = vpack.c.b16 %v299, %v299
      %v310 = vunpack.c.l.b16 %v286
      %v311 = vunpack.c.l.b16 %v287
      %v312 = vunpack.c.l.b16 %v288
      %v313 = vunpack.c.l.b16 %v289
      %v314 = vunpack.c.l.b16 %v290
      %v315 = vunpack.c.l.b16 %v291
      %v316 = vunpack.c.l.b16 %v292
      %v317 = vunpack.c.l.b16 %v293
      %v318 = vpack.c.b16 %v311, %v310
      %v319 = vpack.c.b16 %v313, %v312
      %v320 = vpack.c.b16 %v315, %v314
      %v321 = vpack.c.b16 %v317, %v316
      %vm326 = vcmask 523264
      %v328 = vsel %vm326, %v300, 0
      %v331 = vsel %vm326, %v301, 0
      %333 = vmatpush.bf16.msra.mxu0 0
      %334 = vmatpush.bf16.msra.mxu0 0
      %335 = vmatpush.bf16.msra.mxu0 0
      %336 = vmatpush.bf16.msra.mxu0 0
      %337 = vmatpush.bf16.msra.mxu0 %v321
      %338 = vmatpush.bf16.msra.mxu0 %v320
      %339 = vmatpush.bf16.msra.mxu0 %v319
      %340 = vmatpush.bf16.msra.mxu0 %v318
      %341 = vmatmul.bf16.gmra.mxu0 %v328
      %v342 = vpop.f32.mrf.mxu0
      %v343 = vadd.f32 0.0, %v342
      %v344 = vpop.f32.mrf.mxu0
      %v345 = vadd.f32 0.0, %v344
      %346 = vmatmul.bf16.gmra.mxu0 %v331
      %v347 = vpop.f32.mrf.mxu0
      %v348 = vadd.f32 0.0, %v347
      %v349 = vpop.f32.mrf.mxu0
      %350 = vdwg.mxu0
      %v354 = vunpack.c.l.b16 %v270
      %v355 = vunpack.c.l.b16 %v271
      %v356 = vunpack.c.l.b16 %v272
      %v357 = vpack.c.b16 %v355, %v354
      %v358 = vpack.c.b16 %v356, %v356
      %v367 = vunpack.c.l.b16 %v273
      %v368 = vunpack.c.l.b16 %v274
      %v369 = vunpack.c.l.b16 %v275
      %v370 = vunpack.c.l.b16 %v276
      %v371 = vunpack.c.l.b16 %v277
      %v372 = vunpack.c.l.b16 %v278
      %v373 = vunpack.c.l.b16 %v279
      %v374 = vunpack.c.l.b16 %v280
      %v375 = vpack.c.b16 %v368, %v367
      %v376 = vpack.c.b16 %v370, %v369
      %v377 = vpack.c.b16 %v372, %v371
      %v378 = vpack.c.b16 %v374, %v373
      %v384 = vsel %vm326, %v357, 0
      %v387 = vsel %vm326, %v358, 0
      %389 = vmatpush.bf16.msra.mxu0 0
      %390 = vmatpush.bf16.msra.mxu0 0
      %391 = vmatpush.bf16.msra.mxu0 0
      %392 = vmatpush.bf16.msra.mxu0 0
      %393 = vmatpush.bf16.msra.mxu0 %v378
      %394 = vmatpush.bf16.msra.mxu0 %v377
      %395 = vmatpush.bf16.msra.mxu0 %v376
      %396 = vmatpush.bf16.msra.mxu0 %v375
      %397 = vmatmul.bf16.gmra.mxu0 %v384
      %v398 = vpop.f32.mrf.mxu0
      %v399 = vadd.f32 %v343, %v398
      %v400 = vpop.f32.mrf.mxu0
      %v401 = vadd.f32 %v345, %v400
      %402 = vmatmul.bf16.gmra.mxu0 %v387
      %v403 = vpop.f32.mrf.mxu0
      %v404 = vadd.f32 %v348, %v403
      %v405 = vpop.f32.mrf.mxu0
      %406 = vdwg.mxu0
      %v407 = vld [vmem:[%s257 + $0x8] sm:$0x7]
      %s408 = scalar_lea.vmem %s1, 64
      %v409 = vld [vmem:[%s408] sm:$0xf]
      %v410 = vld [vmem:[%s408 + $0x4] sm:$0xf]
      %v411 = vld [vmem:[%s408 + $0x8] sm:$0xf]
      %v412 = vld [vmem:[%s408 + $0xc] sm:$0xf]
      %v413 = vld [vmem:[%s408 + $0x10] sm:$0xf]
      %v414 = vld [vmem:[%s408 + $0x14] sm:$0xf]
      %v415 = vld [vmem:[%s408 + $0x18] sm:$0xf]
      %v416 = vld [vmem:[%s408 + $0x1c] sm:$0xf]
      %v418 = vunpack.c.l.b16 %v407
      %v419 = vpack.c.b16 %v418, %v418
      %vm420 = vsmask.f32 7424
      %v421 = vshrl.u32 %v357, 16
      %v423 = vshll.u32 %v357, 16
      %v425 = vrot.slane %v423, 1
      %v426 = vor.u32 %v421, %v425
      %v428 = vshll.u32 %v419, 16
      %v430 = vrot.slane %v428, 1
      %v431 = vsel %vm420, %v426, %v430
      %v432 = vshrl.u32 %v419, 16
      %v434 = vor.u32 %v432, %v430
      %v443 = vunpack.c.l.b16 %v409
      %v444 = vunpack.c.l.b16 %v410
      %v445 = vunpack.c.l.b16 %v411
      %v446 = vunpack.c.l.b16 %v412
      %v447 = vunpack.c.l.b16 %v413
      %v448 = vunpack.c.l.b16 %v414
      %v449 = vunpack.c.l.b16 %v415
      %v450 = vunpack.c.l.b16 %v416
      %v451 = vpack.c.b16 %v444, %v443
      %v452 = vpack.c.b16 %v446, %v445
      %v453 = vpack.c.b16 %v448, %v447
      %v454 = vpack.c.b16 %v450, %v449
      %v460 = vsel %vm326, %v431, 0
      %v463 = vsel %vm326, %v434, 0
      %465 = vmatpush.bf16.msra.mxu0 0
      %466 = vmatpush.bf16.msra.mxu0 0
      %467 = vmatpush.bf16.msra.mxu0 0
      %468 = vmatpush.bf16.msra.mxu0 0
      %469 = vmatpush.bf16.msra.mxu0 %v454
      %470 = vmatpush.bf16.msra.mxu0 %v453
      %471 = vmatpush.bf16.msra.mxu0 %v452
      %472 = vmatpush.bf16.msra.mxu0 %v451
      %473 = vmatmul.bf16.gmra.mxu0 %v460
      %v474 = vpop.f32.mrf.mxu0
      %v475 = vadd.f32 0.0, %v474
      %v476 = vpop.f32.mrf.mxu0
      %v477 = vadd.f32 0.0, %v476
      %478 = vmatmul.bf16.gmra.mxu0 %v463
      %v479 = vpop.f32.mrf.mxu0
      %v480 = vadd.f32 0.0, %v479
      %v481 = vpop.f32.mrf.mxu0
      %482 = vdwg.mxu0
      %v483 = vadd.f32 %v399, %v475
      %v484 = vadd.f32 %v401, %v477
      %v485 = vadd.f32 %v404, %v480
      %v486 = vld [vmem:[%s281 + $0x8] sm:$0x7]
      %s487 = scalar_lea.vmem %s1, 96
      %v488 = vld [vmem:[%s487] sm:$0xf]
      %v489 = vld [vmem:[%s487 + $0x4] sm:$0xf]
      %v490 = vld [vmem:[%s487 + $0x8] sm:$0xf]
      %v491 = vld [vmem:[%s487 + $0xc] sm:$0xf]
      %v492 = vld [vmem:[%s487 + $0x10] sm:$0xf]
      %v493 = vld [vmem:[%s487 + $0x14] sm:$0xf]
      %v494 = vld [vmem:[%s487 + $0x18] sm:$0xf]
      %v495 = vld [vmem:[%s487 + $0x1c] sm:$0xf]
      %v497 = vunpack.c.l.b16 %v486
      %v498 = vpack.c.b16 %v497, %v497
      %v499 = vshrl.u32 %v300, 16
      %v501 = vshll.u32 %v300, 16
      %v503 = vrot.slane %v501, 1
      %v504 = vor.u32 %v499, %v503
      %v506 = vshll.u32 %v498, 16
      %v508 = vrot.slane %v506, 1
      %v509 = vsel %vm420, %v504, %v508
      %v510 = vshrl.u32 %v498, 16
      %v512 = vor.u32 %v510, %v508
      %v521 = vunpack.c.l.b16 %v488
      %v522 = vunpack.c.l.b16 %v489
      %v523 = vunpack.c.l.b16 %v490
      %v524 = vunpack.c.l.b16 %v491
      %v525 = vunpack.c.l.b16 %v492
      %v526 = vunpack.c.l.b16 %v493
      %v527 = vunpack.c.l.b16 %v494
      %v528 = vunpack.c.l.b16 %v495
      %v529 = vpack.c.b16 %v522, %v521
      %v530 = vpack.c.b16 %v524, %v523
      %v531 = vpack.c.b16 %v526, %v525
      %v532 = vpack.c.b16 %v528, %v527
      %v538 = vsel %vm326, %v509, 0
      %v541 = vsel %vm326, %v512, 0
      %543 = vmatpush.bf16.msra.mxu0 0
      %544 = vmatpush.bf16.msra.mxu0 0
      %545 = vmatpush.bf16.msra.mxu0 0
      %546 = vmatpush.bf16.msra.mxu0 0
      %547 = vmatpush.bf16.msra.mxu0 %v532
      %548 = vmatpush.bf16.msra.mxu0 %v531
      %549 = vmatpush.bf16.msra.mxu0 %v530
      %550 = vmatpush.bf16.msra.mxu0 %v529
      %551 = vmatmul.bf16.gmra.mxu0 %v538
      %v552 = vpop.f32.mrf.mxu0
      %v553 = vadd.f32 0.0, %v552
      %v554 = vpop.f32.mrf.mxu0
      %v555 = vadd.f32 0.0, %v554
      %556 = vmatmul.bf16.gmra.mxu0 %v541
      %v557 = vpop.f32.mrf.mxu0
      %v558 = vadd.f32 0.0, %v557
      %v559 = vpop.f32.mrf.mxu0
      %560 = vdwg.mxu0
      %v561 = vadd.f32 %v483, %v553
      %v562 = vadd.f32 %v484, %v555
      %v563 = vadd.f32 %v485, %v558
      %s564 = scalar_lea.vmem %s257, 32
      %v565 = vld [vmem:[%s564] sm:$0xf]
      %v566 = vld [vmem:[%s564 + $0x4] sm:$0xf]
      %v567 = vld [vmem:[%s564 + $0x8] sm:$0x3]
      %s568 = scalar_lea.vmem %s1, 128
      %v569 = vld [vmem:[%s568] sm:$0xf]
      %v570 = vld [vmem:[%s568 + $0x4] sm:$0xf]
      %v571 = vld [vmem:[%s568 + $0x8] sm:$0xf]
      %v572 = vld [vmem:[%s568 + $0xc] sm:$0xf]
      %v573 = vld [vmem:[%s568 + $0x10] sm:$0xf]
      %v574 = vld [vmem:[%s568 + $0x14] sm:$0xf]
      %v575 = vld [vmem:[%s568 + $0x18] sm:$0xf]
      %v576 = vld [vmem:[%s568 + $0x1c] sm:$0xf]
      %v580 = vunpack.c.l.b16 %v565
      %v581 = vunpack.c.l.b16 %v566
      %v582 = vunpack.c.l.b16 %v567
      %v583 = vpack.c.b16 %v581, %v580
      %v584 = vpack.c.b16 %v582, %v582
      %v593 = vunpack.c.l.b16 %v569
      %v594 = vunpack.c.l.b16 %v570
      %v595 = vunpack.c.l.b16 %v571
      %v596 = vunpack.c.l.b16 %v572
      %v597 = vunpack.c.l.b16 %v573
      %v598 = vunpack.c.l.b16 %v574
      %v599 = vunpack.c.l.b16 %v575
      %v600 = vunpack.c.l.b16 %v576
      %v601 = vpack.c.b16 %v594, %v593
      %v602 = vpack.c.b16 %v596, %v595
      %v603 = vpack.c.b16 %v598, %v597
      %v604 = vpack.c.b16 %v600, %v599
      %v610 = vsel %vm326, %v583, 0
      %v613 = vsel %vm326, %v584, 0
      %615 = vmatpush.bf16.msra.mxu0 0
      %616 = vmatpush.bf16.msra.mxu0 0
      %617 = vmatpush.bf16.msra.mxu0 0
      %618 = vmatpush.bf16.msra.mxu0 0
      %619 = vmatpush.bf16.msra.mxu0 %v604
      %620 = vmatpush.bf16.msra.mxu0 %v603
      %621 = vmatpush.bf16.msra.mxu0 %v602
      %622 = vmatpush.bf16.msra.mxu0 %v601
      %623 = vmatmul.bf16.gmra.mxu0 %v610
      %v624 = vpop.f32.mrf.mxu0
      %v625 = vadd.f32 0.0, %v624
      %v626 = vpop.f32.mrf.mxu0
      %v627 = vadd.f32 0.0, %v626
      %628 = vmatmul.bf16.gmra.mxu0 %v613
      %v629 = vpop.f32.mrf.mxu0
      %v630 = vadd.f32 0.0, %v629
      %v631 = vpop.f32.mrf.mxu0
      %632 = vdwg.mxu0
      %v633 = vadd.f32 %v561, %v625
      %v634 = vadd.f32 %v562, %v627
      %v635 = vadd.f32 %v563, %v630
      %s636 = scalar_lea.vmem %s257, 48
      %v637 = vld [vmem:[%s636] sm:$0xf]
      %v638 = vld [vmem:[%s636 + $0x4] sm:$0xf]
      %v639 = vld [vmem:[%s636 + $0x8] sm:$0x3]
      %s640 = scalar_lea.vmem %s1, 160
      %v641 = vld [vmem:[%s640] sm:$0xf]
      %v642 = vld [vmem:[%s640 + $0x4] sm:$0xf]
      %v643 = vld [vmem:[%s640 + $0x8] sm:$0xf]
      %v644 = vld [vmem:[%s640 + $0xc] sm:$0xf]
      %v645 = vld [vmem:[%s640 + $0x10] sm:$0xf]
      %v646 = vld [vmem:[%s640 + $0x14] sm:$0xf]
      %v647 = vld [vmem:[%s640 + $0x18] sm:$0xf]
      %v648 = vld [vmem:[%s640 + $0x1c] sm:$0xf]
      %v652 = vunpack.c.l.b16 %v637
      %v653 = vunpack.c.l.b16 %v638
      %v654 = vunpack.c.l.b16 %v639
      %v655 = vpack.c.b16 %v653, %v652
      %v656 = vpack.c.b16 %v654, %v654
      %v665 = vunpack.c.l.b16 %v641
      %v666 = vunpack.c.l.b16 %v642
      %v667 = vunpack.c.l.b16 %v643
      %v668 = vunpack.c.l.b16 %v644
      %v669 = vunpack.c.l.b16 %v645
      %v670 = vunpack.c.l.b16 %v646
      %v671 = vunpack.c.l.b16 %v647
      %v672 = vunpack.c.l.b16 %v648
      %v673 = vpack.c.b16 %v666, %v665
      %v674 = vpack.c.b16 %v668, %v667
      %v675 = vpack.c.b16 %v670, %v669
      %v676 = vpack.c.b16 %v672, %v671
      %v682 = vsel %vm326, %v655, 0
      %v685 = vsel %vm326, %v656, 0
      %687 = vmatpush.bf16.msra.mxu0 0
      %688 = vmatpush.bf16.msra.mxu0 0
      %689 = vmatpush.bf16.msra.mxu0 0
      %690 = vmatpush.bf16.msra.mxu0 0
      %691 = vmatpush.bf16.msra.mxu0 %v676
      %692 = vmatpush.bf16.msra.mxu0 %v675
      %693 = vmatpush.bf16.msra.mxu0 %v674
      %694 = vmatpush.bf16.msra.mxu0 %v673
      %695 = vmatmul.bf16.gmra.mxu0 %v682
      %v696 = vpop.f32.mrf.mxu0
      %v697 = vadd.f32 0.0, %v696
      %v698 = vpop.f32.mrf.mxu0
      %v699 = vadd.f32 0.0, %v698
      %700 = vmatmul.bf16.gmra.mxu0 %v685
      %v701 = vpop.f32.mrf.mxu0
      %v702 = vadd.f32 0.0, %v701
      %v703 = vpop.f32.mrf.mxu0
      %704 = vdwg.mxu0
      %v705 = vadd.f32 %v633, %v697
      %v706 = vadd.f32 %v634, %v699
      %v707 = vadd.f32 %v635, %v702
      %v708 = vld [vmem:[%s564 + $0x8] sm:$0x7]
      %s709 = scalar_lea.vmem %s1, 192
      %v710 = vld [vmem:[%s709] sm:$0xf]
      %v711 = vld [vmem:[%s709 + $0x4] sm:$0xf]
      %v712 = vld [vmem:[%s709 + $0x8] sm:$0xf]
      %v713 = vld [vmem:[%s709 + $0xc] sm:$0xf]
      %v714 = vld [vmem:[%s709 + $0x10] sm:$0xf]
      %v715 = vld [vmem:[%s709 + $0x14] sm:$0xf]
      %v716 = vld [vmem:[%s709 + $0x18] sm:$0xf]
      %v717 = vld [vmem:[%s709 + $0x1c] sm:$0xf]
      %v719 = vunpack.c.l.b16 %v708
      %v720 = vpack.c.b16 %v719, %v719
      %v721 = vshrl.u32 %v583, 16
      %v723 = vshll.u32 %v583, 16
      %v725 = vrot.slane %v723, 1
      %v726 = vor.u32 %v721, %v725
      %v728 = vshll.u32 %v720, 16
      %v730 = vrot.slane %v728, 1
      %v731 = vsel %vm420, %v726, %v730
      %v732 = vshrl.u32 %v720, 16
      %v734 = vor.u32 %v732, %v730
      %v743 = vunpack.c.l.b16 %v710
      %v744 = vunpack.c.l.b16 %v711
      %v745 = vunpack.c.l.b16 %v712
      %v746 = vunpack.c.l.b16 %v713
      %v747 = vunpack.c.l.b16 %v714
      %v748 = vunpack.c.l.b16 %v715
      %v749 = vunpack.c.l.b16 %v716
      %v750 = vunpack.c.l.b16 %v717
      %v751 = vpack.c.b16 %v744, %v743
      %v752 = vpack.c.b16 %v746, %v745
      %v753 = vpack.c.b16 %v748, %v747
      %v754 = vpack.c.b16 %v750, %v749
      %v760 = vsel %vm326, %v731, 0
      %v763 = vsel %vm326, %v734, 0
      %765 = vmatpush.bf16.msra.mxu0 0
      %766 = vmatpush.bf16.msra.mxu0 0
      %767 = vmatpush.bf16.msra.mxu0 0
      %768 = vmatpush.bf16.msra.mxu0 0
      %769 = vmatpush.bf16.msra.mxu0 %v754
      %770 = vmatpush.bf16.msra.mxu0 %v753
      %771 = vmatpush.bf16.msra.mxu0 %v752
      %772 = vmatpush.bf16.msra.mxu0 %v751
      %773 = vmatmul.bf16.gmra.mxu0 %v760
      %v774 = vpop.f32.mrf.mxu0
      %v775 = vadd.f32 0.0, %v774
      %v776 = vpop.f32.mrf.mxu0
      %v777 = vadd.f32 0.0, %v776
      %778 = vmatmul.bf16.gmra.mxu0 %v763
      %v779 = vpop.f32.mrf.mxu0
      %v780 = vadd.f32 0.0, %v779
      %v781 = vpop.f32.mrf.mxu0
      %782 = vdwg.mxu0
      %v783 = vadd.f32 %v705, %v775
      %v784 = vadd.f32 %v706, %v777
      %v785 = vadd.f32 %v707, %v780
      %v786 = vld [vmem:[%s636 + $0x8] sm:$0x7]
      %s787 = scalar_lea.vmem %s1, 224
      %v788 = vld [vmem:[%s787] sm:$0xf]
      %v789 = vld [vmem:[%s787 + $0x4] sm:$0xf]
      %v790 = vld [vmem:[%s787 + $0x8] sm:$0xf]
      %v791 = vld [vmem:[%s787 + $0xc] sm:$0xf]
      %v792 = vld [vmem:[%s787 + $0x10] sm:$0xf]
      %v793 = vld [vmem:[%s787 + $0x14] sm:$0xf]
      %v794 = vld [vmem:[%s787 + $0x18] sm:$0xf]
      %v795 = vld [vmem:[%s787 + $0x1c] sm:$0xf]
      %v797 = vunpack.c.l.b16 %v786
      %v798 = vpack.c.b16 %v797, %v797
      %v799 = vshrl.u32 %v655, 16
      %v801 = vshll.u32 %v655, 16
      %v803 = vrot.slane %v801, 1
      %v804 = vor.u32 %v799, %v803
      %v806 = vshll.u32 %v798, 16
      %v808 = vrot.slane %v806, 1
      %v809 = vsel %vm420, %v804, %v808
      %v810 = vshrl.u32 %v798, 16
      %v812 = vor.u32 %v810, %v808
      %v821 = vunpack.c.l.b16 %v788
      %v822 = vunpack.c.l.b16 %v789
      %v823 = vunpack.c.l.b16 %v790
      %v824 = vunpack.c.l.b16 %v791
      %v825 = vunpack.c.l.b16 %v792
      %v826 = vunpack.c.l.b16 %v793
      %v827 = vunpack.c.l.b16 %v794
      %v828 = vunpack.c.l.b16 %v795
      %v829 = vpack.c.b16 %v822, %v821
      %v830 = vpack.c.b16 %v824, %v823
      %v831 = vpack.c.b16 %v826, %v825
      %v832 = vpack.c.b16 %v828, %v827
      %v838 = vsel %vm326, %v809, 0
      %v841 = vsel %vm326, %v812, 0
      %843 = vmatpush.bf16.msra.mxu0 0
      %844 = vmatpush.bf16.msra.mxu0 0
      %845 = vmatpush.bf16.msra.mxu0 0
      %846 = vmatpush.bf16.msra.mxu0 0
      %847 = vmatpush.bf16.msra.mxu0 %v832
      %848 = vmatpush.bf16.msra.mxu0 %v831
      %849 = vmatpush.bf16.msra.mxu0 %v830
      %850 = vmatpush.bf16.msra.mxu0 %v829
      %851 = vmatmul.bf16.gmra.mxu0 %v838
      %v852 = vpop.f32.mrf.mxu0
      %v853 = vadd.f32 0.0, %v852
      %v854 = vpop.f32.mrf.mxu0
      %v855 = vadd.f32 0.0, %v854
      %856 = vmatmul.bf16.gmra.mxu0 %v841
      %v857 = vpop.f32.mrf.mxu0
      %v858 = vadd.f32 0.0, %v857
      %v859 = vpop.f32.mrf.mxu0
      %860 = vdwg.mxu0
      %v861 = vadd.f32 %v783, %v853
      %v862 = vadd.f32 %v784, %v855
      %v863 = vadd.f32 %v785, %v858
      %v864 = vld [vmem:[%s257] sm:$0xc]
      %v865 = vld [vmem:[%s257 + $0x4] sm:$0xf]
      %v866 = vld [vmem:[%s257 + $0x8] sm:$0xf]
      %v867 = vld [vmem:[%s257 + $0xc] sm:$0x1]
      %s868 = scalar_lea.vmem %s1, 256
      %v869 = vld [vmem:[%s868] sm:$0xf]
      %v870 = vld [vmem:[%s868 + $0x4] sm:$0xf]
      %v871 = vld [vmem:[%s868 + $0x8] sm:$0xf]
      %v872 = vld [vmem:[%s868 + $0xc] sm:$0xf]
      %v873 = vld [vmem:[%s868 + $0x10] sm:$0xf]
      %v874 = vld [vmem:[%s868 + $0x14] sm:$0xf]
      %v875 = vld [vmem:[%s868 + $0x18] sm:$0xf]
      %v876 = vld [vmem:[%s868 + $0x1c] sm:$0xf]
      %v881 = vunpack.c.l.b16 %v864
      %v882 = vunpack.c.l.b16 %v865
      %v883 = vunpack.c.l.b16 %v866
      %v884 = vunpack.c.l.b16 %v867
      %v885 = vpack.c.b16 %v882, %v881
      %v886 = vpack.c.b16 %v884, %v883
      %vm887 = vsmask.f32 5376
      %v889 = vshrl.u32 %v885, 16
      %v891 = vrot.slane %v889, 2
      %v892 = vshll.u32 %v885, 16
      %v894 = vrot.slane %v892, 3
      %v895 = vor.u32 %v891, %v894
      %v897 = vshrl.u32 %v886, 16
      %v899 = vrot.slane %v897, 2
      %v900 = vshll.u32 %v886, 16
      %v902 = vrot.slane %v900, 3
      %v903 = vor.u32 %v899, %v902
      %v904 = vsel %vm887, %v895, %v903
      %v913 = vunpack.c.l.b16 %v869
      %v914 = vunpack.c.l.b16 %v870
      %v915 = vunpack.c.l.b16 %v871
      %v916 = vunpack.c.l.b16 %v872
      %v917 = vunpack.c.l.b16 %v873
      %v918 = vunpack.c.l.b16 %v874
      %v919 = vunpack.c.l.b16 %v875
      %v920 = vunpack.c.l.b16 %v876
      %v921 = vpack.c.b16 %v914, %v913
      %v922 = vpack.c.b16 %v916, %v915
      %v923 = vpack.c.b16 %v918, %v917
      %v924 = vpack.c.b16 %v920, %v919
      %v930 = vsel %vm326, %v904, 0
      %v933 = vsel %vm326, %v903, 0
      %935 = vmatpush.bf16.msra.mxu0 0
      %936 = vmatpush.bf16.msra.mxu0 0
      %937 = vmatpush.bf16.msra.mxu0 0
      %938 = vmatpush.bf16.msra.mxu0 0
      %939 = vmatpush.bf16.msra.mxu0 %v924
      %940 = vmatpush.bf16.msra.mxu0 %v923
      %941 = vmatpush.bf16.msra.mxu0 %v922
      %942 = vmatpush.bf16.msra.mxu0 %v921
      %943 = vmatmul.bf16.gmra.mxu0 %v930
      %v944 = vpop.f32.mrf.mxu0
      %v945 = vadd.f32 0.0, %v944
      %v946 = vpop.f32.mrf.mxu0
      %v947 = vadd.f32 0.0, %v946
      %948 = vmatmul.bf16.gmra.mxu0 %v933
      %v949 = vpop.f32.mrf.mxu0
      %v950 = vadd.f32 0.0, %v949
      %v951 = vpop.f32.mrf.mxu0
      %952 = vdwg.mxu0
      %v953 = vadd.f32 %v861, %v945
      %v954 = vadd.f32 %v862, %v947
      %v955 = vadd.f32 %v863, %v950
      %v956 = vld [vmem:[%s281] sm:$0xc]
      %v957 = vld [vmem:[%s281 + $0x4] sm:$0xf]
      %v958 = vld [vmem:[%s281 + $0x8] sm:$0xf]
      %v959 = vld [vmem:[%s281 + $0xc] sm:$0x1]
      %s960 = scalar_lea.vmem %s1, 288
      %v961 = vld [vmem:[%s960] sm:$0xf]
      %v962 = vld [vmem:[%s960 + $0x4] sm:$0xf]
      %v963 = vld [vmem:[%s960 + $0x8] sm:$0xf]
      %v964 = vld [vmem:[%s960 + $0xc] sm:$0xf]
      %v965 = vld [vmem:[%s960 + $0x10] sm:$0xf]
      %v966 = vld [vmem:[%s960 + $0x14] sm:$0xf]
      %v967 = vld [vmem:[%s960 + $0x18] sm:$0xf]
      %v968 = vld [vmem:[%s960 + $0x1c] sm:$0xf]
      %v973 = vunpack.c.l.b16 %v956
      %v974 = vunpack.c.l.b16 %v957
      %v975 = vunpack.c.l.b16 %v958
      %v976 = vunpack.c.l.b16 %v959
      %v977 = vpack.c.b16 %v974, %v973
      %v978 = vpack.c.b16 %v976, %v975
      %v980 = vshrl.u32 %v977, 16
      %v982 = vrot.slane %v980, 2
      %v983 = vshll.u32 %v977, 16
      %v985 = vrot.slane %v983, 3
      %v986 = vor.u32 %v982, %v985
      %v988 = vshrl.u32 %v978, 16
      %v990 = vrot.slane %v988, 2
      %v991 = vshll.u32 %v978, 16
      %v993 = vrot.slane %v991, 3
      %v994 = vor.u32 %v990, %v993
      %v995 = vsel %vm887, %v986, %v994
      %v1004 = vunpack.c.l.b16 %v961
      %v1005 = vunpack.c.l.b16 %v962
      %v1006 = vunpack.c.l.b16 %v963
      %v1007 = vunpack.c.l.b16 %v964
      %v1008 = vunpack.c.l.b16 %v965
      %v1009 = vunpack.c.l.b16 %v966
      %v1010 = vunpack.c.l.b16 %v967
      %v1011 = vunpack.c.l.b16 %v968
      %v1012 = vpack.c.b16 %v1005, %v1004
      %v1013 = vpack.c.b16 %v1007, %v1006
      %v1014 = vpack.c.b16 %v1009, %v1008
      %v1015 = vpack.c.b16 %v1011, %v1010
      %v1021 = vsel %vm326, %v995, 0
      %v1024 = vsel %vm326, %v994, 0
      %1026 = vmatpush.bf16.msra.mxu0 0
      %1027 = vmatpush.bf16.msra.mxu0 0
      %1028 = vmatpush.bf16.msra.mxu0 0
      %1029 = vmatpush.bf16.msra.mxu0 0
      %1030 = vmatpush.bf16.msra.mxu0 %v1015
      %1031 = vmatpush.bf16.msra.mxu0 %v1014
      %1032 = vmatpush.bf16.msra.mxu0 %v1013
      %1033 = vmatpush.bf16.msra.mxu0 %v1012
      %1034 = vmatmul.bf16.gmra.mxu0 %v1021
      %v1035 = vpop.f32.mrf.mxu0
      %v1036 = vadd.f32 0.0, %v1035
      %v1037 = vpop.f32.mrf.mxu0
      %v1038 = vadd.f32 0.0, %v1037
      %1039 = vmatmul.bf16.gmra.mxu0 %v1024
      %v1040 = vpop.f32.mrf.mxu0
      %v1041 = vadd.f32 0.0, %v1040
      %v1042 = vpop.f32.mrf.mxu0
      %1043 = vdwg.mxu0
      %v1044 = vadd.f32 %v953, %v1036
      %v1045 = vadd.f32 %v954, %v1038
      %v1046 = vadd.f32 %v955, %v1041
      %v1047 = vld [vmem:[%s257] sm:$0x8]
      %s1048 = scalar_lea.vmem %s1, 320
      %v1049 = vld [vmem:[%s1048] sm:$0xf]
      %v1050 = vld [vmem:[%s1048 + $0x4] sm:$0xf]
      %v1051 = vld [vmem:[%s1048 + $0x8] sm:$0xf]
      %v1052 = vld [vmem:[%s1048 + $0xc] sm:$0xf]
      %v1053 = vld [vmem:[%s1048 + $0x10] sm:$0xf]
      %v1054 = vld [vmem:[%s1048 + $0x14] sm:$0xf]
      %v1055 = vld [vmem:[%s1048 + $0x18] sm:$0xf]
      %v1056 = vld [vmem:[%s1048 + $0x1c] sm:$0xf]
      %v1058 = vunpack.c.l.b16 %v1047
      %v1059 = vpack.c.b16 %v882, %v1058
      %vm1060 = vcmask 1044480
      %v1061 = vrot.slane %v1059, 3
      %v1062 = vrot.slane %v886, 3
      %v1063 = vsel %vm1060, %v1061, %v1062
      %v1072 = vunpack.c.l.b16 %v1049
      %v1073 = vunpack.c.l.b16 %v1050
      %v1074 = vunpack.c.l.b16 %v1051
      %v1075 = vunpack.c.l.b16 %v1052
      %v1076 = vunpack.c.l.b16 %v1053
      %v1077 = vunpack.c.l.b16 %v1054
      %v1078 = vunpack.c.l.b16 %v1055
      %v1079 = vunpack.c.l.b16 %v1056
      %v1080 = vpack.c.b16 %v1073, %v1072
      %v1081 = vpack.c.b16 %v1075, %v1074
      %v1082 = vpack.c.b16 %v1077, %v1076
      %v1083 = vpack.c.b16 %v1079, %v1078
      %v1089 = vsel %vm326, %v1063, 0
      %v1092 = vsel %vm326, %v1062, 0
      %1094 = vmatpush.bf16.msra.mxu0 0
      %1095 = vmatpush.bf16.msra.mxu0 0
      %1096 = vmatpush.bf16.msra.mxu0 0
      %1097 = vmatpush.bf16.msra.mxu0 0
      %1098 = vmatpush.bf16.msra.mxu0 %v1083
      %1099 = vmatpush.bf16.msra.mxu0 %v1082
      %1100 = vmatpush.bf16.msra.mxu0 %v1081
      %1101 = vmatpush.bf16.msra.mxu0 %v1080
      %1102 = vmatmul.bf16.gmra.mxu0 %v1089
      %v1103 = vpop.f32.mrf.mxu0
      %v1104 = vadd.f32 0.0, %v1103
      %v1105 = vpop.f32.mrf.mxu0
      %v1106 = vadd.f32 0.0, %v1105
      %1107 = vmatmul.bf16.gmra.mxu0 %v1092
      %v1108 = vpop.f32.mrf.mxu0
      %v1109 = vadd.f32 0.0, %v1108
      %v1110 = vpop.f32.mrf.mxu0
      %1111 = vdwg.mxu0
      %v1112 = vadd.f32 %v1044, %v1104
      %v1113 = vadd.f32 %v1045, %v1106
      %v1114 = vadd.f32 %v1046, %v1109
      %v1115 = vld [vmem:[%s281] sm:$0x8]
      %s1116 = scalar_lea.vmem %s1, 352
      %v1117 = vld [vmem:[%s1116] sm:$0xf]
      %v1118 = vld [vmem:[%s1116 + $0x4] sm:$0xf]
      %v1119 = vld [vmem:[%s1116 + $0x8] sm:$0xf]
      %v1120 = vld [vmem:[%s1116 + $0xc] sm:$0xf]
      %v1121 = vld [vmem:[%s1116 + $0x10] sm:$0xf]
      %v1122 = vld [vmem:[%s1116 + $0x14] sm:$0xf]
      %v1123 = vld [vmem:[%s1116 + $0x18] sm:$0xf]
      %v1124 = vld [vmem:[%s1116 + $0x1c] sm:$0xf]
      %v1126 = vunpack.c.l.b16 %v1115
      %v1127 = vpack.c.b16 %v974, %v1126
      %v1128 = vrot.slane %v1127, 3
      %v1129 = vrot.slane %v978, 3
      %v1130 = vsel %vm1060, %v1128, %v1129
      %v1139 = vunpack.c.l.b16 %v1117
      %v1140 = vunpack.c.l.b16 %v1118
      %v1141 = vunpack.c.l.b16 %v1119
      %v1142 = vunpack.c.l.b16 %v1120
      %v1143 = vunpack.c.l.b16 %v1121
      %v1144 = vunpack.c.l.b16 %v1122
      %v1145 = vunpack.c.l.b16 %v1123
      %v1146 = vunpack.c.l.b16 %v1124
      %v1147 = vpack.c.b16 %v1140, %v1139
      %v1148 = vpack.c.b16 %v1142, %v1141
      %v1149 = vpack.c.b16 %v1144, %v1143
      %v1150 = vpack.c.b16 %v1146, %v1145
      %v1156 = vsel %vm326, %v1130, 0
      %v1159 = vsel %vm326, %v1129, 0
      %1161 = vmatpush.bf16.msra.mxu0 0
      %1162 = vmatpush.bf16.msra.mxu0 0
      %1163 = vmatpush.bf16.msra.mxu0 0
      %1164 = vmatpush.bf16.msra.mxu0 0
      %1165 = vmatpush.bf16.msra.mxu0 %v1150
      %1166 = vmatpush.bf16.msra.mxu0 %v1149
      %1167 = vmatpush.bf16.msra.mxu0 %v1148
      %1168 = vmatpush.bf16.msra.mxu0 %v1147
      %1169 = vmatmul.bf16.gmra.mxu0 %v1156
      %v1170 = vpop.f32.mrf.mxu0
      %v1171 = vadd.f32 0.0, %v1170
      %v1172 = vpop.f32.mrf.mxu0
      %v1173 = vadd.f32 0.0, %v1172
      %1174 = vmatmul.bf16.gmra.mxu0 %v1159
      %v1175 = vpop.f32.mrf.mxu0
      %v1176 = vadd.f32 0.0, %v1175
      %v1177 = vpop.f32.mrf.mxu0
      %1178 = vdwg.mxu0
      %v1179 = vadd.f32 %v1112, %v1171
      %v1180 = vadd.f32 %v1113, %v1173
      %v1181 = vadd.f32 %v1114, %v1176
      %v1182 = vld [vmem:[%s564] sm:$0xc]
      %v1183 = vld [vmem:[%s564 + $0x4] sm:$0xf]
      %v1184 = vld [vmem:[%s564 + $0x8] sm:$0xf]
      %v1185 = vld [vmem:[%s564 + $0xc] sm:$0x1]
      %s1186 = scalar_lea.vmem %s1, 384
      %v1187 = vld [vmem:[%s1186] sm:$0xf]
      %v1188 = vld [vmem:[%s1186 + $0x4] sm:$0xf]
      %v1189 = vld [vmem:[%s1186 + $0x8] sm:$0xf]
      %v1190 = vld [vmem:[%s1186 + $0xc] sm:$0xf]
      %v1191 = vld [vmem:[%s1186 + $0x10] sm:$0xf]
      %v1192 = vld [vmem:[%s1186 + $0x14] sm:$0xf]
      %v1193 = vld [vmem:[%s1186 + $0x18] sm:$0xf]
      %v1194 = vld [vmem:[%s1186 + $0x1c] sm:$0xf]
      %v1199 = vunpack.c.l.b16 %v1182
      %v1200 = vunpack.c.l.b16 %v1183
      %v1201 = vunpack.c.l.b16 %v1184
      %v1202 = vunpack.c.l.b16 %v1185
      %v1203 = vpack.c.b16 %v1200, %v1199
      %v1204 = vpack.c.b16 %v1202, %v1201
      %v1206 = vshrl.u32 %v1203, 16
      %v1208 = vrot.slane %v1206, 2
      %v1209 = vshll.u32 %v1203, 16
      %v1211 = vrot.slane %v1209, 3
      %v1212 = vor.u32 %v1208, %v1211
      %v1214 = vshrl.u32 %v1204, 16
      %v1216 = vrot.slane %v1214, 2
      %v1217 = vshll.u32 %v1204, 16
      %v1219 = vrot.slane %v1217, 3
      %v1220 = vor.u32 %v1216, %v1219
      %v1221 = vsel %vm887, %v1212, %v1220
      %v1230 = vunpack.c.l.b16 %v1187
      %v1231 = vunpack.c.l.b16 %v1188
      %v1232 = vunpack.c.l.b16 %v1189
      %v1233 = vunpack.c.l.b16 %v1190
      %v1234 = vunpack.c.l.b16 %v1191
      %v1235 = vunpack.c.l.b16 %v1192
      %v1236 = vunpack.c.l.b16 %v1193
      %v1237 = vunpack.c.l.b16 %v1194
      %v1238 = vpack.c.b16 %v1231, %v1230
      %v1239 = vpack.c.b16 %v1233, %v1232
      %v1240 = vpack.c.b16 %v1235, %v1234
      %v1241 = vpack.c.b16 %v1237, %v1236
      %v1247 = vsel %vm326, %v1221, 0
      %v1250 = vsel %vm326, %v1220, 0
      %1252 = vmatpush.bf16.msra.mxu0 0
      %1253 = vmatpush.bf16.msra.mxu0 0
      %1254 = vmatpush.bf16.msra.mxu0 0
      %1255 = vmatpush.bf16.msra.mxu0 0
      %1256 = vmatpush.bf16.msra.mxu0 %v1241
      %1257 = vmatpush.bf16.msra.mxu0 %v1240
      %1258 = vmatpush.bf16.msra.mxu0 %v1239
      %1259 = vmatpush.bf16.msra.mxu0 %v1238
      %1260 = vmatmul.bf16.gmra.mxu0 %v1247
      %v1261 = vpop.f32.mrf.mxu0
      %v1262 = vadd.f32 0.0, %v1261
      %v1263 = vpop.f32.mrf.mxu0
      %v1264 = vadd.f32 0.0, %v1263
      %1265 = vmatmul.bf16.gmra.mxu0 %v1250
      %v1266 = vpop.f32.mrf.mxu0
      %v1267 = vadd.f32 0.0, %v1266
      %v1268 = vpop.f32.mrf.mxu0
      %1269 = vdwg.mxu0
      %v1270 = vadd.f32 %v1179, %v1262
      %v1271 = vadd.f32 %v1180, %v1264
      %v1272 = vadd.f32 %v1181, %v1267
      %v1273 = vld [vmem:[%s636] sm:$0xc]
      %v1274 = vld [vmem:[%s636 + $0x4] sm:$0xf]
      %v1275 = vld [vmem:[%s636 + $0x8] sm:$0xf]
      %v1276 = vld [vmem:[%s636 + $0xc] sm:$0x1]
      %s1277 = scalar_lea.vmem %s1, 416
      %v1278 = vld [vmem:[%s1277] sm:$0xf]
      %v1279 = vld [vmem:[%s1277 + $0x4] sm:$0xf]
      %v1280 = vld [vmem:[%s1277 + $0x8] sm:$0xf]
      %v1281 = vld [vmem:[%s1277 + $0xc] sm:$0xf]
      %v1282 = vld [vmem:[%s1277 + $0x10] sm:$0xf]
      %v1283 = vld [vmem:[%s1277 + $0x14] sm:$0xf]
      %v1284 = vld [vmem:[%s1277 + $0x18] sm:$0xf]
      %v1285 = vld [vmem:[%s1277 + $0x1c] sm:$0xf]
      %v1290 = vunpack.c.l.b16 %v1273
      %v1291 = vunpack.c.l.b16 %v1274
      %v1292 = vunpack.c.l.b16 %v1275
      %v1293 = vunpack.c.l.b16 %v1276
      %v1294 = vpack.c.b16 %v1291, %v1290
      %v1295 = vpack.c.b16 %v1293, %v1292
      %v1297 = vshrl.u32 %v1294, 16
      %v1299 = vrot.slane %v1297, 2
      %v1300 = vshll.u32 %v1294, 16
      %v1302 = vrot.slane %v1300, 3
      %v1303 = vor.u32 %v1299, %v1302
      %v1305 = vshrl.u32 %v1295, 16
      %v1307 = vrot.slane %v1305, 2
      %v1308 = vshll.u32 %v1295, 16
      %v1310 = vrot.slane %v1308, 3
      %v1311 = vor.u32 %v1307, %v1310
      %v1312 = vsel %vm887, %v1303, %v1311
      %v1321 = vunpack.c.l.b16 %v1278
      %v1322 = vunpack.c.l.b16 %v1279
      %v1323 = vunpack.c.l.b16 %v1280
      %v1324 = vunpack.c.l.b16 %v1281
      %v1325 = vunpack.c.l.b16 %v1282
      %v1326 = vunpack.c.l.b16 %v1283
      %v1327 = vunpack.c.l.b16 %v1284
      %v1328 = vunpack.c.l.b16 %v1285
      %v1329 = vpack.c.b16 %v1322, %v1321
      %v1330 = vpack.c.b16 %v1324, %v1323
      %v1331 = vpack.c.b16 %v1326, %v1325
      %v1332 = vpack.c.b16 %v1328, %v1327
      %v1338 = vsel %vm326, %v1312, 0
      %v1341 = vsel %vm326, %v1311, 0
      %1343 = vmatpush.bf16.msra.mxu0 0
      %1344 = vmatpush.bf16.msra.mxu0 0
      %1345 = vmatpush.bf16.msra.mxu0 0
      %1346 = vmatpush.bf16.msra.mxu0 0
      %1347 = vmatpush.bf16.msra.mxu0 %v1332
      %1348 = vmatpush.bf16.msra.mxu0 %v1331
      %1349 = vmatpush.bf16.msra.mxu0 %v1330
      %1350 = vmatpush.bf16.msra.mxu0 %v1329
      %1351 = vmatmul.bf16.gmra.mxu0 %v1338
      %v1352 = vpop.f32.mrf.mxu0
      %v1353 = vadd.f32 0.0, %v1352
      %v1354 = vpop.f32.mrf.mxu0
      %v1355 = vadd.f32 0.0, %v1354
      %1356 = vmatmul.bf16.gmra.mxu0 %v1341
      %v1357 = vpop.f32.mrf.mxu0
      %v1358 = vadd.f32 0.0, %v1357
      %v1359 = vpop.f32.mrf.mxu0
      %1360 = vdwg.mxu0
      %v1361 = vadd.f32 %v1270, %v1353
      %v1362 = vadd.f32 %v1271, %v1355
      %v1363 = vadd.f32 %v1272, %v1358
      %v1364 = vld [vmem:[%s564] sm:$0x8]
      %s1365 = scalar_lea.vmem %s1, 448
      %v1366 = vld [vmem:[%s1365] sm:$0xf]
      %v1367 = vld [vmem:[%s1365 + $0x4] sm:$0xf]
      %v1368 = vld [vmem:[%s1365 + $0x8] sm:$0xf]
      %v1369 = vld [vmem:[%s1365 + $0xc] sm:$0xf]
      %v1370 = vld [vmem:[%s1365 + $0x10] sm:$0xf]
      %v1371 = vld [vmem:[%s1365 + $0x14] sm:$0xf]
      %v1372 = vld [vmem:[%s1365 + $0x18] sm:$0xf]
      %v1373 = vld [vmem:[%s1365 + $0x1c] sm:$0xf]
      %v1375 = vunpack.c.l.b16 %v1364
      %v1376 = vpack.c.b16 %v1200, %v1375
      %v1377 = vrot.slane %v1376, 3
      %v1378 = vrot.slane %v1204, 3
      %v1379 = vsel %vm1060, %v1377, %v1378
      %v1388 = vunpack.c.l.b16 %v1366
      %v1389 = vunpack.c.l.b16 %v1367
      %v1390 = vunpack.c.l.b16 %v1368
      %v1391 = vunpack.c.l.b16 %v1369
      %v1392 = vunpack.c.l.b16 %v1370
      %v1393 = vunpack.c.l.b16 %v1371
      %v1394 = vunpack.c.l.b16 %v1372
      %v1395 = vunpack.c.l.b16 %v1373
      %v1396 = vpack.c.b16 %v1389, %v1388
      %v1397 = vpack.c.b16 %v1391, %v1390
      %v1398 = vpack.c.b16 %v1393, %v1392
      %v1399 = vpack.c.b16 %v1395, %v1394
      %v1405 = vsel %vm326, %v1379, 0
      %v1408 = vsel %vm326, %v1378, 0
      %1410 = vmatpush.bf16.msra.mxu0 0
      %1411 = vmatpush.bf16.msra.mxu0 0
      %1412 = vmatpush.bf16.msra.mxu0 0
      %1413 = vmatpush.bf16.msra.mxu0 0
      %1414 = vmatpush.bf16.msra.mxu0 %v1399
      %1415 = vmatpush.bf16.msra.mxu0 %v1398
      %1416 = vmatpush.bf16.msra.mxu0 %v1397
      %1417 = vmatpush.bf16.msra.mxu0 %v1396
      %1418 = vmatmul.bf16.gmra.mxu0 %v1405
      %v1419 = vpop.f32.mrf.mxu0
      %v1420 = vadd.f32 0.0, %v1419
      %v1421 = vpop.f32.mrf.mxu0
      %v1422 = vadd.f32 0.0, %v1421
      %1423 = vmatmul.bf16.gmra.mxu0 %v1408
      %v1424 = vpop.f32.mrf.mxu0
      %v1425 = vadd.f32 0.0, %v1424
      %v1426 = vpop.f32.mrf.mxu0
      %1427 = vdwg.mxu0
      %v1428 = vadd.f32 %v1361, %v1420
      %v1429 = vadd.f32 %v1362, %v1422
      %v1430 = vadd.f32 %v1363, %v1425
      %v1431 = vld [vmem:[%s636] sm:$0x8]
      %s1432 = scalar_lea.vmem %s1, 480
      %v1433 = vld [vmem:[%s1432] sm:$0xf]
      %v1434 = vld [vmem:[%s1432 + $0x4] sm:$0xf]
      %v1435 = vld [vmem:[%s1432 + $0x8] sm:$0xf]
      %v1436 = vld [vmem:[%s1432 + $0xc] sm:$0xf]
      %v1437 = vld [vmem:[%s1432 + $0x10] sm:$0xf]
      %v1438 = vld [vmem:[%s1432 + $0x14] sm:$0xf]
      %v1439 = vld [vmem:[%s1432 + $0x18] sm:$0xf]
      %v1440 = vld [vmem:[%s1432 + $0x1c] sm:$0xf]
      %v1442 = vunpack.c.l.b16 %v1431
      %v1443 = vpack.c.b16 %v1291, %v1442
      %v1444 = vrot.slane %v1443, 3
      %v1445 = vrot.slane %v1295, 3
      %v1446 = vsel %vm1060, %v1444, %v1445
      %v1455 = vunpack.c.l.b16 %v1433
      %v1456 = vunpack.c.l.b16 %v1434
      %v1457 = vunpack.c.l.b16 %v1435
      %v1458 = vunpack.c.l.b16 %v1436
      %v1459 = vunpack.c.l.b16 %v1437
      %v1460 = vunpack.c.l.b16 %v1438
      %v1461 = vunpack.c.l.b16 %v1439
      %v1462 = vunpack.c.l.b16 %v1440
      %v1463 = vpack.c.b16 %v1456, %v1455
      %v1464 = vpack.c.b16 %v1458, %v1457
      %v1465 = vpack.c.b16 %v1460, %v1459
      %v1466 = vpack.c.b16 %v1462, %v1461
      %v1472 = vsel %vm326, %v1446, 0
      %v1475 = vsel %vm326, %v1445, 0
      %1477 = vmatpush.bf16.msra.mxu0 0
      %1478 = vmatpush.bf16.msra.mxu0 0
      %1479 = vmatpush.bf16.msra.mxu0 0
      %1480 = vmatpush.bf16.msra.mxu0 0
      %1481 = vmatpush.bf16.msra.mxu0 %v1466
      %1482 = vmatpush.bf16.msra.mxu0 %v1465
      %1483 = vmatpush.bf16.msra.mxu0 %v1464
      %1484 = vmatpush.bf16.msra.mxu0 %v1463
      %1485 = vmatmul.bf16.gmra.mxu0 %v1472
      %v1486 = vpop.f32.mrf.mxu0
      %v1487 = vadd.f32 0.0, %v1486
      %v1488 = vpop.f32.mrf.mxu0
      %v1489 = vadd.f32 0.0, %v1488
      %1490 = vmatmul.bf16.gmra.mxu0 %v1475
      %v1491 = vpop.f32.mrf.mxu0
      %v1492 = vadd.f32 0.0, %v1491
      %v1493 = vpop.f32.mrf.mxu0
      %1494 = vdwg.mxu0
      %v1495 = vadd.f32 %v1428, %v1487
      %v1496 = vadd.f32 %v1429, %v1489
      %v1497 = vadd.f32 %v1430, %v1492
      %v1498 = vld [vmem:[%s2] sm:$0x1]
      %v1500 = vperm.slane %v1498, 0
      %v1502 = vadd.f32 %v1495, %v1500
      %v1503 = vadd.f32 %v1496, %v1500
      %v1504 = vadd.f32 %v1497, %v1500
      %v1505 = vpack.c.bf16 %v1502, %v1502
      %v1506 = vpack.c.bf16 %v1503, %v1503
      %v1507 = vpack.c.bf16 %v1504, %v1504
      %1508 = vst [vmem:[%s262] sm:$0xf] %v1505
      %1509 = vst [vmem:[%s262 + $0x4] sm:$0xf] %v1506
      %1510 = vst [vmem:[%s262 + $0x8] sm:$0x3] %v1507
      %v1511 = vld [vmem:[%s3] sm:$0xff]
      %v1512 = vld [vmem:[%s3 + $0x8] sm:$0xff]
      %v1513 = vld [vmem:[%s3 + $0x10] sm:$0xf]
      %vm1514 = vcmp.gt.f32.partialorder %v1511, 0.5
      %vm1515 = vcmp.gt.f32.partialorder %v1512, 0.5
      %vm1516 = vcmp.gt.f32.partialorder %v1513, 0.5
      %v1517 = vsel %vm1514, 1, 0
      %v1518 = vsel %vm1515, 1, 0
      %v1519 = vsel %vm1516, 1, 0
      %1520 = vset.pattern.permute.xlu0 0
      %1521 = vperm.xlu0 %1520, %v1517
      %v1522 = vpop.permute.xlu0 %1521
      %1523 = vset.pattern.permute.xlu0 0
      %1524 = vperm.xlu0 %1523, %v1518
      %v1525 = vpop.permute.xlu0 %1524
      %1526 = vset.pattern.permute.xlu0 0
      %1527 = vperm.xlu0 %1526, %v1519
      %v1528 = vpop.permute.xlu0 %1527
      %vm1529 = vcmp.eq.s32.totalorder %v1522, 1
      %vm1530 = vcmp.eq.s32.totalorder %v1525, 1
      %vm1531 = vcmp.eq.s32.totalorder %v1528, 1
      %v1532 = vsel %vm1529, %v1502, 0.0
      %v1533 = vsel %vm1530, %v1503, 0.0
      %v1534 = vsel %vm1531, %v1504, 0.0
      %v1535 = vadd.f32 %v1532, %v1533
      %vm1536 = vcmask 1043456
      %v1537 = vsel %vm1536, %v1534, 0.0
      %v1538 = vadd.f32 %v1535, %v1537
      %v1539 = vrot.slane %v1538, 4
      %v1540 = vadd.f32 %v1538, %v1539
      %v1541 = vrot.slane %v1540, 2
      %v1542 = vadd.f32 %v1540, %v1541
      %v1543 = vrot.slane %v1542, 1
      %v1544 = vadd.f32 %v1542, %v1543
      %1545 = vst [vmem:[%s265] sm:$0x1] %v1544
      %v1546 = vmul.f32 %v1532, %v1532
      %v1547 = vmul.f32 %v1533, %v1533
      %v1548 = vmul.f32 %v1534, %v1534
      %v1549 = vadd.f32 %v1546, %v1547
      %v1550 = vsel %vm1536, %v1548, 0.0
      %v1551 = vadd.f32 %v1549, %v1550
      %v1552 = vrot.slane %v1551, 4
      %v1553 = vadd.f32 %v1551, %v1552
      %v1554 = vrot.slane %v1553, 2
      %v1555 = vadd.f32 %v1553, %v1554
      %v1556 = vrot.slane %v1555, 1
      %v1557 = vadd.f32 %v1555, %v1556
      %1558 = vst [vmem:[%s268] sm:$0x1] %v1557
      %p1559 = scmp.lt.s32.totalorder %s18, 1
      %s1560 = scalar_select %p1559, %s18, 1
      %s1561 = smul.addr %s1560, 3
      %s1562 = smul.addr %s1561, 4
      %s1563 = scalar_lea.vmem %s4, %s1562
      %p1564 = scmp.lt.s32.totalorder %s18, 1
      %s1565 = scalar_select %p1564, %s18, 1
      %s1566 = scalar_lea.vmem %s5, %s1565
      %p1567 = scmp.lt.s32.totalorder %s18, 1
      %s1568 = scalar_select %p1567, %s18, 1
      %s1569 = scalar_lea.vmem %s6, %s1568
      // Predicated region
      $region37: #{discriminator_forward.5} parent=35 // pred_check
        %p1570 = pneg %p125
      $region38: #{discriminator_forward.5} parent=35 // pred_check_branch
        %1572 = sbr.rel (%p1570) target = $region40
      $region39: #{discriminator_forward.5} parent=35 // pred_region
        _
      $region40: #{discriminator_forward.5} parent=35 // pred_fallthru
        _
      // Predicated region
      $region41: #{discriminator_forward.5} parent=35 // pred_check
        %p1573 = pneg %p151
      $region42: #{discriminator_forward.5} parent=35 // pred_check_branch
        %1575 = sbr.rel (%p1573) target = $region44
      $region43: #{discriminator_forward.5} parent=35 // pred_region
        _
      $region44: #{discriminator_forward.5} parent=35 // pred_fallthru
        _
      // Predicated region
      $region45: #{discriminator_forward.5} parent=35 // pred_check
        %p1576 = pneg %p177
      $region46: #{discriminator_forward.5} parent=35 // pred_check_branch
        %1578 = sbr.rel (%p1576) target = $region48
      $region47: #{discriminator_forward.5} parent=35 // pred_region
        _
      $region48: #{discriminator_forward.5} parent=35 // pred_fallthru
        _
    $region36: #{discriminator_forward.5} parent=5 // pred_fallthru
      _
    %p1579 = scmp.le.s32.totalorder 2, %s13
    // Predicated region
    $region49: #{discriminator_forward.5} parent=5 // pred_check
      %p1580 = pneg %p1579
    $region50: #{discriminator_forward.5} parent=5 // pred_check_branch
      %1582 = sbr.rel (%p1580) target = $region52
    $region51: #{discriminator_forward.5} parent=5 // pred_region
      %s1583 = ssub.s32 %s13, 2
      // Predicated region
      $region53: #{discriminator_forward.5} parent=51 // pred_check
        %p1584 = pneg %p131
      $region54: #{discriminator_forward.5} parent=51 // pred_check_branch
        %1586 = sbr.rel (%p1584) target = $region56
      $region55: #{discriminator_forward.5} parent=51 // pred_region
        %p1587 = scmp.lt.s32.totalorder %s19, 1
        %s1588 = scalar_select %p1587, %s19, 1
        %s1589 = smul.addr %s1588, 3
        %s1590 = smul.addr %s1589, 4
        %s1591 = scalar_lea.vmem %s4, %s1590
      $region56: #{discriminator_forward.5} parent=51 // pred_fallthru
        _
      // Predicated region
      $region57: #{discriminator_forward.5} parent=51 // pred_check
        %p1592 = pneg %p157
      $region58: #{discriminator_forward.5} parent=51 // pred_check_branch
        %1594 = sbr.rel (%p1592) target = $region60
      $region59: #{discriminator_forward.5} parent=51 // pred_region
        %p1595 = scmp.lt.s32.totalorder %s19, 1
        %s1596 = scalar_select %p1595, %s19, 1
        %s1597 = scalar_lea.vmem %s5, %s1596
      $region60: #{discriminator_forward.5} parent=51 // pred_fallthru
        _
      // Predicated region
      $region61: #{discriminator_forward.5} parent=51 // pred_check
        %p1598 = pneg %p183
      $region62: #{discriminator_forward.5} parent=51 // pred_check_branch
        %1600 = sbr.rel (%p1598) target = $region64
      $region63: #{discriminator_forward.5} parent=51 // pred_region
        %p1601 = scmp.lt.s32.totalorder %s19, 1
        %s1602 = scalar_select %p1601, %s19, 1
        %s1603 = scalar_lea.vmem %s6, %s1602
      $region64: #{discriminator_forward.5} parent=51 // pred_fallthru
        _
    $region52: #{discriminator_forward.5} parent=5 // pred_fallthru
      _
  $region6: #{discriminator_forward.5} parent=0 // loop_footer
    %s17 = sadd.s32 1, %s13
  $region7: #{discriminator_forward.5} parent=0 // loop_footer_branch
    %12 = sbr.rel target = $region3
  $region8: #{discriminator_forward.5} parent=0 // loop_exit
    _

// kernel: discriminator_forward.7
$region0: #{discriminator_forward.7}
  #allocation0 [shape = 'u32[]', space=smem, size = 0x4, offset = 0x4, fixed_abs, tag = 'smem constant byte address 0x4 - core index']
  #allocation1 [shape = 'u32[72,128]{1,0:T(1,128)}', space=vmem, size = 0x9000, scoped, tag = 'internal scratch']
  %s0 = inlined_call_operand.vmem [shape: bf16[2,42,128], index: 0, kind: input, shape index: {}]
  %s1 = inlined_call_operand.vmem [shape: bf16[4,4,128,128], index: 1, kind: input, shape index: {}]
  %s2 = inlined_call_operand.vmem [shape: f32[1,128], index: 2, kind: input, shape index: {}]
  %s3 = inlined_call_operand.vmem [shape: bf16[2,18,128], index: 3, kind: output, shape index: {}]
  %s4 = sld [smem:[#allocation0]]
  $region45: #{discriminator_forward.7} parent=0
    _
  %s6 = ssub.s32 1, %s4
  %s7 = scalar_select 0, %s6, %s4
  loop: start=0, step=1, limit=4
  $region2: #{discriminator_forward.7} parent=0 // loop_pre_header
    _
  $region3: #{discriminator_forward.7} parent=0 // loop_header
    %s9 = sphi 0, %s13
    %p10 = scmp.ge.s32.totalorder %s9, 4
    %s19 = sphi 0, %s21
    %s22 = sphi 0, %s19
    %s23 = sphi 0, %s22
    %s39 = sphi 0, %s23
    %s43 = sphi 0, %s43
    %s45 = sphi 0, %s43
    %s46 = sphi 0, %s45
    %s60 = sphi 0, %s46
    %s64 = sphi 0, %s64
    %s66 = sphi 0, %s64
    %s67 = sphi 0, %s66
    %s81 = sphi 0, %s67
    %s87 = sphi 0, %s89
    %s90 = sphi 0, %s87
    %s91 = sphi 0, %s90
    %s107 = sphi 0, %s91
  $region4: #{discriminator_forward.7} parent=0 // loop_header_branch
    %12 = sbr.rel (%p10) target = $region8
  $region5: #{discriminator_forward.7} parent=0 // loop_body
    %s14 = ssub.s32 %s9, 1
    %s15 = ssub.s32 %s9, 2
    %s16 = sadd.s32 %s9, 1
    %s17 = ssub.s32 %s9, %s16
    %p18 = scmp.eq.s32.totalorder %s17, 0
    %s20 = sadd.s32 %s19, 1
    %s21 = scalar_select %p18, %s19, %s20
    %p24 = pneg %p18
    %p25 = scmp.eq.s32.totalorder %s9, 1
    %p26 = por %p24, %p25
    %p27 = scmp.ne.s32.totalorder %s19, %s22
    %p28 = scmp.eq.s32.totalorder %s9, 0
    %p29 = por %p27, %p28
    %p30 = scmp.ne.s32.totalorder %s19, %s22
    %p31 = scmp.eq.s32.totalorder %s14, 1
    %p32 = por %p30, %p31
    %p33 = scmp.ne.s32.totalorder %s22, %s23
    %p34 = scmp.eq.s32.totalorder %s14, 0
    %p35 = por %p33, %p34
    %p36 = scmp.ne.s32.totalorder %s22, %s23
    %p37 = scmp.eq.s32.totalorder %s15, 1
    %p38 = por %p36, %p37
    %p40 = scmp.ne.s32.totalorder %s23, %s39
    %p41 = scmp.eq.s32.totalorder %s15, 0
    %p42 = por %p40, %p41
    %s44 = sadd.s32 %s43, 1
    %p47 = scmp.eq.s32.totalorder %s9, 1
    %p48 = scmp.ne.s32.totalorder %s43, %s45
    %p49 = scmp.eq.s32.totalorder %s9, 0
    %p50 = por %p48, %p49
    %p51 = scmp.ne.s32.totalorder %s43, %s45
    %p52 = scmp.eq.s32.totalorder %s14, 1
    %p53 = por %p51, %p52
    %p54 = scmp.ne.s32.totalorder %s45, %s46
    %p55 = scmp.eq.s32.totalorder %s14, 0
    %p56 = por %p54, %p55
    %p57 = scmp.ne.s32.totalorder %s45, %s46
    %p58 = scmp.eq.s32.totalorder %s15, 1
    %p59 = por %p57, %p58
    %p61 = scmp.ne.s32.totalorder %s46, %s60
    %p62 = scmp.eq.s32.totalorder %s15, 0
    %p63 = por %p61, %p62
    %s65 = sadd.s32 %s64, 1
    %p68 = scmp.eq.s32.totalorder %s9, 1
    %p69 = scmp.ne.s32.totalorder %s64, %s66
    %p70 = scmp.eq.s32.totalorder %s9, 0
    %p71 = por %p69, %p70
    %p72 = scmp.ne.s32.totalorder %s64, %s66
    %p73 = scmp.eq.s32.totalorder %s14, 1
    %p74 = por %p72, %p73
    %p75 = scmp.ne.s32.totalorder %s66, %s67
    %p76 = scmp.eq.s32.totalorder %s14, 0
    %p77 = por %p75, %p76
    %p78 = scmp.ne.s32.totalorder %s66, %s67
    %p79 = scmp.eq.s32.totalorder %s15, 1
    %p80 = por %p78, %p79
    %p82 = scmp.ne.s32.totalorder %s67, %s81
    %p83 = scmp.eq.s32.totalorder %s15, 0
    %p84 = por %p82, %p83
    %s85 = ssub.s32 %s9, %s16
    %p86 = scmp.eq.s32.totalorder %s85, 0
    %s88 = sadd.s32 %s87, 1
    %s89 = scalar_select %p86, %s87, %s88
    %p92 = pneg %p86
    %p93 = scmp.eq.s32.totalorder %s9, 1
    %p94 = por %p92, %p93
    %p95 = scmp.ne.s32.totalorder %s87, %s90
    %p96 = scmp.eq.s32.totalorder %s9, 0
    %p97 = por %p95, %p96
    %p98 = scmp.ne.s32.totalorder %s87, %s90
    %p99 = scmp.eq.s32.totalorder %s14, 1
    %p100 = por %p98, %p99
    %p101 = scmp.ne.s32.totalorder %s90, %s91
    %p102 = scmp.eq.s32.totalorder %s14, 0
    %p103 = por %p101, %p102
    %p104 = scmp.ne.s32.totalorder %s90, %s91
    %p105 = scmp.eq.s32.totalorder %s15, 1
    %p106 = por %p104, %p105
    %p108 = scmp.ne.s32.totalorder %s91, %s107
    %p109 = scmp.eq.s32.totalorder %s15, 0
    %p110 = por %p108, %p109
    %p111 = scmp.le.s32.totalorder 1, %s9
    %p112 = scmp.lt.s32.totalorder %s9, 3
    %p113 = pnand %p111, %p112
    %p114 = pneg %p113
    // Predicated region
    $region9: #{discriminator_forward.7} parent=5 // pred_check
      _
    $region10: #{discriminator_forward.7} parent=5 // pred_check_branch
      %116 = sbr.rel (%p113) target = $region12
    $region11: #{discriminator_forward.7} parent=5 // pred_region
      %s117 = ssub.s32 %s9, 1
      // Predicated region
      $region13: #{discriminator_forward.7} parent=11 // pred_check
        %p118 = pneg %p56
      $region14: #{discriminator_forward.7} parent=11 // pred_check_branch
        %120 = sbr.rel (%p118) target = $region16
      $region15: #{discriminator_forward.7} parent=11 // pred_region
        _
      $region16: #{discriminator_forward.7} parent=11 // pred_fallthru
        _
      // Predicated region
      $region17: #{discriminator_forward.7} parent=11 // pred_check
        %p121 = pneg %p77
      $region18: #{discriminator_forward.7} parent=11 // pred_check_branch
        %123 = sbr.rel (%p121) target = $region20
      $region19: #{discriminator_forward.7} parent=11 // pred_region
        _
      $region20: #{discriminator_forward.7} parent=11 // pred_fallthru
        _
    $region12: #{discriminator_forward.7} parent=5 // pred_fallthru
      _
    %p124 = scmp.lt.s32.totalorder %s9, 2
    // Predicated region
    $region21: #{discriminator_forward.7} parent=5 // pred_check
      %p125 = pneg %p124
    $region22: #{discriminator_forward.7} parent=5 // pred_check_branch
      %127 = sbr.rel (%p125) target = $region24
    $region23: #{discriminator_forward.7} parent=5 // pred_region
      // Predicated region
      $region25: #{discriminator_forward.7} parent=23 // pred_check
        %p128 = pneg %p29
      $region26: #{discriminator_forward.7} parent=23 // pred_check_branch
        %130 = sbr.rel (%p128) target = $region28
      $region27: #{discriminator_forward.7} parent=23 // pred_region
        %p131 = scmp.lt.s32.totalorder %s9, 1
        %s132 = scalar_select %p131, %s9, 1
        %s133 = smul.addr %s132, 6
        %s134 = smul.addr %s133, 4
        %s135 = scalar_lea.vmem %s0, %s134
      $region28: #{discriminator_forward.7} parent=23 // pred_fallthru
        _
    $region24: #{discriminator_forward.7} parent=5 // pred_fallthru
      _
    %p136 = scmp.le.s32.totalorder 1, %s9
    %p137 = scmp.lt.s32.totalorder %s9, 3
    %p138 = pnand %p136, %p137
    %p139 = pneg %p138
    // Predicated region
    $region29: #{discriminator_forward.7} parent=5 // pred_check
      _
    $region30: #{discriminator_forward.7} parent=5 // pred_check_branch
      %141 = sbr.rel (%p138) target = $region32
    $region31: #{discriminator_forward.7} parent=5 // pred_region
      %s142 = ssub.s32 %s9, 1
      %p143 = scmp.lt.s32.totalorder %s14, 1
      %s144 = scalar_select %p143, %s14, 1
      %s145 = smul.addr %s144, 6
      %s146 = smul.addr %s145, 4
      %s147 = scalar_lea.vmem %s0, %s146
      %p148 = pneg %p35
      %p149 = pneg %p32
      %p150 = pneg %p56
      %p151 = pneg %p53
      %p152 = pneg %p77
      %p153 = pneg %p74
      %p154 = pneg %p103
      %p155 = pneg %p100
      %p156 = scmp.lt.s32.totalorder %s14, 1
      %s157 = scalar_select %p156, %s14, 1
      %s158 = smul.addr %s157, 3
      %s159 = smul.addr %s158, 4
      %s160 = scalar_lea.vmem %s3, %s159
      %p161 = scmp.lt.s32.totalorder %s14, 1
      %s162 = scalar_select %p161, %s14, 1
      %s163 = smul.addr %s162, 6
      %s164 = smul.addr %s163, 4
      %s165 = scalar_lea.vmem %s0, %s164
      %p166 = scmp.lt.s32.totalorder %s14, 1
      %s167 = scalar_select %p166, %s14, 1
      %s168 = smul.addr %s167, 3
      %s169 = smul.addr %s168, 4
      %s170 = scalar_lea.vmem %s3, %s169
      %v171 = vld [vmem:[%s165] sm:$0xf]
      %v172 = vld [vmem:[%s165 + $0x4] sm:$0xf]
      %v173 = vld [vmem:[%s165 + $0x8] sm:$0x1]
      %v174 = vld [vmem:[%s1] sm:$0xf]
      %v175 = vld [vmem:[%s1 + $0x4] sm:$0xf]
      %v176 = vld [vmem:[%s1 + $0x8] sm:$0xf]
      %v177 = vld [vmem:[%s1 + $0xc] sm:$0xf]
      %v178 = vld [vmem:[%s1 + $0x10] sm:$0xf]
      %v179 = vld [vmem:[%s1 + $0x14] sm:$0xf]
      %v180 = vld [vmem:[%s1 + $0x18] sm:$0xf]
      %v181 = vld [vmem:[%s1 + $0x1c] sm:$0xf]
      %v182 = vld [vmem:[%s1 + $0x20] sm:$0xf]
      %v183 = vld [vmem:[%s1 + $0x24] sm:$0xf]
      %v184 = vld [vmem:[%s1 + $0x28] sm:$0xf]
      %v185 = vld [vmem:[%s1 + $0x2c] sm:$0xf]
      %v186 = vld [vmem:[%s1 + $0x30] sm:$0xf]
      %v187 = vld [vmem:[%s1 + $0x34] sm:$0xf]
      %v188 = vld [vmem:[%s1 + $0x38] sm:$0xf]
      %v189 = vld [vmem:[%s1 + $0x3c] sm:$0xf]
      %v190 = vld [vmem:[%s165 + $0x8] sm:$0x3]
      %s191 = scalar_lea.vmem %s1, 64
      %v192 = vld [vmem:[%s191] sm:$0xf]
      %v193 = vld [vmem:[%s191 + $0x4] sm:$0xf]
      %v194 = vld [vmem:[%s191 + $0x8] sm:$0xf]
      %v195 = vld [vmem:[%s191 + $0xc] sm:$0xf]
      %v196 = vld [vmem:[%s191 + $0x10] sm:$0xf]
      %v197 = vld [vmem:[%s191 + $0x14] sm:$0xf]
      %v198 = vld [vmem:[%s191 + $0x18] sm:$0xf]
      %v199 = vld [vmem:[%s191 + $0x1c] sm:$0xf]
      %v200 = vld [vmem:[%s191 + $0x20] sm:$0xf]
      %v201 = vld [vmem:[%s191 + $0x24] sm:$0xf]
      %v202 = vld [vmem:[%s191 + $0x28] sm:$0xf]
      %v203 = vld [vmem:[%s191 + $0x2c] sm:$0xf]
      %v204 = vld [vmem:[%s191 + $0x30] sm:$0xf]
      %v205 = vld [vmem:[%s191 + $0x34] sm:$0xf]
      %v206 = vld [vmem:[%s191 + $0x38] sm:$0xf]
      %v207 = vld [vmem:[%s191 + $0x3c] sm:$0xf]
      %v211 = vunpack.c.l.b16 %v171
      %v212 = vunpack.c.l.b16 %v172
      %v213 = vunpack.c.l.b16 %v190
      %v214 = vpack.c.b16 %v212, %v211
      %v215 = vpack.c.b16 %v213, %v213
      %vm216 = vsmask.f32 7424
      %v218 = vshrl.u32 %v214, 16
      %v220 = vshll.u32 %v214, 16
      %v222 = vrot.slane %v220, 1
      %v223 = vor.u32 %v218, %v222
      %v225 = vshll.u32 %v215, 16
      %v227 = vrot.slane %v225, 1
      %v228 = vsel %vm216, %v223, %v227
      %v229 = vshrl.u32 %v215, 16
      %v231 = vor.u32 %v229, %v227
      %v250 = vunpack.c.l.b16 %v192
      %v251 = vunpack.c.l.b16 %v193
      %v252 = vunpack.c.l.b16 %v194
      %v253 = vunpack.c.l.b16 %v195
      %v254 = vunpack.c.l.b16 %v196
      %v255 = vunpack.c.l.b16 %v197
      %v256 = vunpack.c.l.b16 %v198
      %v257 = vunpack.c.l.b16 %v199
      %v258 = vunpack.c.l.b16 %v200
      %v259 = vunpack.c.l.b16 %v201
      %v260 = vunpack.c.l.b16 %v202
      %v261 = vunpack.c.l.b16 %v203
      %v262 = vunpack.c.l.b16 %v204
      %v263 = vunpack.c.l.b16 %v205
      %v264 = vunpack.c.l.b16 %v206
      %v265 = vunpack.c.l.b16 %v207
      %v266 = vpack.c.b16 %v251, %v250
      %v267 = vpack.c.b16 %v253, %v252
      %v268 = vpack.c.b16 %v255, %v254
      %v269 = vpack.c.b16 %v257, %v256
      %v270 = vpack.c.b16 %v259, %v258
      %v271 = vpack.c.b16 %v261, %v260
      %v272 = vpack.c.b16 %v263, %v262
      %v273 = vpack.c.b16 %v265, %v264
      %282 = vmatpush.bf16.msra.mxu0 %v273
      %283 = vmatpush.bf16.msra.mxu0 %v272
      %284 = vmatpush.bf16.msra.mxu0 %v271
      %285 = vmatpush.bf16.msra.mxu0 %v270
      %286 = vmatpush.bf16.msra.mxu0 %v269
      %287 = vmatpush.bf16.msra.mxu0 %v268
      %288 = vmatpush.bf16.msra.mxu0 %v267
      %289 = vmatpush.bf16.msra.mxu0 %v266
      %290 = vmatmul.bf16.gmra.mxu0 %v228
      %v291 = vpop.f32.mrf.mxu0
      %v292 = vadd.f32 0.0, %v291
      %v293 = vpop.f32.mrf.mxu0
      %v294 = vadd.f32 0.0, %v293
      %295 = vmatmul.bf16.gmra.mxu0 %v231
      %v296 = vpop.f32.mrf.mxu0
      %v297 = vadd.f32 0.0, %v296
      %v298 = vpop.f32.mrf.mxu0
      %299 = vdwg.mxu0
      %v301 = vunpack.c.l.b16 %v173
      %v302 = vpack.c.b16 %v301, %v301
      %v321 = vunpack.c.l.b16 %v174
      %v322 = vunpack.c.l.b16 %v175
      %v323 = vunpack.c.l.b16 %v176
      %v324 = vunpack.c.l.b16 %v177
      %v325 = vunpack.c.l.b16 %v178
      %v326 = vunpack.c.l.b16 %v179
      %v327 = vunpack.c.l.b16 %v180
      %v328 = vunpack.c.l.b16 %v181
      %v329 = vunpack.c.l.b16 %v182
      %v330 = vunpack.c.l.b16 %v183
      %v331 = vunpack.c.l.b16 %v184
      %v332 = vunpack.c.l.b16 %v185
      %v333 = vunpack.c.l.b16 %v186
      %v334 = vunpack.c.l.b16 %v187
      %v335 = vunpack.c.l.b16 %v188
      %v336 = vunpack.c.l.b16 %v189
      %v337 = vpack.c.b16 %v322, %v321
      %v338 = vpack.c.b16 %v324, %v323
      %v339 = vpack.c.b16 %v326, %v325
      %v340 = vpack.c.b16 %v328, %v327
      %v341 = vpack.c.b16 %v330, %v329
      %v342 = vpack.c.b16 %v332, %v331
      %v343 = vpack.c.b16 %v334, %v333
      %v344 = vpack.c.b16 %v336, %v335
      %353 = vmatpush.bf16.msra.mxu0 %v344
      %354 = vmatpush.bf16.msra.mxu0 %v343
      %355 = vmatpush.bf16.msra.mxu0 %v342
      %356 = vmatpush.bf16.msra.mxu0 %v341
      %357 = vmatpush.bf16.msra.mxu0 %v340
      %358 = vmatpush.bf16.msra.mxu0 %v339
      %359 = vmatpush.bf16.msra.mxu0 %v338
      %360 = vmatpush.bf16.msra.mxu0 %v337
      %361 = vmatmul.bf16.gmra.mxu0 %v214
      %v362 = vpop.f32.mrf.mxu0
      %v363 = vadd.f32 %v292, %v362
      %v364 = vpop.f32.mrf.mxu0
      %v365 = vadd.f32 %v294, %v364
      %366 = vmatmul.bf16.gmra.mxu0 %v302
      %v367 = vpop.f32.mrf.mxu0
      %v368 = vadd.f32 %v297, %v367
      %v369 = vpop.f32.mrf.mxu0
      %370 = vdwg.mxu0
      %v371 = vld [vmem:[%s165] sm:$0xe]
      %s372 = scalar_lea.vmem %s1, 128
      %v373 = vld [vmem:[%s372] sm:$0xf]
      %v374 = vld [vmem:[%s372 + $0x4] sm:$0xf]
      %v375 = vld [vmem:[%s372 + $0x8] sm:$0xf]
      %v376 = vld [vmem:[%s372 + $0xc] sm:$0xf]
      %v377 = vld [vmem:[%s372 + $0x10] sm:$0xf]
      %v378 = vld [vmem:[%s372 + $0x14] sm:$0xf]
      %v379 = vld [vmem:[%s372 + $0x18] sm:$0xf]
      %v380 = vld [vmem:[%s372 + $0x1c] sm:$0xf]
      %v381 = vld [vmem:[%s372 + $0x20] sm:$0xf]
      %v382 = vld [vmem:[%s372 + $0x24] sm:$0xf]
      %v383 = vld [vmem:[%s372 + $0x28] sm:$0xf]
      %v384 = vld [vmem:[%s372 + $0x2c] sm:$0xf]
      %v385 = vld [vmem:[%s372 + $0x30] sm:$0xf]
      %v386 = vld [vmem:[%s372 + $0x34] sm:$0xf]
      %v387 = vld [vmem:[%s372 + $0x38] sm:$0xf]
      %v388 = vld [vmem:[%s372 + $0x3c] sm:$0xf]
      %v390 = vunpack.c.l.b16 %v371
      %v391 = vpack.c.b16 %v212, %v390
      %vm392 = vcmask 1046528
      %v393 = vrot.slane %v391, 1
      %v394 = vrot.slane %v215, 1
      %v395 = vsel %vm392, %v393, %v394
      %v414 = vunpack.c.l.b16 %v373
      %v415 = vunpack.c.l.b16 %v374
      %v416 = vunpack.c.l.b16 %v375
      %v417 = vunpack.c.l.b16 %v376
      %v418 = vunpack.c.l.b16 %v377
      %v419 = vunpack.c.l.b16 %v378
      %v420 = vunpack.c.l.b16 %v379
      %v421 = vunpack.c.l.b16 %v380
      %v422 = vunpack.c.l.b16 %v381
      %v423 = vunpack.c.l.b16 %v382
      %v424 = vunpack.c.l.b16 %v383
      %v425 = vunpack.c.l.b16 %v384
      %v426 = vunpack.c.l.b16 %v385
      %v427 = vunpack.c.l.b16 %v386
      %v428 = vunpack.c.l.b16 %v387
      %v429 = vunpack.c.l.b16 %v388
      %v430 = vpack.c.b16 %v415, %v414
      %v431 = vpack.c.b16 %v417, %v416
      %v432 = vpack.c.b16 %v419, %v418
      %v433 = vpack.c.b16 %v421, %v420
      %v434 = vpack.c.b16 %v423, %v422
      %v435 = vpack.c.b16 %v425, %v424
      %v436 = vpack.c.b16 %v427, %v426
      %v437 = vpack.c.b16 %v429, %v428
      %446 = vmatpush.bf16.msra.mxu0 %v437
      %447 = vmatpush.bf16.msra.mxu0 %v436
      %448 = vmatpush.bf16.msra.mxu0 %v435
      %449 = vmatpush.bf16.msra.mxu0 %v434
      %450 = vmatpush.bf16.msra.mxu0 %v433
      %451 = vmatpush.bf16.msra.mxu0 %v432
      %452 = vmatpush.bf16.msra.mxu0 %v431
      %453 = vmatpush.bf16.msra.mxu0 %v430
      %454 = vmatmul.bf16.gmra.mxu0 %v395
      %v455 = vpop.f32.mrf.mxu0
      %v456 = vadd.f32 0.0, %v455
      %v457 = vpop.f32.mrf.mxu0
      %v458 = vadd.f32 0.0, %v457
      %459 = vmatmul.bf16.gmra.mxu0 %v394
      %v460 = vpop.f32.mrf.mxu0
      %v461 = vadd.f32 0.0, %v460
      %v462 = vpop.f32.mrf.mxu0
      %463 = vdwg.mxu0
      %v464 = vadd.f32 %v363, %v456
      %v465 = vadd.f32 %v365, %v458
      %v466 = vadd.f32 %v368, %v461
      %v467 = vld [vmem:[%s165 + $0x8] sm:$0x7]
      %s468 = scalar_lea.vmem %s1, 192
      %v469 = vld [vmem:[%s468] sm:$0xf]
      %v470 = vld [vmem:[%s468 + $0x4] sm:$0xf]
      %v471 = vld [vmem:[%s468 + $0x8] sm:$0xf]
      %v472 = vld [vmem:[%s468 + $0xc] sm:$0xf]
      %v473 = vld [vmem:[%s468 + $0x10] sm:$0xf]
      %v474 = vld [vmem:[%s468 + $0x14] sm:$0xf]
      %v475 = vld [vmem:[%s468 + $0x18] sm:$0xf]
      %v476 = vld [vmem:[%s468 + $0x1c] sm:$0xf]
      %v477 = vld [vmem:[%s468 + $0x20] sm:$0xf]
      %v478 = vld [vmem:[%s468 + $0x24] sm:$0xf]
      %v479 = vld [vmem:[%s468 + $0x28] sm:$0xf]
      %v480 = vld [vmem:[%s468 + $0x2c] sm:$0xf]
      %v481 = vld [vmem:[%s468 + $0x30] sm:$0xf]
      %v482 = vld [vmem:[%s468 + $0x34] sm:$0xf]
      %v483 = vld [vmem:[%s468 + $0x38] sm:$0xf]
      %v484 = vld [vmem:[%s468 + $0x3c] sm:$0xf]
      %v486 = vunpack.c.l.b16 %v467
      %v487 = vpack.c.b16 %v486, %v486
      %vm488 = vsmask.f32 6400
      %v490 = vshrl.u32 %v391, 16
      %v492 = vrot.slane %v490, 1
      %v493 = vshll.u32 %v391, 16
      %v495 = vrot.slane %v493, 2
      %v496 = vor.u32 %v492, %v495
      %v498 = vshrl.u32 %v487, 16
      %v500 = vrot.slane %v498, 1
      %v501 = vshll.u32 %v487, 16
      %v503 = vrot.slane %v501, 2
      %v504 = vor.u32 %v500, %v503
      %v505 = vsel %vm488, %v496, %v504
      %v524 = vunpack.c.l.b16 %v469
      %v525 = vunpack.c.l.b16 %v470
      %v526 = vunpack.c.l.b16 %v471
      %v527 = vunpack.c.l.b16 %v472
      %v528 = vunpack.c.l.b16 %v473
      %v529 = vunpack.c.l.b16 %v474
      %v530 = vunpack.c.l.b16 %v475
      %v531 = vunpack.c.l.b16 %v476
      %v532 = vunpack.c.l.b16 %v477
      %v533 = vunpack.c.l.b16 %v478
      %v534 = vunpack.c.l.b16 %v479
      %v535 = vunpack.c.l.b16 %v480
      %v536 = vunpack.c.l.b16 %v481
      %v537 = vunpack.c.l.b16 %v482
      %v538 = vunpack.c.l.b16 %v483
      %v539 = vunpack.c.l.b16 %v484
      %v540 = vpack.c.b16 %v525, %v524
      %v541 = vpack.c.b16 %v527, %v526
      %v542 = vpack.c.b16 %v529, %v528
      %v543 = vpack.c.b16 %v531, %v530
      %v544 = vpack.c.b16 %v533, %v532
      %v545 = vpack.c.b16 %v535, %v534
      %v546 = vpack.c.b16 %v537, %v536
      %v547 = vpack.c.b16 %v539, %v538
      %556 = vmatpush.bf16.msra.mxu0 %v547
      %557 = vmatpush.bf16.msra.mxu0 %v546
      %558 = vmatpush.bf16.msra.mxu0 %v545
      %559 = vmatpush.bf16.msra.mxu0 %v544
      %560 = vmatpush.bf16.msra.mxu0 %v543
      %561 = vmatpush.bf16.msra.mxu0 %v542
      %562 = vmatpush.bf16.msra.mxu0 %v541
      %563 = vmatpush.bf16.msra.mxu0 %v540
      %564 = vmatmul.bf16.gmra.mxu0 %v505
      %v565 = vpop.f32.mrf.mxu0
      %v566 = vadd.f32 0.0, %v565
      %v567 = vpop.f32.mrf.mxu0
      %v568 = vadd.f32 0.0, %v567
      %569 = vmatmul.bf16.gmra.mxu0 %v504
      %v570 = vpop.f32.mrf.mxu0
      %v571 = vadd.f32 0.0, %v570
      %v572 = vpop.f32.mrf.mxu0
      %573 = vdwg.mxu0
      %v574 = vadd.f32 %v464, %v566
      %v575 = vadd.f32 %v465, %v568
      %v576 = vadd.f32 %v466, %v571
      %v577 = vld [vmem:[%s165] sm:$0x8]
      %v578 = vld [vmem:[%s165 + $0x8] sm:$0xf]
      %s579 = scalar_lea.vmem %s1, 256
      %v580 = vld [vmem:[%s579] sm:$0xf]
      %v581 = vld [vmem:[%s579 + $0x4] sm:$0xf]
      %v582 = vld [vmem:[%s579 + $0x8] sm:$0xf]
      %v583 = vld [vmem:[%s579 + $0xc] sm:$0xf]
      %v584 = vld [vmem:[%s579 + $0x10] sm:$0xf]
      %v585 = vld [vmem:[%s579 + $0x14] sm:$0xf]
      %v586 = vld [vmem:[%s579 + $0x18] sm:$0xf]
      %v587 = vld [vmem:[%s579 + $0x1c] sm:$0xf]
      %v588 = vld [vmem:[%s579 + $0x20] sm:$0xf]
      %v589 = vld [vmem:[%s579 + $0x24] sm:$0xf]
      %v590 = vld [vmem:[%s579 + $0x28] sm:$0xf]
      %v591 = vld [vmem:[%s579 + $0x2c] sm:$0xf]
      %v592 = vld [vmem:[%s579 + $0x30] sm:$0xf]
      %v593 = vld [vmem:[%s579 + $0x34] sm:$0xf]
      %v594 = vld [vmem:[%s579 + $0x38] sm:$0xf]
      %v595 = vld [vmem:[%s579 + $0x3c] sm:$0xf]
      %v598 = vunpack.c.l.b16 %v577
      %v599 = vunpack.c.l.b16 %v578
      %v600 = vpack.c.b16 %v212, %v598
      %v601 = vpack.c.b16 %v599, %v599
      %vm602 = vcmask 1044480
      %v603 = vrot.slane %v600, 3
      %v604 = vrot.slane %v601, 3
      %v605 = vsel %vm602, %v603, %v604
      %v624 = vunpack.c.l.b16 %v580
      %v625 = vunpack.c.l.b16 %v581
      %v626 = vunpack.c.l.b16 %v582
      %v627 = vunpack.c.l.b16 %v583
      %v628 = vunpack.c.l.b16 %v584
      %v629 = vunpack.c.l.b16 %v585
      %v630 = vunpack.c.l.b16 %v586
      %v631 = vunpack.c.l.b16 %v587
      %v632 = vunpack.c.l.b16 %v588
      %v633 = vunpack.c.l.b16 %v589
      %v634 = vunpack.c.l.b16 %v590
      %v635 = vunpack.c.l.b16 %v591
      %v636 = vunpack.c.l.b16 %v592
      %v637 = vunpack.c.l.b16 %v593
      %v638 = vunpack.c.l.b16 %v594
      %v639 = vunpack.c.l.b16 %v595
      %v640 = vpack.c.b16 %v625, %v624
      %v641 = vpack.c.b16 %v627, %v626
      %v642 = vpack.c.b16 %v629, %v628
      %v643 = vpack.c.b16 %v631, %v630
      %v644 = vpack.c.b16 %v633, %v632
      %v645 = vpack.c.b16 %v635, %v634
      %v646 = vpack.c.b16 %v637, %v636
      %v647 = vpack.c.b16 %v639, %v638
      %656 = vmatpush.bf16.msra.mxu0 %v647
      %657 = vmatpush.bf16.msra.mxu0 %v646
      %658 = vmatpush.bf16.msra.mxu0 %v645
      %659 = vmatpush.bf16.msra.mxu0 %v644
      %660 = vmatpush.bf16.msra.mxu0 %v643
      %661 = vmatpush.bf16.msra.mxu0 %v642
      %662 = vmatpush.bf16.msra.mxu0 %v641
      %663 = vmatpush.bf16.msra.mxu0 %v640
      %664 = vmatmul.bf16.gmra.mxu0 %v605
      %v665 = vpop.f32.mrf.mxu0
      %v666 = vadd.f32 0.0, %v665
      %v667 = vpop.f32.mrf.mxu0
      %v668 = vadd.f32 0.0, %v667
      %669 = vmatmul.bf16.gmra.mxu0 %v604
      %v670 = vpop.f32.mrf.mxu0
      %v671 = vadd.f32 0.0, %v670
      %v672 = vpop.f32.mrf.mxu0
      %673 = vdwg.mxu0
      %v674 = vadd.f32 %v574, %v666
      %v675 = vadd.f32 %v575, %v668
      %v676 = vadd.f32 %v576, %v671
      %v677 = vld [vmem:[%s165] sm:$0x8]
      %v678 = vld [vmem:[%s165 + $0x4] sm:$0xf]
      %v679 = vld [vmem:[%s165 + $0x8] sm:$0xf]
      %v680 = vld [vmem:[%s165 + $0xc] sm:$0x1]
      %s681 = scalar_lea.vmem %s1, 320
      %v682 = vld [vmem:[%s681] sm:$0xf]
      %v683 = vld [vmem:[%s681 + $0x4] sm:$0xf]
      %v684 = vld [vmem:[%s681 + $0x8] sm:$0xf]
      %v685 = vld [vmem:[%s681 + $0xc] sm:$0xf]
      %v686 = vld [vmem:[%s681 + $0x10] sm:$0xf]
      %v687 = vld [vmem:[%s681 + $0x14] sm:$0xf]
      %v688 = vld [vmem:[%s681 + $0x18] sm:$0xf]
      %v689 = vld [vmem:[%s681 + $0x1c] sm:$0xf]
      %v690 = vld [vmem:[%s681 + $0x20] sm:$0xf]
      %v691 = vld [vmem:[%s681 + $0x24] sm:$0xf]
      %v692 = vld [vmem:[%s681 + $0x28] sm:$0xf]
      %v693 = vld [vmem:[%s681 + $0x2c] sm:$0xf]
      %v694 = vld [vmem:[%s681 + $0x30] sm:$0xf]
      %v695 = vld [vmem:[%s681 + $0x34] sm:$0xf]
      %v696 = vld [vmem:[%s681 + $0x38] sm:$0xf]
      %v697 = vld [vmem:[%s681 + $0x3c] sm:$0xf]
      %v702 = vunpack.c.l.b16 %v677
      %v703 = vunpack.c.l.b16 %v678
      %v704 = vunpack.c.l.b16 %v679
      %v705 = vunpack.c.l.b16 %v680
      %v706 = vpack.c.b16 %v703, %v702
      %v707 = vpack.c.b16 %v705, %v704
      %vm708 = vsmask.f32 4352
      %v710 = vshrl.u32 %v706, 16
      %v712 = vrot.slane %v710, 3
      %v713 = vshll.u32 %v706, 16
      %v715 = vrot.slane %v713, 4
      %v716 = vor.u32 %v712, %v715
      %v718 = vshrl.u32 %v707, 16
      %v720 = vrot.slane %v718, 3
      %v721 = vshll.u32 %v707, 16
      %v723 = vrot.slane %v721, 4
      %v724 = vor.u32 %v720, %v723
      %v725 = vsel %vm708, %v716, %v724
      %v744 = vunpack.c.l.b16 %v682
      %v745 = vunpack.c.l.b16 %v683
      %v746 = vunpack.c.l.b16 %v684
      %v747 = vunpack.c.l.b16 %v685
      %v748 = vunpack.c.l.b16 %v686
      %v749 = vunpack.c.l.b16 %v687
      %v750 = vunpack.c.l.b16 %v688
      %v751 = vunpack.c.l.b16 %v689
      %v752 = vunpack.c.l.b16 %v690
      %v753 = vunpack.c.l.b16 %v691
      %v754 = vunpack.c.l.b16 %v692
      %v755 = vunpack.c.l.b16 %v693
      %v756 = vunpack.c.l.b16 %v694
      %v757 = vunpack.c.l.b16 %v695
      %v758 = vunpack.c.l.b16 %v696
      %v759 = vunpack.c.l.b16 %v697
      %v760 = vpack.c.b16 %v745, %v744
      %v761 = vpack.c.b16 %v747, %v746
      %v762 = vpack.c.b16 %v749, %v748
      %v763 = vpack.c.b16 %v751, %v750
      %v764 = vpack.c.b16 %v753, %v752
      %v765 = vpack.c.b16 %v755, %v754
      %v766 = vpack.c.b16 %v757, %v756
      %v767 = vpack.c.b16 %v759, %v758
      %776 = vmatpush.bf16.msra.mxu0 %v767
      %777 = vmatpush.bf16.msra.mxu0 %v766
      %778 = vmatpush.bf16.msra.mxu0 %v765
      %779 = vmatpush.bf16.msra.mxu0 %v764
      %780 = vmatpush.bf16.msra.mxu0 %v763
      %781 = vmatpush.bf16.msra.mxu0 %v762
      %782 = vmatpush.bf16.msra.mxu0 %v761
      %783 = vmatpush.bf16.msra.mxu0 %v760
      %784 = vmatmul.bf16.gmra.mxu0 %v725
      %v785 = vpop.f32.mrf.mxu0
      %v786 = vadd.f32 0.0, %v785
      %v787 = vpop.f32.mrf.mxu0
      %v788 = vadd.f32 0.0, %v787
      %789 = vmatmul.bf16.gmra.mxu0 %v724
      %v790 = vpop.f32.mrf.mxu0
      %v791 = vadd.f32 0.0, %v790
      %v792 = vpop.f32.mrf.mxu0
      %793 = vdwg.mxu0
      %v794 = vadd.f32 %v674, %v786
      %v795 = vadd.f32 %v675, %v788
      %v796 = vadd.f32 %v676, %v791
      %s797 = scalar_lea.vmem %s1, 384
      %v798 = vld [vmem:[%s797] sm:$0xf]
      %v799 = vld [vmem:[%s797 + $0x4] sm:$0xf]
      %v800 = vld [vmem:[%s797 + $0x8] sm:$0xf]
      %v801 = vld [vmem:[%s797 + $0xc] sm:$0xf]
      %v802 = vld [vmem:[%s797 + $0x10] sm:$0xf]
      %v803 = vld [vmem:[%s797 + $0x14] sm:$0xf]
      %v804 = vld [vmem:[%s797 + $0x18] sm:$0xf]
      %v805 = vld [vmem:[%s797 + $0x1c] sm:$0xf]
      %v806 = vld [vmem:[%s797 + $0x20] sm:$0xf]
      %v807 = vld [vmem:[%s797 + $0x24] sm:$0xf]
      %v808 = vld [vmem:[%s797 + $0x28] sm:$0xf]
      %v809 = vld [vmem:[%s797 + $0x2c] sm:$0xf]
      %v810 = vld [vmem:[%s797 + $0x30] sm:$0xf]
      %v811 = vld [vmem:[%s797 + $0x34] sm:$0xf]
      %v812 = vld [vmem:[%s797 + $0x38] sm:$0xf]
      %v813 = vld [vmem:[%s797 + $0x3c] sm:$0xf]
      %v814 = vpack.c.b16 %v704, %v703
      %v815 = vpack.c.b16 %v705, %v705
      %v834 = vunpack.c.l.b16 %v798
      %v835 = vunpack.c.l.b16 %v799
      %v836 = vunpack.c.l.b16 %v800
      %v837 = vunpack.c.l.b16 %v801
      %v838 = vunpack.c.l.b16 %v802
      %v839 = vunpack.c.l.b16 %v803
      %v840 = vunpack.c.l.b16 %v804
      %v841 = vunpack.c.l.b16 %v805
      %v842 = vunpack.c.l.b16 %v806
      %v843 = vunpack.c.l.b16 %v807
      %v844 = vunpack.c.l.b16 %v808
      %v845 = vunpack.c.l.b16 %v809
      %v846 = vunpack.c.l.b16 %v810
      %v847 = vunpack.c.l.b16 %v811
      %v848 = vunpack.c.l.b16 %v812
      %v849 = vunpack.c.l.b16 %v813
      %v850 = vpack.c.b16 %v835, %v834
      %v851 = vpack.c.b16 %v837, %v836
      %v852 = vpack.c.b16 %v839, %v838
      %v853 = vpack.c.b16 %v841, %v840
      %v854 = vpack.c.b16 %v843, %v842
      %v855 = vpack.c.b16 %v845, %v844
      %v856 = vpack.c.b16 %v847, %v846
      %v857 = vpack.c.b16 %v849, %v848
      %866 = vmatpush.bf16.msra.mxu0 %v857
      %867 = vmatpush.bf16.msra.mxu0 %v856
      %868 = vmatpush.bf16.msra.mxu0 %v855
      %869 = vmatpush.bf16.msra.mxu0 %v854
      %870 = vmatpush.bf16.msra.mxu0 %v853
      %871 = vmatpush.bf16.msra.mxu0 %v852
      %872 = vmatpush.bf16.msra.mxu0 %v851
      %873 = vmatpush.bf16.msra.mxu0 %v850
      %874 = vmatmul.bf16.gmra.mxu0 %v814
      %v875 = vpop.f32.mrf.mxu0
      %v876 = vadd.f32 0.0, %v875
      %v877 = vpop.f32.mrf.mxu0
      %v878 = vadd.f32 0.0, %v877
      %879 = vmatmul.bf16.gmra.mxu0 %v815
      %v880 = vpop.f32.mrf.mxu0
      %v881 = vadd.f32 0.0, %v880
      %v882 = vpop.f32.mrf.mxu0
      %883 = vdwg.mxu0
      %v884 = vadd.f32 %v794, %v876
      %v885 = vadd.f32 %v795, %v878
      %v886 = vadd.f32 %v796, %v881
      %v887 = vld [vmem:[%s165 + $0xc] sm:$0x3]
      %s888 = scalar_lea.vmem %s1, 448
      %v889 = vld [vmem:[%s888] sm:$0xf]
      %v890 = vld [vmem:[%s888 + $0x4] sm:$0xf]
      %v891 = vld [vmem:[%s888 + $0x8] sm:$0xf]
      %v892 = vld [vmem:[%s888 + $0xc] sm:$0xf]
      %v893 = vld [vmem:[%s888 + $0x10] sm:$0xf]
      %v894 = vld [vmem:[%s888 + $0x14] sm:$0xf]
      %v895 = vld [vmem:[%s888 + $0x18] sm:$0xf]
      %v896 = vld [vmem:[%s888 + $0x1c] sm:$0xf]
      %v897 = vld [vmem:[%s888 + $0x20] sm:$0xf]
      %v898 = vld [vmem:[%s888 + $0x24] sm:$0xf]
      %v899 = vld [vmem:[%s888 + $0x28] sm:$0xf]
      %v900 = vld [vmem:[%s888 + $0x2c] sm:$0xf]
      %v901 = vld [vmem:[%s888 + $0x30] sm:$0xf]
      %v902 = vld [vmem:[%s888 + $0x34] sm:$0xf]
      %v903 = vld [vmem:[%s888 + $0x38] sm:$0xf]
      %v904 = vld [vmem:[%s888 + $0x3c] sm:$0xf]
      %v906 = vunpack.c.l.b16 %v887
      %v907 = vpack.c.b16 %v906, %v906
      %v909 = vshrl.u32 %v814, 16
      %v911 = vshll.u32 %v814, 16
      %v913 = vrot.slane %v911, 1
      %v914 = vor.u32 %v909, %v913
      %v916 = vshll.u32 %v907, 16
      %v918 = vrot.slane %v916, 1
      %v919 = vsel %vm216, %v914, %v918
      %v920 = vshrl.u32 %v907, 16
      %v922 = vor.u32 %v920, %v918
      %v941 = vunpack.c.l.b16 %v889
      %v942 = vunpack.c.l.b16 %v890
      %v943 = vunpack.c.l.b16 %v891
      %v944 = vunpack.c.l.b16 %v892
      %v945 = vunpack.c.l.b16 %v893
      %v946 = vunpack.c.l.b16 %v894
      %v947 = vunpack.c.l.b16 %v895
      %v948 = vunpack.c.l.b16 %v896
      %v949 = vunpack.c.l.b16 %v897
      %v950 = vunpack.c.l.b16 %v898
      %v951 = vunpack.c.l.b16 %v899
      %v952 = vunpack.c.l.b16 %v900
      %v953 = vunpack.c.l.b16 %v901
      %v954 = vunpack.c.l.b16 %v902
      %v955 = vunpack.c.l.b16 %v903
      %v956 = vunpack.c.l.b16 %v904
      %v957 = vpack.c.b16 %v942, %v941
      %v958 = vpack.c.b16 %v944, %v943
      %v959 = vpack.c.b16 %v946, %v945
      %v960 = vpack.c.b16 %v948, %v947
      %v961 = vpack.c.b16 %v950, %v949
      %v962 = vpack.c.b16 %v952, %v951
      %v963 = vpack.c.b16 %v954, %v953
      %v964 = vpack.c.b16 %v956, %v955
      %973 = vmatpush.bf16.msra.mxu0 %v964
      %974 = vmatpush.bf16.msra.mxu0 %v963
      %975 = vmatpush.bf16.msra.mxu0 %v962
      %976 = vmatpush.bf16.msra.mxu0 %v961
      %977 = vmatpush.bf16.msra.mxu0 %v960
      %978 = vmatpush.bf16.msra.mxu0 %v959
      %979 = vmatpush.bf16.msra.mxu0 %v958
      %980 = vmatpush.bf16.msra.mxu0 %v957
      %981 = vmatmul.bf16.gmra.mxu0 %v919
      %v982 = vpop.f32.mrf.mxu0
      %v983 = vadd.f32 0.0, %v982
      %v984 = vpop.f32.mrf.mxu0
      %v985 = vadd.f32 0.0, %v984
      %986 = vmatmul.bf16.gmra.mxu0 %v922
      %v987 = vpop.f32.mrf.mxu0
      %v988 = vadd.f32 0.0, %v987
      %v989 = vpop.f32.mrf.mxu0
      %990 = vdwg.mxu0
      %v991 = vadd.f32 %v884, %v983
      %v992 = vadd.f32 %v885, %v985
      %v993 = vadd.f32 %v886, %v988
      %v994 = vld [vmem:[%s165 + $0x4] sm:$0xc]
      %v995 = vld [vmem:[%s165 + $0xc] sm:$0x7]
      %s996 = scalar_lea.vmem %s1, 512
      %v997 = vld [vmem:[%s996] sm:$0xf]
      %v998 = vld [vmem:[%s996 + $0x4] sm:$0xf]
      %v999 = vld [vmem:[%s996 + $0x8] sm:$0xf]
      %v1000 = vld [vmem:[%s996 + $0xc] sm:$0xf]
      %v1001 = vld [vmem:[%s996 + $0x10] sm:$0xf]
      %v1002 = vld [vmem:[%s996 + $0x14] sm:$0xf]
      %v1003 = vld [vmem:[%s996 + $0x18] sm:$0xf]
      %v1004 = vld [vmem:[%s996 + $0x1c] sm:$0xf]
      %v1005 = vld [vmem:[%s996 + $0x20] sm:$0xf]
      %v1006 = vld [vmem:[%s996 + $0x24] sm:$0xf]
      %v1007 = vld [vmem:[%s996 + $0x28] sm:$0xf]
      %v1008 = vld [vmem:[%s996 + $0x2c] sm:$0xf]
      %v1009 = vld [vmem:[%s996 + $0x30] sm:$0xf]
      %v1010 = vld [vmem:[%s996 + $0x34] sm:$0xf]
      %v1011 = vld [vmem:[%s996 + $0x38] sm:$0xf]
      %v1012 = vld [vmem:[%s996 + $0x3c] sm:$0xf]
      %v1015 = vunpack.c.l.b16 %v994
      %v1016 = vunpack.c.l.b16 %v995
      %v1017 = vpack.c.b16 %v704, %v1015
      %v1018 = vpack.c.b16 %v1016, %v1016
      %vm1019 = vcmask 1045504
      %v1020 = vrot.slane %v1017, 2
      %v1021 = vrot.slane %v1018, 2
      %v1022 = vsel %vm1019, %v1020, %v1021
      %v1041 = vunpack.c.l.b16 %v997
      %v1042 = vunpack.c.l.b16 %v998
      %v1043 = vunpack.c.l.b16 %v999
      %v1044 = vunpack.c.l.b16 %v1000
      %v1045 = vunpack.c.l.b16 %v1001
      %v1046 = vunpack.c.l.b16 %v1002
      %v1047 = vunpack.c.l.b16 %v1003
      %v1048 = vunpack.c.l.b16 %v1004
      %v1049 = vunpack.c.l.b16 %v1005
      %v1050 = vunpack.c.l.b16 %v1006
      %v1051 = vunpack.c.l.b16 %v1007
      %v1052 = vunpack.c.l.b16 %v1008
      %v1053 = vunpack.c.l.b16 %v1009
      %v1054 = vunpack.c.l.b16 %v1010
      %v1055 = vunpack.c.l.b16 %v1011
      %v1056 = vunpack.c.l.b16 %v1012
      %v1057 = vpack.c.b16 %v1042, %v1041
      %v1058 = vpack.c.b16 %v1044, %v1043
      %v1059 = vpack.c.b16 %v1046, %v1045
      %v1060 = vpack.c.b16 %v1048, %v1047
      %v1061 = vpack.c.b16 %v1050, %v1049
      %v1062 = vpack.c.b16 %v1052, %v1051
      %v1063 = vpack.c.b16 %v1054, %v1053
      %v1064 = vpack.c.b16 %v1056, %v1055
      %1073 = vmatpush.bf16.msra.mxu0 %v1064
      %1074 = vmatpush.bf16.msra.mxu0 %v1063
      %1075 = vmatpush.bf16.msra.mxu0 %v1062
      %1076 = vmatpush.bf16.msra.mxu0 %v1061
      %1077 = vmatpush.bf16.msra.mxu0 %v1060
      %1078 = vmatpush.bf16.msra.mxu0 %v1059
      %1079 = vmatpush.bf16.msra.mxu0 %v1058
      %1080 = vmatpush.bf16.msra.mxu0 %v1057
      %1081 = vmatmul.bf16.gmra.mxu0 %v1022
      %v1082 = vpop.f32.mrf.mxu0
      %v1083 = vadd.f32 0.0, %v1082
      %v1084 = vpop.f32.mrf.mxu0
      %v1085 = vadd.f32 0.0, %v1084
      %1086 = vmatmul.bf16.gmra.mxu0 %v1021
      %v1087 = vpop.f32.mrf.mxu0
      %v1088 = vadd.f32 0.0, %v1087
      %v1089 = vpop.f32.mrf.mxu0
      %1090 = vdwg.mxu0
      %v1091 = vadd.f32 %v991, %v1083
      %v1092 = vadd.f32 %v992, %v1085
      %v1093 = vadd.f32 %v993, %v1088
      %v1094 = vld [vmem:[%s165 + $0xc] sm:$0xf]
      %s1095 = scalar_lea.vmem %s1, 576
      %v1096 = vld [vmem:[%s1095] sm:$0xf]
      %v1097 = vld [vmem:[%s1095 + $0x4] sm:$0xf]
      %v1098 = vld [vmem:[%s1095 + $0x8] sm:$0xf]
      %v1099 = vld [vmem:[%s1095 + $0xc] sm:$0xf]
      %v1100 = vld [vmem:[%s1095 + $0x10] sm:$0xf]
      %v1101 = vld [vmem:[%s1095 + $0x14] sm:$0xf]
      %v1102 = vld [vmem:[%s1095 + $0x18] sm:$0xf]
      %v1103 = vld [vmem:[%s1095 + $0x1c] sm:$0xf]
      %v1104 = vld [vmem:[%s1095 + $0x20] sm:$0xf]
      %v1105 = vld [vmem:[%s1095 + $0x24] sm:$0xf]
      %v1106 = vld [vmem:[%s1095 + $0x28] sm:$0xf]
      %v1107 = vld [vmem:[%s1095 + $0x2c] sm:$0xf]
      %v1108 = vld [vmem:[%s1095 + $0x30] sm:$0xf]
      %v1109 = vld [vmem:[%s1095 + $0x34] sm:$0xf]
      %v1110 = vld [vmem:[%s1095 + $0x38] sm:$0xf]
      %v1111 = vld [vmem:[%s1095 + $0x3c] sm:$0xf]
      %v1113 = vunpack.c.l.b16 %v1094
      %v1114 = vpack.c.b16 %v1113, %v1113
      %vm1115 = vsmask.f32 5376
      %v1117 = vshrl.u32 %v1017, 16
      %v1119 = vrot.slane %v1117, 2
      %v1120 = vshll.u32 %v1017, 16
      %v1122 = vrot.slane %v1120, 3
      %v1123 = vor.u32 %v1119, %v1122
      %v1125 = vshrl.u32 %v1114, 16
      %v1127 = vrot.slane %v1125, 2
      %v1128 = vshll.u32 %v1114, 16
      %v1130 = vrot.slane %v1128, 3
      %v1131 = vor.u32 %v1127, %v1130
      %v1132 = vsel %vm1115, %v1123, %v1131
      %v1151 = vunpack.c.l.b16 %v1096
      %v1152 = vunpack.c.l.b16 %v1097
      %v1153 = vunpack.c.l.b16 %v1098
      %v1154 = vunpack.c.l.b16 %v1099
      %v1155 = vunpack.c.l.b16 %v1100
      %v1156 = vunpack.c.l.b16 %v1101
      %v1157 = vunpack.c.l.b16 %v1102
      %v1158 = vunpack.c.l.b16 %v1103
      %v1159 = vunpack.c.l.b16 %v1104
      %v1160 = vunpack.c.l.b16 %v1105
      %v1161 = vunpack.c.l.b16 %v1106
      %v1162 = vunpack.c.l.b16 %v1107
      %v1163 = vunpack.c.l.b16 %v1108
      %v1164 = vunpack.c.l.b16 %v1109
      %v1165 = vunpack.c.l.b16 %v1110
      %v1166 = vunpack.c.l.b16 %v1111
      %v1167 = vpack.c.b16 %v1152, %v1151
      %v1168 = vpack.c.b16 %v1154, %v1153
      %v1169 = vpack.c.b16 %v1156, %v1155
      %v1170 = vpack.c.b16 %v1158, %v1157
      %v1171 = vpack.c.b16 %v1160, %v1159
      %v1172 = vpack.c.b16 %v1162, %v1161
      %v1173 = vpack.c.b16 %v1164, %v1163
      %v1174 = vpack.c.b16 %v1166, %v1165
      %1183 = vmatpush.bf16.msra.mxu0 %v1174
      %1184 = vmatpush.bf16.msra.mxu0 %v1173
      %1185 = vmatpush.bf16.msra.mxu0 %v1172
      %1186 = vmatpush.bf16.msra.mxu0 %v1171
      %1187 = vmatpush.bf16.msra.mxu0 %v1170
      %1188 = vmatpush.bf16.msra.mxu0 %v1169
      %1189 = vmatpush.bf16.msra.mxu0 %v1168
      %1190 = vmatpush.bf16.msra.mxu0 %v1167
      %1191 = vmatmul.bf16.gmra.mxu0 %v1132
      %v1192 = vpop.f32.mrf.mxu0
      %v1193 = vadd.f32 0.0, %v1192
      %v1194 = vpop.f32.mrf.mxu0
      %v1195 = vadd.f32 0.0, %v1194
      %1196 = vmatmul.bf16.gmra.mxu0 %v1131
      %v1197 = vpop.f32.mrf.mxu0
      %v1198 = vadd.f32 0.0, %v1197
      %v1199 = vpop.f32.mrf.mxu0
      %1200 = vdwg.mxu0
      %v1201 = vadd.f32 %v1091, %v1193
      %v1202 = vadd.f32 %v1092, %v1195
      %v1203 = vadd.f32 %v1093, %v1198
      %v1204 = vld [vmem:[%s165 + $0x4] sm:$0x8]
      %s1205 = scalar_lea.vmem %s1, 640
      %v1206 = vld [vmem:[%s1205] sm:$0xf]
      %v1207 = vld [vmem:[%s1205 + $0x4] sm:$0xf]
      %v1208 = vld [vmem:[%s1205 + $0x8] sm:$0xf]
      %v1209 = vld [vmem:[%s1205 + $0xc] sm:$0xf]
      %v1210 = vld [vmem:[%s1205 + $0x10] sm:$0xf]
      %v1211 = vld [vmem:[%s1205 + $0x14] sm:$0xf]
      %v1212 = vld [vmem:[%s1205 + $0x18] sm:$0xf]
      %v1213 = vld [vmem:[%s1205 + $0x1c] sm:$0xf]
      %v1214 = vld [vmem:[%s1205 + $0x20] sm:$0xf]
      %v1215 = vld [vmem:[%s1205 + $0x24] sm:$0xf]
      %v1216 = vld [vmem:[%s1205 + $0x28] sm:$0xf]
      %v1217 = vld [vmem:[%s1205 + $0x2c] sm:$0xf]
      %v1218 = vld [vmem:[%s1205 + $0x30] sm:$0xf]
      %v1219 = vld [vmem:[%s1205 + $0x34] sm:$0xf]
      %v1220 = vld [vmem:[%s1205 + $0x38] sm:$0xf]
      %v1221 = vld [vmem:[%s1205 + $0x3c] sm:$0xf]
      %v1223 = vunpack.c.l.b16 %v1204
      %v1224 = vpack.c.b16 %v704, %v1223
      %v1225 = vrot.slane %v1224, 3
      %v1226 = vrot.slane %v1114, 3
      %v1227 = vsel %vm602, %v1225, %v1226
      %v1246 = vunpack.c.l.b16 %v1206
      %v1247 = vunpack.c.l.b16 %v1207
      %v1248 = vunpack.c.l.b16 %v1208
      %v1249 = vunpack.c.l.b16 %v1209
      %v1250 = vunpack.c.l.b16 %v1210
      %v1251 = vunpack.c.l.b16 %v1211
      %v1252 = vunpack.c.l.b16 %v1212
      %v1253 = vunpack.c.l.b16 %v1213
      %v1254 = vunpack.c.l.b16 %v1214
      %v1255 = vunpack.c.l.b16 %v1215
      %v1256 = vunpack.c.l.b16 %v1216
      %v1257 = vunpack.c.l.b16 %v1217
      %v1258 = vunpack.c.l.b16 %v1218
      %v1259 = vunpack.c.l.b16 %v1219
      %v1260 = vunpack.c.l.b16 %v1220
      %v1261 = vunpack.c.l.b16 %v1221
      %v1262 = vpack.c.b16 %v1247, %v1246
      %v1263 = vpack.c.b16 %v1249, %v1248
      %v1264 = vpack.c.b16 %v1251, %v1250
      %v1265 = vpack.c.b16 %v1253, %v1252
      %v1266 = vpack.c.b16 %v1255, %v1254
      %v1267 = vpack.c.b16 %v1257, %v1256
      %v1268 = vpack.c.b16 %v1259, %v1258
      %v1269 = vpack.c.b16 %v1261, %v1260
      %1278 = vmatpush.bf16.msra.mxu0 %v1269
      %1279 = vmatpush.bf16.msra.mxu0 %v1268
      %1280 = vmatpush.bf16.msra.mxu0 %v1267
      %1281 = vmatpush.bf16.msra.mxu0 %v1266
      %1282 = vmatpush.bf16.msra.mxu0 %v1265
      %1283 = vmatpush.bf16.msra.mxu0 %v1264
      %1284 = vmatpush.bf16.msra.mxu0 %v1263
      %1285 = vmatpush.bf16.msra.mxu0 %v1262
      %1286 = vmatmul.bf16.gmra.mxu0 %v1227
      %v1287 = vpop.f32.mrf.mxu0
      %v1288 = vadd.f32 0.0, %v1287
      %v1289 = vpop.f32.mrf.mxu0
      %v1290 = vadd.f32 0.0, %v1289
      %1291 = vmatmul.bf16.gmra.mxu0 %v1226
      %v1292 = vpop.f32.mrf.mxu0
      %v1293 = vadd.f32 0.0, %v1292
      %v1294 = vpop.f32.mrf.mxu0
      %1295 = vdwg.mxu0
      %v1296 = vadd.f32 %v1201, %v1288
      %v1297 = vadd.f32 %v1202, %v1290
      %v1298 = vadd.f32 %v1203, %v1293
      %v1299 = vld [vmem:[%s165 + $0x4] sm:$0x8]
      %v1300 = vld [vmem:[%s165 + $0x8] sm:$0xf]
      %v1301 = vld [vmem:[%s165 + $0xc] sm:$0xf]
      %v1302 = vld [vmem:[%s165 + $0x10] sm:$0x1]
      %s1303 = scalar_lea.vmem %s1, 704
      %v1304 = vld [vmem:[%s1303] sm:$0xf]
      %v1305 = vld [vmem:[%s1303 + $0x4] sm:$0xf]
      %v1306 = vld [vmem:[%s1303 + $0x8] sm:$0xf]
      %v1307 = vld [vmem:[%s1303 + $0xc] sm:$0xf]
      %v1308 = vld [vmem:[%s1303 + $0x10] sm:$0xf]
      %v1309 = vld [vmem:[%s1303 + $0x14] sm:$0xf]
      %v1310 = vld [vmem:[%s1303 + $0x18] sm:$0xf]
      %v1311 = vld [vmem:[%s1303 + $0x1c] sm:$0xf]
      %v1312 = vld [vmem:[%s1303 + $0x20] sm:$0xf]
      %v1313 = vld [vmem:[%s1303 + $0x24] sm:$0xf]
      %v1314 = vld [vmem:[%s1303 + $0x28] sm:$0xf]
      %v1315 = vld [vmem:[%s1303 + $0x2c] sm:$0xf]
      %v1316 = vld [vmem:[%s1303 + $0x30] sm:$0xf]
      %v1317 = vld [vmem:[%s1303 + $0x34] sm:$0xf]
      %v1318 = vld [vmem:[%s1303 + $0x38] sm:$0xf]
      %v1319 = vld [vmem:[%s1303 + $0x3c] sm:$0xf]
      %v1324 = vunpack.c.l.b16 %v1299
      %v1325 = vunpack.c.l.b16 %v1300
      %v1326 = vunpack.c.l.b16 %v1301
      %v1327 = vunpack.c.l.b16 %v1302
      %v1328 = vpack.c.b16 %v1325, %v1324
      %v1329 = vpack.c.b16 %v1327, %v1326
      %v1331 = vshrl.u32 %v1328, 16
      %v1333 = vrot.slane %v1331, 3
      %v1334 = vshll.u32 %v1328, 16
      %v1336 = vrot.slane %v1334, 4
      %v1337 = vor.u32 %v1333, %v1336
      %v1339 = vshrl.u32 %v1329, 16
      %v1341 = vrot.slane %v1339, 3
      %v1342 = vshll.u32 %v1329, 16
      %v1344 = vrot.slane %v1342, 4
      %v1345 = vor.u32 %v1341, %v1344
      %v1346 = vsel %vm708, %v1337, %v1345
      %v1365 = vunpack.c.l.b16 %v1304
      %v1366 = vunpack.c.l.b16 %v1305
      %v1367 = vunpack.c.l.b16 %v1306
      %v1368 = vunpack.c.l.b16 %v1307
      %v1369 = vunpack.c.l.b16 %v1308
      %v1370 = vunpack.c.l.b16 %v1309
      %v1371 = vunpack.c.l.b16 %v1310
      %v1372 = vunpack.c.l.b16 %v1311
      %v1373 = vunpack.c.l.b16 %v1312
      %v1374 = vunpack.c.l.b16 %v1313
      %v1375 = vunpack.c.l.b16 %v1314
      %v1376 = vunpack.c.l.b16 %v1315
      %v1377 = vunpack.c.l.b16 %v1316
      %v1378 = vunpack.c.l.b16 %v1317
      %v1379 = vunpack.c.l.b16 %v1318
      %v1380 = vunpack.c.l.b16 %v1319
      %v1381 = vpack.c.b16 %v1366, %v1365
      %v1382 = vpack.c.b16 %v1368, %v1367
      %v1383 = vpack.c.b16 %v1370, %v1369
      %v1384 = vpack.c.b16 %v1372, %v1371
      %v1385 = vpack.c.b16 %v1374, %v1373
      %v1386 = vpack.c.b16 %v1376, %v1375
      %v1387 = vpack.c.b16 %v1378, %v1377
      %v1388 = vpack.c.b16 %v1380, %v1379
      %1397 = vmatpush.bf16.msra.mxu0 %v1388
      %1398 = vmatpush.bf16.msra.mxu0 %v1387
      %1399 = vmatpush.bf16.msra.mxu0 %v1386
      %1400 = vmatpush.bf16.msra.mxu0 %v1385
      %1401 = vmatpush.bf16.msra.mxu0 %v1384
      %1402 = vmatpush.bf16.msra.mxu0 %v1383
      %1403 = vmatpush.bf16.msra.mxu0 %v1382
      %1404 = vmatpush.bf16.msra.mxu0 %v1381
      %1405 = vmatmul.bf16.gmra.mxu0 %v1346
      %v1406 = vpop.f32.mrf.mxu0
      %v1407 = vadd.f32 0.0, %v1406
      %v1408 = vpop.f32.mrf.mxu0
      %v1409 = vadd.f32 0.0, %v1408
      %1410 = vmatmul.bf16.gmra.mxu0 %v1345
      %v1411 = vpop.f32.mrf.mxu0
      %v1412 = vadd.f32 0.0, %v1411
      %v1413 = vpop.f32.mrf.mxu0
      %1414 = vdwg.mxu0
      %v1415 = vadd.f32 %v1296, %v1407
      %v1416 = vadd.f32 %v1297, %v1409
      %v1417 = vadd.f32 %v1298, %v1412
      %v1418 = vld [vmem:[%s165 + $0x8] sm:$0xe]
      %v1419 = vld [vmem:[%s165 + $0x10] sm:$0x3]
      %s1420 = scalar_lea.vmem %s1, 768
      %v1421 = vld [vmem:[%s1420] sm:$0xf]
      %v1422 = vld [vmem:[%s1420 + $0x4] sm:$0xf]
      %v1423 = vld [vmem:[%s1420 + $0x8] sm:$0xf]
      %v1424 = vld [vmem:[%s1420 + $0xc] sm:$0xf]
      %v1425 = vld [vmem:[%s1420 + $0x10] sm:$0xf]
      %v1426 = vld [vmem:[%s1420 + $0x14] sm:$0xf]
      %v1427 = vld [vmem:[%s1420 + $0x18] sm:$0xf]
      %v1428 = vld [vmem:[%s1420 + $0x1c] sm:$0xf]
      %v1429 = vld [vmem:[%s1420 + $0x20] sm:$0xf]
      %v1430 = vld [vmem:[%s1420 + $0x24] sm:$0xf]
      %v1431 = vld [vmem:[%s1420 + $0x28] sm:$0xf]
      %v1432 = vld [vmem:[%s1420 + $0x2c] sm:$0xf]
      %v1433 = vld [vmem:[%s1420 + $0x30] sm:$0xf]
      %v1434 = vld [vmem:[%s1420 + $0x34] sm:$0xf]
      %v1435 = vld [vmem:[%s1420 + $0x38] sm:$0xf]
      %v1436 = vld [vmem:[%s1420 + $0x3c] sm:$0xf]
      %v1439 = vunpack.c.l.b16 %v1418
      %v1440 = vunpack.c.l.b16 %v1419
      %v1441 = vpack.c.b16 %v1326, %v1439
      %v1442 = vpack.c.b16 %v1440, %v1440
      %v1443 = vrot.slane %v1441, 1
      %v1444 = vrot.slane %v1442, 1
      %v1445 = vsel %vm392, %v1443, %v1444
      %v1464 = vunpack.c.l.b16 %v1421
      %v1465 = vunpack.c.l.b16 %v1422
      %v1466 = vunpack.c.l.b16 %v1423
      %v1467 = vunpack.c.l.b16 %v1424
      %v1468 = vunpack.c.l.b16 %v1425
      %v1469 = vunpack.c.l.b16 %v1426
      %v1470 = vunpack.c.l.b16 %v1427
      %v1471 = vunpack.c.l.b16 %v1428
      %v1472 = vunpack.c.l.b16 %v1429
      %v1473 = vunpack.c.l.b16 %v1430
      %v1474 = vunpack.c.l.b16 %v1431
      %v1475 = vunpack.c.l.b16 %v1432
      %v1476 = vunpack.c.l.b16 %v1433
      %v1477 = vunpack.c.l.b16 %v1434
      %v1478 = vunpack.c.l.b16 %v1435
      %v1479 = vunpack.c.l.b16 %v1436
      %v1480 = vpack.c.b16 %v1465, %v1464
      %v1481 = vpack.c.b16 %v1467, %v1466
      %v1482 = vpack.c.b16 %v1469, %v1468
      %v1483 = vpack.c.b16 %v1471, %v1470
      %v1484 = vpack.c.b16 %v1473, %v1472
      %v1485 = vpack.c.b16 %v1475, %v1474
      %v1486 = vpack.c.b16 %v1477, %v1476
      %v1487 = vpack.c.b16 %v1479, %v1478
      %1496 = vmatpush.bf16.msra.mxu0 %v1487
      %1497 = vmatpush.bf16.msra.mxu0 %v1486
      %1498 = vmatpush.bf16.msra.mxu0 %v1485
      %1499 = vmatpush.bf16.msra.mxu0 %v1484
      %1500 = vmatpush.bf16.msra.mxu0 %v1483
      %1501 = vmatpush.bf16.msra.mxu0 %v1482
      %1502 = vmatpush.bf16.msra.mxu0 %v1481
      %1503 = vmatpush.bf16.msra.mxu0 %v1480
      %1504 = vmatmul.bf16.gmra.mxu0 %v1445
      %v1505 = vpop.f32.mrf.mxu0
      %v1506 = vadd.f32 0.0, %v1505
      %v1507 = vpop.f32.mrf.mxu0
      %v1508 = vadd.f32 0.0, %v1507
      %1509 = vmatmul.bf16.gmra.mxu0 %v1444
      %v1510 = vpop.f32.mrf.mxu0
      %v1511 = vadd.f32 0.0, %v1510
      %v1512 = vpop.f32.mrf.mxu0
      %1513 = vdwg.mxu0
      %v1514 = vadd.f32 %v1415, %v1506
      %v1515 = vadd.f32 %v1416, %v1508
      %v1516 = vadd.f32 %v1417, %v1511
      %v1517 = vld [vmem:[%s165 + $0x10] sm:$0x7]
      %s1518 = scalar_lea.vmem %s1, 832
      %v1519 = vld [vmem:[%s1518] sm:$0xf]
      %v1520 = vld [vmem:[%s1518 + $0x4] sm:$0xf]
      %v1521 = vld [vmem:[%s1518 + $0x8] sm:$0xf]
      %v1522 = vld [vmem:[%s1518 + $0xc] sm:$0xf]
      %v1523 = vld [vmem:[%s1518 + $0x10] sm:$0xf]
      %v1524 = vld [vmem:[%s1518 + $0x14] sm:$0xf]
      %v1525 = vld [vmem:[%s1518 + $0x18] sm:$0xf]
      %v1526 = vld [vmem:[%s1518 + $0x1c] sm:$0xf]
      %v1527 = vld [vmem:[%s1518 + $0x20] sm:$0xf]
      %v1528 = vld [vmem:[%s1518 + $0x24] sm:$0xf]
      %v1529 = vld [vmem:[%s1518 + $0x28] sm:$0xf]
      %v1530 = vld [vmem:[%s1518 + $0x2c] sm:$0xf]
      %v1531 = vld [vmem:[%s1518 + $0x30] sm:$0xf]
      %v1532 = vld [vmem:[%s1518 + $0x34] sm:$0xf]
      %v1533 = vld [vmem:[%s1518 + $0x38] sm:$0xf]
      %v1534 = vld [vmem:[%s1518 + $0x3c] sm:$0xf]
      %v1536 = vunpack.c.l.b16 %v1517
      %v1537 = vpack.c.b16 %v1536, %v1536
      %v1539 = vshrl.u32 %v1441, 16
      %v1541 = vrot.slane %v1539, 1
      %v1542 = vshll.u32 %v1441, 16
      %v1544 = vrot.slane %v1542, 2
      %v1545 = vor.u32 %v1541, %v1544
      %v1547 = vshrl.u32 %v1537, 16
      %v1549 = vrot.slane %v1547, 1
      %v1550 = vshll.u32 %v1537, 16
      %v1552 = vrot.slane %v1550, 2
      %v1553 = vor.u32 %v1549, %v1552
      %v1554 = vsel %vm488, %v1545, %v1553
      %v1573 = vunpack.c.l.b16 %v1519
      %v1574 = vunpack.c.l.b16 %v1520
      %v1575 = vunpack.c.l.b16 %v1521
      %v1576 = vunpack.c.l.b16 %v1522
      %v1577 = vunpack.c.l.b16 %v1523
      %v1578 = vunpack.c.l.b16 %v1524
      %v1579 = vunpack.c.l.b16 %v1525
      %v1580 = vunpack.c.l.b16 %v1526
      %v1581 = vunpack.c.l.b16 %v1527
      %v1582 = vunpack.c.l.b16 %v1528
      %v1583 = vunpack.c.l.b16 %v1529
      %v1584 = vunpack.c.l.b16 %v1530
      %v1585 = vunpack.c.l.b16 %v1531
      %v1586 = vunpack.c.l.b16 %v1532
      %v1587 = vunpack.c.l.b16 %v1533
      %v1588 = vunpack.c.l.b16 %v1534
      %v1589 = vpack.c.b16 %v1574, %v1573
      %v1590 = vpack.c.b16 %v1576, %v1575
      %v1591 = vpack.c.b16 %v1578, %v1577
      %v1592 = vpack.c.b16 %v1580, %v1579
      %v1593 = vpack.c.b16 %v1582, %v1581
      %v1594 = vpack.c.b16 %v1584, %v1583
      %v1595 = vpack.c.b16 %v1586, %v1585
      %v1596 = vpack.c.b16 %v1588, %v1587
      %1605 = vmatpush.bf16.msra.mxu0 %v1596
      %1606 = vmatpush.bf16.msra.mxu0 %v1595
      %1607 = vmatpush.bf16.msra.mxu0 %v1594
      %1608 = vmatpush.bf16.msra.mxu0 %v1593
      %1609 = vmatpush.bf16.msra.mxu0 %v1592
      %1610 = vmatpush.bf16.msra.mxu0 %v1591
      %1611 = vmatpush.bf16.msra.mxu0 %v1590
      %1612 = vmatpush.bf16.msra.mxu0 %v1589
      %1613 = vmatmul.bf16.gmra.mxu0 %v1554
      %v1614 = vpop.f32.mrf.mxu0
      %v1615 = vadd.f32 0.0, %v1614
      %v1616 = vpop.f32.mrf.mxu0
      %v1617 = vadd.f32 0.0, %v1616
      %1618 = vmatmul.bf16.gmra.mxu0 %v1553
      %v1619 = vpop.f32.mrf.mxu0
      %v1620 = vadd.f32 0.0, %v1619
      %v1621 = vpop.f32.mrf.mxu0
      %1622 = vdwg.mxu0
      %v1623 = vadd.f32 %v1514, %v1615
      %v1624 = vadd.f32 %v1515, %v1617
      %v1625 = vadd.f32 %v1516, %v1620
      %v1626 = vld [vmem:[%s165 + $0x8] sm:$0xc]
      %s1627 = scalar_lea.vmem %s1, 896
      %v1628 = vld [vmem:[%s1627] sm:$0xf]
      %v1629 = vld [vmem:[%s1627 + $0x4] sm:$0xf]
      %v1630 = vld [vmem:[%s1627 + $0x8] sm:$0xf]
      %v1631 = vld [vmem:[%s1627 + $0xc] sm:$0xf]
      %v1632 = vld [vmem:[%s1627 + $0x10] sm:$0xf]
      %v1633 = vld [vmem:[%s1627 + $0x14] sm:$0xf]
      %v1634 = vld [vmem:[%s1627 + $0x18] sm:$0xf]
      %v1635 = vld [vmem:[%s1627 + $0x1c] sm:$0xf]
      %v1636 = vld [vmem:[%s1627 + $0x20] sm:$0xf]
      %v1637 = vld [vmem:[%s1627 + $0x24] sm:$0xf]
      %v1638 = vld [vmem:[%s1627 + $0x28] sm:$0xf]
      %v1639 = vld [vmem:[%s1627 + $0x2c] sm:$0xf]
      %v1640 = vld [vmem:[%s1627 + $0x30] sm:$0xf]
      %v1641 = vld [vmem:[%s1627 + $0x34] sm:$0xf]
      %v1642 = vld [vmem:[%s1627 + $0x38] sm:$0xf]
      %v1643 = vld [vmem:[%s1627 + $0x3c] sm:$0xf]
      %v1645 = vunpack.c.l.b16 %v1626
      %v1646 = vpack.c.b16 %v1326, %v1645
      %v1647 = vrot.slane %v1646, 2
      %v1648 = vrot.slane %v1537, 2
      %v1649 = vsel %vm1019, %v1647, %v1648
      %v1668 = vunpack.c.l.b16 %v1628
      %v1669 = vunpack.c.l.b16 %v1629
      %v1670 = vunpack.c.l.b16 %v1630
      %v1671 = vunpack.c.l.b16 %v1631
      %v1672 = vunpack.c.l.b16 %v1632
      %v1673 = vunpack.c.l.b16 %v1633
      %v1674 = vunpack.c.l.b16 %v1634
      %v1675 = vunpack.c.l.b16 %v1635
      %v1676 = vunpack.c.l.b16 %v1636
      %v1677 = vunpack.c.l.b16 %v1637
      %v1678 = vunpack.c.l.b16 %v1638
      %v1679 = vunpack.c.l.b16 %v1639
      %v1680 = vunpack.c.l.b16 %v1640
      %v1681 = vunpack.c.l.b16 %v1641
      %v1682 = vunpack.c.l.b16 %v1642
      %v1683 = vunpack.c.l.b16 %v1643
      %v1684 = vpack.c.b16 %v1669, %v1668
      %v1685 = vpack.c.b16 %v1671, %v1670
      %v1686 = vpack.c.b16 %v1673, %v1672
      %v1687 = vpack.c.b16 %v1675, %v1674
      %v1688 = vpack.c.b16 %v1677, %v1676
      %v1689 = vpack.c.b16 %v1679, %v1678
      %v1690 = vpack.c.b16 %v1681, %v1680
      %v1691 = vpack.c.b16 %v1683, %v1682
      %1700 = vmatpush.bf16.msra.mxu0 %v1691
      %1701 = vmatpush.bf16.msra.mxu0 %v1690
      %1702 = vmatpush.bf16.msra.mxu0 %v1689
      %1703 = vmatpush.bf16.msra.mxu0 %v1688
      %1704 = vmatpush.bf16.msra.mxu0 %v1687
      %1705 = vmatpush.bf16.msra.mxu0 %v1686
      %1706 = vmatpush.bf16.msra.mxu0 %v1685
      %1707 = vmatpush.bf16.msra.mxu0 %v1684
      %1708 = vmatmul.bf16.gmra.mxu0 %v1649
      %v1709 = vpop.f32.mrf.mxu0
      %v1710 = vadd.f32 0.0, %v1709
      %v1711 = vpop.f32.mrf.mxu0
      %v1712 = vadd.f32 0.0, %v1711
      %1713 = vmatmul.bf16.gmra.mxu0 %v1648
      %v1714 = vpop.f32.mrf.mxu0
      %v1715 = vadd.f32 0.0, %v1714
      %v1716 = vpop.f32.mrf.mxu0
      %1717 = vdwg.mxu0
      %v1718 = vadd.f32 %v1623, %v1710
      %v1719 = vadd.f32 %v1624, %v1712
      %v1720 = vadd.f32 %v1625, %v1715
      %v1721 = vld [vmem:[%s165 + $0x10] sm:$0xf]
      %s1722 = scalar_lea.vmem %s1, 960
      %v1723 = vld [vmem:[%s1722] sm:$0xf]
      %v1724 = vld [vmem:[%s1722 + $0x4] sm:$0xf]
      %v1725 = vld [vmem:[%s1722 + $0x8] sm:$0xf]
      %v1726 = vld [vmem:[%s1722 + $0xc] sm:$0xf]
      %v1727 = vld [vmem:[%s1722 + $0x10] sm:$0xf]
      %v1728 = vld [vmem:[%s1722 + $0x14] sm:$0xf]
      %v1729 = vld [vmem:[%s1722 + $0x18] sm:$0xf]
      %v1730 = vld [vmem:[%s1722 + $0x1c] sm:$0xf]
      %v1731 = vld [vmem:[%s1722 + $0x20] sm:$0xf]
      %v1732 = vld [vmem:[%s1722 + $0x24] sm:$0xf]
      %v1733 = vld [vmem:[%s1722 + $0x28] sm:$0xf]
      %v1734 = vld [vmem:[%s1722 + $0x2c] sm:$0xf]
      %v1735 = vld [vmem:[%s1722 + $0x30] sm:$0xf]
      %v1736 = vld [vmem:[%s1722 + $0x34] sm:$0xf]
      %v1737 = vld [vmem:[%s1722 + $0x38] sm:$0xf]
      %v1738 = vld [vmem:[%s1722 + $0x3c] sm:$0xf]
      %v1740 = vunpack.c.l.b16 %v1721
      %v1741 = vpack.c.b16 %v1740, %v1740
      %v1743 = vshrl.u32 %v1646, 16
      %v1745 = vrot.slane %v1743, 2
      %v1746 = vshll.u32 %v1646, 16
      %v1748 = vrot.slane %v1746, 3
      %v1749 = vor.u32 %v1745, %v1748
      %v1751 = vshrl.u32 %v1741, 16
      %v1753 = vrot.slane %v1751, 2
      %v1754 = vshll.u32 %v1741, 16
      %v1756 = vrot.slane %v1754, 3
      %v1757 = vor.u32 %v1753, %v1756
      %v1758 = vsel %vm1115, %v1749, %v1757
      %v1777 = vunpack.c.l.b16 %v1723
      %v1778 = vunpack.c.l.b16 %v1724
      %v1779 = vunpack.c.l.b16 %v1725
      %v1780 = vunpack.c.l.b16 %v1726
      %v1781 = vunpack.c.l.b16 %v1727
      %v1782 = vunpack.c.l.b16 %v1728
      %v1783 = vunpack.c.l.b16 %v1729
      %v1784 = vunpack.c.l.b16 %v1730
      %v1785 = vunpack.c.l.b16 %v1731
      %v1786 = vunpack.c.l.b16 %v1732
      %v1787 = vunpack.c.l.b16 %v1733
      %v1788 = vunpack.c.l.b16 %v1734
      %v1789 = vunpack.c.l.b16 %v1735
      %v1790 = vunpack.c.l.b16 %v1736
      %v1791 = vunpack.c.l.b16 %v1737
      %v1792 = vunpack.c.l.b16 %v1738
      %v1793 = vpack.c.b16 %v1778, %v1777
      %v1794 = vpack.c.b16 %v1780, %v1779
      %v1795 = vpack.c.b16 %v1782, %v1781
      %v1796 = vpack.c.b16 %v1784, %v1783
      %v1797 = vpack.c.b16 %v1786, %v1785
      %v1798 = vpack.c.b16 %v1788, %v1787
      %v1799 = vpack.c.b16 %v1790, %v1789
      %v1800 = vpack.c.b16 %v1792, %v1791
      %1809 = vmatpush.bf16.msra.mxu0 %v1800
      %1810 = vmatpush.bf16.msra.mxu0 %v1799
      %1811 = vmatpush.bf16.msra.mxu0 %v1798
      %1812 = vmatpush.bf16.msra.mxu0 %v1797
      %1813 = vmatpush.bf16.msra.mxu0 %v1796
      %1814 = vmatpush.bf16.msra.mxu0 %v1795
      %1815 = vmatpush.bf16.msra.mxu0 %v1794
      %1816 = vmatpush.bf16.msra.mxu0 %v1793
      %1817 = vmatmul.bf16.gmra.mxu0 %v1758
      %v1818 = vpop.f32.mrf.mxu0
      %v1819 = vadd.f32 0.0, %v1818
      %v1820 = vpop.f32.mrf.mxu0
      %v1821 = vadd.f32 0.0, %v1820
      %1822 = vmatmul.bf16.gmra.mxu0 %v1757
      %v1823 = vpop.f32.mrf.mxu0
      %v1824 = vadd.f32 0.0, %v1823
      %v1825 = vpop.f32.mrf.mxu0
      %1826 = vdwg.mxu0
      %v1827 = vadd.f32 %v1718, %v1819
      %v1828 = vadd.f32 %v1719, %v1821
      %v1829 = vadd.f32 %v1720, %v1824
      %v1830 = vld [vmem:[%s2] sm:$0x1]
      %v1832 = vperm.slane %v1830, 0
      %v1834 = vadd.f32 %v1827, %v1832
      %v1835 = vadd.f32 %v1828, %v1832
      %v1836 = vadd.f32 %v1829, %v1832
      %v1837 = vsub.f32 0.0, %v1834
      %v1838 = vsub.f32 0.0, %v1835
      %v1839 = vsub.f32 0.0, %v1836
      %v1840 = vmul.f32 %v1837, 1.442695
      %v1841 = vpow.pop %v1840
      %v1842 = vmul.f32 %v1838, 1.442695
      %v1843 = vpow.pop %v1842
      %v1844 = vmul.f32 %v1839, 1.442695
      %v1845 = vpow.pop %v1844
      %v1846 = vadd.f32 %v1841, 1.0
      %v1847 = vadd.f32 %v1843, 1.0
      %v1848 = vadd.f32 %v1845, 1.0
      %v1849 = vrcp.pop %v1846
      %v1850 = vrcp.pop %v1847
      %v1851 = vrcp.pop %v1848
      %v1852 = vmax.f32 %v1849, 0.0
      %v1853 = vmax.f32 %v1850, 0.0
      %v1854 = vmax.f32 %v1851, 0.0
      %v1855 = vmin.f32 %v1852, 1.0
      %v1856 = vmin.f32 %v1853, 1.0
      %v1857 = vmin.f32 %v1854, 1.0
      %v1858 = vpack.c.bf16 %v1855, %v1855
      %v1859 = vpack.c.bf16 %v1856, %v1856
      %v1860 = vpack.c.bf16 %v1857, %v1857
      %1861 = vst [vmem:[%s170] sm:$0xf] %v1858
      %1862 = vst [vmem:[%s170 + $0x4] sm:$0xf] %v1859
      %1863 = vst [vmem:[%s170 + $0x8] sm:$0x1] %v1860
      %p1864 = scmp.lt.s32.totalorder %s14, 1
      %s1865 = scalar_select %p1864, %s14, 1
      %s1866 = smul.addr %s1865, 3
      %s1867 = smul.addr %s1866, 4
      %s1868 = scalar_lea.vmem %s3, %s1867
      // Predicated region
      $region33: #{discriminator_forward.7} parent=31 // pred_check
        %p1869 = pneg %p100
      $region34: #{discriminator_forward.7} parent=31 // pred_check_branch
        %1871 = sbr.rel (%p1869) target = $region36
      $region35: #{discriminator_forward.7} parent=31 // pred_region
        _
      $region36: #{discriminator_forward.7} parent=31 // pred_fallthru
        _
    $region32: #{discriminator_forward.7} parent=5 // pred_fallthru
      _
    %p1872 = scmp.le.s32.totalorder 2, %s9
    // Predicated region
    $region37: #{discriminator_forward.7} parent=5 // pred_check
      %p1873 = pneg %p1872
    $region38: #{discriminator_forward.7} parent=5 // pred_check_branch
      %1875 = sbr.rel (%p1873) target = $region40
    $region39: #{discriminator_forward.7} parent=5 // pred_region
      %s1876 = ssub.s32 %s9, 2
      // Predicated region
      $region41: #{discriminator_forward.7} parent=39 // pred_check
        %p1877 = pneg %p106
      $region42: #{discriminator_forward.7} parent=39 // pred_check_branch
        %1879 = sbr.rel (%p1877) target = $region44
      $region43: #{discriminator_forward.7} parent=39 // pred_region
        %p1880 = scmp.lt.s32.totalorder %s15, 1
        %s1881 = scalar_select %p1880, %s15, 1
        %s1882 = smul.addr %s1881, 3
        %s1883 = smul.addr %s1882, 4
        %s1884 = scalar_lea.vmem %s3, %s1883
      $region44: #{discriminator_forward.7} parent=39 // pred_fallthru
        _
    $region40: #{discriminator_forward.7} parent=5 // pred_fallthru
      _
  $region6: #{discriminator_forward.7} parent=0 // loop_footer
    %s13 = sadd.s32 1, %s9
  $region7: #{discriminator_forward.7} parent=0 // loop_footer_branch
    %8 = sbr.rel target = $region3
  $region8: #{discriminator_forward.7} parent=0 // loop_exit
    _

</llo_original>
